<compile_context>
chip_gen: v7x
topology: tpu7x:2x2x1
jax: 0.10.0
libtpu: 0.0.40
codegen_flags: <defaults>
</compile_context>

<pallas_src>
import functools
import math

import jax
import jax.numpy as jnp
from jax import lax
from jax.experimental import pallas as pl
from jax.experimental.pallas import tpu as pltpu

LANE = 128  # TPU lane width; all packed slabs are 128-lane aligned


# ------------------------------ configuration ------------------------------

class Config:
    vocab_size = 100
    hidden = 32          # bert.config.hidden_size (scaled down)
    heads = 4
    inter = 64           # intermediate size
    layers = 2
    max_pos = 16
    type_vocab = 2
    cls_hidden = 16      # the module's `hidden_size` argument


# --------------------------- in-kernel helpers ------------------------------

def _layernorm(x, g, b, eps):
    mu = jnp.mean(x, axis=-1, keepdims=True)
    xc = x - mu
    var = jnp.mean(xc * xc, axis=-1, keepdims=True)
    return (xc * lax.rsqrt(var + eps)) * g + b


def _gelu(x):
    # tanh-approx GELU; stock HF BERT uses erf GELU (differs ~1e-3).
    return 0.5 * x * (1.0 + jnp.tanh(0.7978845608028654 * (x + 0.044715 * x * x * x)))


# ------------------------- single fused Pallas kernel -----------------------

def _bert_fused_kernel(ids_ref, aux_ref, emb_ref, wx_ref, wy_ref, b_ref,
                       clsw_ref, clsb_ref, out_ref,
                       *, M, heads, H, L, eps, vocab_pad, max_pos):
    P = LANE
    HP = heads * P
    f32 = jnp.float32
    bf16 = jnp.bfloat16

    # ---- embedding gather via one-hot matmuls (MXU), no XLA gather launches ----
    ids = ids_ref[...]                                   # (M, 3) i32: token / pos / batch
    tok = ids[:, 0:1]
    posid = ids[:, 1:2]
    rowb = ids[:, 2:3].astype(f32)

    word_oh = (tok == lax.broadcasted_iota(jnp.int32, (M, vocab_pad), 1)).astype(f32)
    pos_oh = (posid == lax.broadcasted_iota(jnp.int32, (M, max_pos), 1)).astype(f32)
    we = jnp.dot(word_oh, emb_ref[0:vocab_pad, :], preferred_element_type=f32)
    pe = jnp.dot(pos_oh, emb_ref[vocab_pad:vocab_pad + max_pos, :],
                 preferred_element_type=f32)
    base = vocab_pad + max_pos
    x = _layernorm(we + pe + emb_ref[base:base + 1, :],          # + type-0 embedding
                   emb_ref[base + 1:base + 2, :],                # emb LN gamma
                   emb_ref[base + 2:base + 3, :], eps)           # emb LN beta; (M,H) f32

    # ---- additive mask built in-kernel: HF padding mask + cross-batch block ----
    add_mask = jnp.where(rowb == aux_ref[1:2, :],   # same batch?
                         aux_ref[0:1, :],           # (1-mask)*-1e4 on keys
                         -10000.0)                  # cross-batch entries

    for l in range(L):                 # L=2, unrolled; all weights stay in VMEM
        xb = x.astype(bf16)
        # fused QKV projection; per-head slabs are 128-lane padded & aligned
        h3 = (jnp.dot(xb, wx_ref[l, :, 0:3 * HP], preferred_element_type=f32)
              + b_ref[l, 0:1, 0:3 * HP])                         # (M, 3*HP) f32

        attn = jnp.zeros((M, H), f32)
        for h in range(heads):         # 128-aligned slices -> free views, no relayout
            qh = h3[:, h * P:(h + 1) * P].astype(bf16)           # scale pre-folded
            kh = h3[:, HP + h * P:HP + (h + 1) * P].astype(bf16)
            vh = h3[:, 2 * HP + h * P:2 * HP + (h + 1) * P].astype(bf16)
            s = lax.dot_general(qh, kh, (((1,), (1,)), ((), ())),
                                preferred_element_type=f32)      # (M, M) f32
            s = s + add_mask
            s = s - jnp.max(s, axis=-1, keepdims=True)
            p = jnp.exp(s)
            p = p * pl.reciprocal(jnp.sum(p, axis=-1, keepdims=True), approx=True)
            ctx = jnp.dot(p.astype(bf16), vh, preferred_element_type=f32)   # (M, P)
            # output projection folded in per head (padded rows are zero)
            attn = attn + jnp.dot(ctx.astype(bf16), wy_ref[l, h * P:(h + 1) * P, :],
                                  preferred_element_type=f32)
        attn = attn + b_ref[l, 1:2, 0:H]
        x = _layernorm(attn + x, b_ref[l, 3:4, 0:H], b_ref[l, 4:5, 0:H], eps)

        # ---- FFN (intermediate padded to 128 lanes; pad cols stay exactly 0) ----
        inter = _gelu(jnp.dot(x.astype(bf16), wx_ref[l, :, 3 * HP:3 * HP + P],
                              preferred_element_type=f32)
                      + b_ref[l, 0:1, 3 * HP:3 * HP + P])
        ffn = (jnp.dot(inter.astype(bf16), wy_ref[l, HP:HP + P, :],
                       preferred_element_type=f32)
               + b_ref[l, 2:3, 0:H])
        x = _layernorm(ffn + x, b_ref[l, 5:6, 0:H], b_ref[l, 6:7, 0:H], eps)

    # ---- classifier: Linear -> Dropout(eval) -> ReLU -> Linear, lane-dense out ----
    h1 = jnp.maximum(
        jnp.dot(x.astype(bf16), clsw_ref[0:H, :], preferred_element_type=f32)
        + clsb_ref[0:1, :], 0.0)
    out = (jnp.dot(h1.astype(bf16), clsw_ref[H:H + LANE, :], preferred_element_type=f32)
           + clsb_ref[1:2, :])
    out_ref[...] = out.astype(out_ref.dtype)


# ------------------------------- parameters ---------------------------------

def init_params(key, cfg):
    H, I, L, C = cfg.hidden, cfg.inter, cfg.layers, cfg.cls_hidden
    heads = cfg.heads
    Dh = H // heads
    P = LANE
    HP = heads * P
    WIDE = 3 * HP + P
    vocab_pad = pl.cdiv(cfg.vocab_size, P) * P
    scale = 1.0 / math.sqrt(Dh)

    keys = iter(jax.random.split(key, 64))

    def dense(k, fin, fout):
        return jax.random.normal(k, (fin, fout), jnp.float32) * 0.02

    # --- embedding tables + embedding LayerNorm in one f32 slab ---
    word = jnp.zeros((vocab_pad, H), jnp.float32).at[:cfg.vocab_size].set(
        jax.random.normal(next(keys), (cfg.vocab_size, H), jnp.float32) * 0.02)
    pos = jax.random.normal(next(keys), (cfg.max_pos, H), jnp.float32) * 0.02
    typ = jax.random.normal(next(keys), (cfg.type_vocab, H), jnp.float32) * 0.02
    emb_slab = jnp.concatenate(
        [word, pos, typ[0:1],
         jnp.ones((1, H), jnp.float32), jnp.zeros((1, H), jnp.float32)], axis=0)

    # --- per-head 128-lane padding helpers (zeros in the padded region) ---
    def pad_cols_per_head(w):   # (H, heads*Dh) -> (H, HP)
        return (jnp.zeros((H, heads, P), jnp.float32)
                .at[:, :, :Dh].set(w.reshape(H, heads, Dh)).reshape(H, HP))

    def pad_rows_per_head(w):   # (heads*Dh, H) -> (HP, H)
        return (jnp.zeros((heads, P, H), jnp.float32)
                .at[:, :Dh, :].set(w.reshape(heads, Dh, H)).reshape(HP, H))

    def pad_vec_per_head(v):    # (heads*Dh,) -> (HP,)
        return (jnp.zeros((heads, P), jnp.float32)
                .at[:, :Dh].set(v.reshape(heads, Dh)).reshape(HP))

    wx_layers, wy_layers, b_layers = [], [], []
    for _ in range(L):
        qw = dense(next(keys), H, H) * scale          # fold 1/sqrt(Dh) into Q weight
        kw = dense(next(keys), H, H)
        vw = dense(next(keys), H, H)
        aow = dense(next(keys), H, H)
        iw = dense(next(keys), H, I)
        ow = dense(next(keys), I, H)
        qb = jnp.zeros((H,), jnp.float32) * scale     # ... and into Q bias
        kb = jnp.zeros((H,), jnp.float32)
        vb = jnp.zeros((H,), jnp.float32)
        aob = jnp.zeros((H,), jnp.float32)
        ib = jnp.zeros((I,), jnp.float32)
        ob = jnp.zeros((H,), jnp.float32)
        ln1g = jnp.ones((H,), jnp.float32); ln1b = jnp.zeros((H,), jnp.float32)
        ln2g = jnp.ones((H,), jnp.float32); ln2b = jnp.zeros((H,), jnp.float32)

        wqkv = jnp.concatenate([pad_cols_per_head(qw), pad_cols_per_head(kw),
                                pad_cols_per_head(vw)], axis=1)          # (H, 3*HP)
        wi = jnp.zeros((H, P), jnp.float32).at[:, :I].set(iw)            # (H, P)
        wx_layers.append(jnp.concatenate([wqkv, wi], axis=1))            # (H, WIDE)

        wo_attn = pad_rows_per_head(aow)                                 # (HP, H)
        wo_ffn = jnp.zeros((P, H), jnp.float32).at[:I, :].set(ow)        # (P, H)
        wy_layers.append(jnp.concatenate([wo_attn, wo_ffn], axis=0))     # (HP+P, H)

        bwide = jnp.concatenate(
            [pad_vec_per_head(qb), pad_vec_per_head(kb), pad_vec_per_head(vb),
             jnp.zeros((P,), jnp.float32).at[:I].set(ib)])               # (WIDE,)

        def nrow(v):
            return jnp.zeros((WIDE,), jnp.float32).at[:H].set(v)

        b_layers.append(jnp.stack(
            [bwide, nrow(aob), nrow(ob), nrow(ln1g), nrow(ln1b),
             nrow(ln2g), nrow(ln2b)], axis=0))                           # (7, WIDE)

    # --- classifier packed lane-dense to 128 output columns ---
    w1 = dense(next(keys), H, C); b1 = jnp.zeros((C,), jnp.float32)
    w2 = dense(next(keys), C, C); b2 = jnp.zeros((C,), jnp.float32)
    cls_w = jnp.concatenate(
        [jnp.zeros((H, P), jnp.float32).at[:, :C].set(w1),
         jnp.zeros((P, P), jnp.float32).at[:C, :C].set(w2)], axis=0)     # (H+P, P)
    cls_b = jnp.stack([jnp.zeros((P,), jnp.float32).at[:C].set(b1),
                       jnp.zeros((P,), jnp.float32).at[:C].set(b2)], axis=0)

    return {
        "emb_slab": emb_slab,                                 # (vocab_pad+max_pos+3, H) f32
        "wx": jnp.stack(wx_layers).astype(jnp.bfloat16),      # (L, H, WIDE) bf16
        "wy": jnp.stack(wy_layers).astype(jnp.bfloat16),      # (L, HP+P, H) bf16
        "b_slab": jnp.stack(b_layers),                        # (L, 7, WIDE) f32
        "cls_w": cls_w.astype(jnp.bfloat16),                  # (H+P, P) bf16
        "cls_b": cls_b,                                       # (2, P) f32
    }


# ------------------------------ model wrapper --------------------------------

def bert_attention_sequence_embedding(params, input_ids, attention_mask, cfg):
    B, S = input_ids.shape
    M = B * S
    C = cfg.cls_hidden
    vocab_pad = pl.cdiv(cfg.vocab_size, LANE) * LANE

    # Tiny id/mask metadata (mostly constant-folded by XLA); all heavy work
    # including the embedding gather happens inside the fused kernel.
    tok = input_ids.reshape(M, 1).astype(jnp.int32)
    posid = jnp.broadcast_to(jnp.arange(S, dtype=jnp.int32)[None, :], (B, S)).reshape(M, 1)
    batchid = jnp.broadcast_to(jnp.arange(B, dtype=jnp.int32)[:, None], (B, S)).reshape(M, 1)
    ids = jnp.concatenate([tok, posid, batchid], axis=1)                  # (M, 3) i32

    keyadd = ((1.0 - attention_mask.astype(jnp.float32)) * -10000.0).reshape(1, M)
    aux = jnp.concatenate([keyadd, batchid.reshape(1, M).astype(jnp.float32)], axis=0)

    kernel = functools.partial(
        _bert_fused_kernel, M=M, heads=cfg.heads, H=cfg.hidden, L=cfg.layers,
        eps=1e-12, vocab_pad=vocab_pad, max_pos=cfg.max_pos)

    out = pl.pallas_call(
        kernel,
        out_shape=jax.ShapeDtypeStruct((M, LANE), jnp.float32),   # lane-dense output
        compiler_params=pltpu.CompilerParams(vmem_limit_bytes=32 * 1024 * 1024),
    )(ids, aux, params["emb_slab"], params["wx"], params["wy"],
      params["b_slab"], params["cls_w"], params["cls_b"])

    outputs = out[:, :C].reshape(B, S, C)
    return outputs[:, 0, :], outputs, attention_mask


# --------------------------------- driver ------------------------------------

if __name__ == "__main__":
    cfg = Config()
    key = jax.random.PRNGKey(0)
    k_param, k_ids = jax.random.split(key)
    params = init_params(k_param, cfg)

    B, S = 2, 8
    input_ids = jax.random.randint(k_ids, (B, S), 0, cfg.vocab_size, dtype=jnp.int32)
    lengths = jnp.array([S, 5], dtype=jnp.int32)
    attention_mask = (jnp.arange(S)[None, :] < lengths[:, None]).astype(jnp.int32)

    fwd = jax.jit(functools.partial(bert_attention_sequence_embedding, cfg=cfg))
    cls_emb, seq_emb, mask_out = fwd(params, input_ids, attention_mask)
    jax.block_until_ready((cls_emb, seq_emb, mask_out))

    assert cls_emb.shape == (B, cfg.cls_hidden)
    assert seq_emb.shape == (B, S, cfg.cls_hidden)
    assert mask_out.shape == (B, S)
    print("KERNEL_OK")
</pallas_src>

<mosaic_0001>
module attributes {stable_mosaic.version = 11 : i64} {
  func.func @_bert_fused_kernel(%arg0: memref<16x3xi32, #tpu.memory_space<vmem>>, %arg1: memref<2x16xf32, #tpu.memory_space<vmem>>, %arg2: memref<147x32xf32, #tpu.memory_space<vmem>>, %arg3: memref<2x32x1664xbf16, #tpu.memory_space<vmem>>, %arg4: memref<2x640x32xbf16, #tpu.memory_space<vmem>>, %arg5: memref<2x7x1664xf32, #tpu.memory_space<vmem>>, %arg6: memref<160x128xbf16, #tpu.memory_space<vmem>>, %arg7: memref<2x128xf32, #tpu.memory_space<vmem>>, %arg8: memref<16x128xf32, #tpu.memory_space<vmem>>) attributes {dimension_semantics = [], scalar_prefetch = 0 : i64, scratch_operands = 0 : i64, tpu.core_type = #tpu.core_type<tc>} {
    %c0 = arith.constant 0 : index
    %c0_0 = arith.constant 0 : index
    %0 = vector.load %arg0[%c0, %c0_0] : memref<16x3xi32, #tpu.memory_space<vmem>>, vector<16x3xi32>
    %1 = vector.extract_strided_slice %0 {offsets = [0, 0], sizes = [16, 1], strides = [1, 1]} : vector<16x3xi32> to vector<16x1xi32>
    %2 = vector.extract_strided_slice %0 {offsets = [0, 1], sizes = [16, 1], strides = [1, 1]} : vector<16x3xi32> to vector<16x1xi32>
    %3 = vector.extract_strided_slice %0 {offsets = [0, 2], sizes = [16, 1], strides = [1, 1]} : vector<16x3xi32> to vector<16x1xi32>
    %4 = arith.sitofp %3 : vector<16x1xi32> to vector<16x1xf32>
    %5 = tpu.iota {dimensions = array<i32: 1>} : vector<16x128xi32>
    %6 = vector.broadcast %1 : vector<16x1xi32> to vector<16x128xi32>
    %7 = arith.cmpi eq, %6, %5 : vector<16x128xi32>
    %8 = arith.extui %7 : vector<16x128xi1> to vector<16x128xi32>
    %9 = arith.sitofp %8 : vector<16x128xi32> to vector<16x128xf32>
    %10 = tpu.iota {dimensions = array<i32: 1>} : vector<16x16xi32>
    %11 = vector.broadcast %2 : vector<16x1xi32> to vector<16x16xi32>
    %12 = arith.cmpi eq, %11, %10 : vector<16x16xi32>
    %13 = arith.extui %12 : vector<16x16xi1> to vector<16x16xi32>
    %14 = arith.sitofp %13 : vector<16x16xi32> to vector<16x16xf32>
    %c0_1 = arith.constant 0 : index
    %c0_2 = arith.constant 0 : index
    %15 = vector.load %arg2[%c0_1, %c0_2] : memref<147x32xf32, #tpu.memory_space<vmem>>, vector<128x32xf32>
    %cst = arith.constant dense<0.000000e+00> : vector<16x32xf32>
    %16 = tpu.matmul %9, %15, %cst {dimension_numbers = #tpu.dot_dimension_numbers<[1], [0], [0], [1], [0, 0, 1, 1], [], []>} : vector<16x128xf32>, vector<128x32xf32>, vector<16x32xf32> -> vector<16x32xf32>
    %c128 = arith.constant 128 : index
    %c0_3 = arith.constant 0 : index
    %17 = vector.load %arg2[%c128, %c0_3] : memref<147x32xf32, #tpu.memory_space<vmem>>, vector<16x32xf32>
    %cst_4 = arith.constant dense<0.000000e+00> : vector<16x32xf32>
    %18 = tpu.matmul %14, %17, %cst_4 {dimension_numbers = #tpu.dot_dimension_numbers<[1], [0], [0], [1], [0, 0, 1, 1], [], []>} : vector<16x16xf32>, vector<16x32xf32>, vector<16x32xf32> -> vector<16x32xf32>
    %19 = arith.addf %16, %18 : vector<16x32xf32>
    %c144 = arith.constant 144 : index
    %c0_5 = arith.constant 0 : index
    %20 = vector.load %arg2[%c144, %c0_5] : memref<147x32xf32, #tpu.memory_space<vmem>>, vector<1x32xf32>
    %21 = vector.broadcast %20 : vector<1x32xf32> to vector<16x32xf32>
    %22 = arith.addf %19, %21 : vector<16x32xf32>
    %c145 = arith.constant 145 : index
    %c0_6 = arith.constant 0 : index
    %23 = vector.load %arg2[%c145, %c0_6] : memref<147x32xf32, #tpu.memory_space<vmem>>, vector<1x32xf32>
    %c146 = arith.constant 146 : index
    %c0_7 = arith.constant 0 : index
    %24 = vector.load %arg2[%c146, %c0_7] : memref<147x32xf32, #tpu.memory_space<vmem>>, vector<1x32xf32>
    %cst_8 = arith.constant dense<0.000000e+00> : vector<16xf32>
    %25 = vector.multi_reduction <add>, %22, %cst_8 [1] : vector<16x32xf32> to vector<16xf32>
    %26 = vector.shape_cast %25 : vector<16xf32> to vector<16x1xf32>
    %cst_9 = arith.constant 3.200000e+01 : f32
    %27 = vector.broadcast %cst_9 : f32 to vector<16x1xf32>
    %28 = arith.divf %26, %27 : vector<16x1xf32>
    %29 = vector.broadcast %28 : vector<16x1xf32> to vector<16x32xf32>
    %30 = arith.subf %22, %29 : vector<16x32xf32>
    %31 = arith.mulf %30, %30 : vector<16x32xf32>
    %cst_10 = arith.constant dense<0.000000e+00> : vector<16xf32>
    %32 = vector.multi_reduction <add>, %31, %cst_10 [1] : vector<16x32xf32> to vector<16xf32>
    %33 = vector.shape_cast %32 : vector<16xf32> to vector<16x1xf32>
    %cst_11 = arith.constant 3.200000e+01 : f32
    %34 = vector.broadcast %cst_11 : f32 to vector<16x1xf32>
    %35 = arith.divf %33, %34 : vector<16x1xf32>
    %cst_12 = arith.constant 9.99999996E-13 : f32
    %36 = vector.broadcast %cst_12 : f32 to vector<16x1xf32>
    %37 = arith.addf %35, %36 : vector<16x1xf32>
    %38 = math.rsqrt %37 : vector<16x1xf32>
    %39 = vector.broadcast %38 : vector<16x1xf32> to vector<16x32xf32>
    %40 = arith.mulf %30, %39 : vector<16x32xf32>
    %41 = vector.broadcast %23 : vector<1x32xf32> to vector<16x32xf32>
    %42 = arith.mulf %40, %41 : vector<16x32xf32>
    %43 = vector.broadcast %24 : vector<1x32xf32> to vector<16x32xf32>
    %44 = arith.addf %42, %43 : vector<16x32xf32>
    %c1 = arith.constant 1 : index
    %c0_13 = arith.constant 0 : index
    %45 = vector.load %arg1[%c1, %c0_13] : memref<2x16xf32, #tpu.memory_space<vmem>>, vector<1x16xf32>
    %46 = vector.broadcast %4 : vector<16x1xf32> to vector<16x16xf32>
    %47 = vector.broadcast %45 : vector<1x16xf32> to vector<16x16xf32>
    %48 = arith.cmpf oeq, %46, %47 : vector<16x16xf32>
    %c0_14 = arith.constant 0 : index
    %c0_15 = arith.constant 0 : index
    %49 = vector.load %arg1[%c0_14, %c0_15] : memref<2x16xf32, #tpu.memory_space<vmem>>, vector<1x16xf32>
    %cst_16 = arith.constant -1.000000e+04 : f32
    %50 = vector.shape_cast %49 : vector<1x16xf32> to vector<1x16xf32>
    %51 = vector.broadcast %50 : vector<1x16xf32> to vector<16x16xf32>
    %52 = vector.broadcast %cst_16 : f32 to vector<16x16xf32>
    %53 = arith.select %48, %51, %52 : vector<16x16xi1>, vector<16x16xf32>
    %54 = arith.truncf %44 : vector<16x32xf32> to vector<16x32xbf16>
    %c0_17 = arith.constant 0 : index
    %c0_18 = arith.constant 0 : index
    %c0_19 = arith.constant 0 : index
    %55 = vector.load %arg3[%c0_17, %c0_18, %c0_19] : memref<2x32x1664xbf16, #tpu.memory_space<vmem>>, vector<1x32x1536xbf16>
    %56 = vector.shape_cast %55 : vector<1x32x1536xbf16> to vector<32x1536xbf16>
    %cst_20 = arith.constant dense<0.000000e+00> : vector<16x1536xf32>
    %57 = tpu.matmul %54, %56, %cst_20 {dimension_numbers = #tpu.dot_dimension_numbers<[1], [0], [0], [1], [0, 0, 1, 1], [], []>} : vector<16x32xbf16>, vector<32x1536xbf16>, vector<16x1536xf32> -> vector<16x1536xf32>
    %c0_21 = arith.constant 0 : index
    %c0_22 = arith.constant 0 : index
    %c0_23 = arith.constant 0 : index
    %58 = vector.load %arg5[%c0_21, %c0_22, %c0_23] : memref<2x7x1664xf32, #tpu.memory_space<vmem>>, vector<1x1x1536xf32>
    %59 = vector.shape_cast %58 : vector<1x1x1536xf32> to vector<1x1536xf32>
    %60 = vector.broadcast %59 : vector<1x1536xf32> to vector<16x1536xf32>
    %61 = arith.addf %57, %60 : vector<16x1536xf32>
    %cst_24 = arith.constant 0.000000e+00 : f32
    %62 = vector.broadcast %cst_24 : f32 to vector<16x32xf32>
    %63 = vector.extract_strided_slice %61 {offsets = [0, 0], sizes = [16, 128], strides = [1, 1]} : vector<16x1536xf32> to vector<16x128xf32>
    %64 = arith.truncf %63 : vector<16x128xf32> to vector<16x128xbf16>
    %65 = vector.extract_strided_slice %61 {offsets = [0, 512], sizes = [16, 128], strides = [1, 1]} : vector<16x1536xf32> to vector<16x128xf32>
    %66 = arith.truncf %65 : vector<16x128xf32> to vector<16x128xbf16>
    %67 = vector.extract_strided_slice %61 {offsets = [0, 1024], sizes = [16, 128], strides = [1, 1]} : vector<16x1536xf32> to vector<16x128xf32>
    %68 = arith.truncf %67 : vector<16x128xf32> to vector<16x128xbf16>
    %cst_25 = arith.constant dense<0.000000e+00> : vector<16x16xf32>
    %69 = tpu.matmul %64, %66, %cst_25 {dimension_numbers = #tpu.dot_dimension_numbers<[1], [1], [0], [0], [0, 0, 1, 0], [], []>} : vector<16x128xbf16>, vector<16x128xbf16>, vector<16x16xf32> -> vector<16x16xf32>
    %70 = arith.addf %69, %53 : vector<16x16xf32>
    %cst_26 = arith.constant dense<0xFF800000> : vector<16xf32>
    %71 = vector.multi_reduction <maximumf>, %70, %cst_26 [1] : vector<16x16xf32> to vector<16xf32>
    %72 = vector.shape_cast %71 : vector<16xf32> to vector<16x1xf32>
    %73 = vector.broadcast %72 : vector<16x1xf32> to vector<16x16xf32>
    %74 = arith.subf %70, %73 : vector<16x16xf32>
    %75 = math.exp %74 : vector<16x16xf32>
    %cst_27 = arith.constant dense<0.000000e+00> : vector<16xf32>
    %76 = vector.multi_reduction <add>, %75, %cst_27 [1] : vector<16x16xf32> to vector<16xf32>
    %77 = vector.shape_cast %76 : vector<16xf32> to vector<16x1xf32>
    %78 = tpu.reciprocal %77 {approx = true} : vector<16x1xf32> -> vector<16x1xf32>
    %79 = vector.broadcast %78 : vector<16x1xf32> to vector<16x16xf32>
    %80 = arith.mulf %75, %79 : vector<16x16xf32>
    %81 = arith.truncf %80 : vector<16x16xf32> to vector<16x16xbf16>
    %cst_28 = arith.constant dense<0.000000e+00> : vector<16x128xf32>
    %82 = tpu.matmul %81, %68, %cst_28 {dimension_numbers = #tpu.dot_dimension_numbers<[1], [0], [0], [1], [0, 0, 1, 1], [], []>} : vector<16x16xbf16>, vector<16x128xbf16>, vector<16x128xf32> -> vector<16x128xf32>
    %83 = arith.truncf %82 : vector<16x128xf32> to vector<16x128xbf16>
    %c0_29 = arith.constant 0 : index
    %c0_30 = arith.constant 0 : index
    %c0_31 = arith.constant 0 : index
    %84 = vector.load %arg4[%c0_29, %c0_30, %c0_31] : memref<2x640x32xbf16, #tpu.memory_space<vmem>>, vector<1x128x32xbf16>
    %85 = vector.shape_cast %84 : vector<1x128x32xbf16> to vector<128x32xbf16>
    %cst_32 = arith.constant dense<0.000000e+00> : vector<16x32xf32>
    %86 = tpu.matmul %83, %85, %cst_32 {dimension_numbers = #tpu.dot_dimension_numbers<[1], [0], [0], [1], [0, 0, 1, 1], [], []>} : vector<16x128xbf16>, vector<128x32xbf16>, vector<16x32xf32> -> vector<16x32xf32>
    %87 = arith.addf %62, %86 : vector<16x32xf32>
    %88 = vector.extract_strided_slice %61 {offsets = [0, 128], sizes = [16, 128], strides = [1, 1]} : vector<16x1536xf32> to vector<16x128xf32>
    %89 = arith.truncf %88 : vector<16x128xf32> to vector<16x128xbf16>
    %90 = vector.extract_strided_slice %61 {offsets = [0, 640], sizes = [16, 128], strides = [1, 1]} : vector<16x1536xf32> to vector<16x128xf32>
    %91 = arith.truncf %90 : vector<16x128xf32> to vector<16x128xbf16>
    %92 = vector.extract_strided_slice %61 {offsets = [0, 1152], sizes = [16, 128], strides = [1, 1]} : vector<16x1536xf32> to vector<16x128xf32>
    %93 = arith.truncf %92 : vector<16x128xf32> to vector<16x128xbf16>
    %cst_33 = arith.constant dense<0.000000e+00> : vector<16x16xf32>
    %94 = tpu.matmul %89, %91, %cst_33 {dimension_numbers = #tpu.dot_dimension_numbers<[1], [1], [0], [0], [0, 0, 1, 0], [], []>} : vector<16x128xbf16>, vector<16x128xbf16>, vector<16x16xf32> -> vector<16x16xf32>
    %95 = arith.addf %94, %53 : vector<16x16xf32>
    %cst_34 = arith.constant dense<0xFF800000> : vector<16xf32>
    %96 = vector.multi_reduction <maximumf>, %95, %cst_34 [1] : vector<16x16xf32> to vector<16xf32>
    %97 = vector.shape_cast %96 : vector<16xf32> to vector<16x1xf32>
    %98 = vector.broadcast %97 : vector<16x1xf32> to vector<16x16xf32>
    %99 = arith.subf %95, %98 : vector<16x16xf32>
    %100 = math.exp %99 : vector<16x16xf32>
    %cst_35 = arith.constant dense<0.000000e+00> : vector<16xf32>
    %101 = vector.multi_reduction <add>, %100, %cst_35 [1] : vector<16x16xf32> to vector<16xf32>
    %102 = vector.shape_cast %101 : vector<16xf32> to vector<16x1xf32>
    %103 = tpu.reciprocal %102 {approx = true} : vector<16x1xf32> -> vector<16x1xf32>
    %104 = vector.broadcast %103 : vector<16x1xf32> to vector<16x16xf32>
    %105 = arith.mulf %100, %104 : vector<16x16xf32>
    %106 = arith.truncf %105 : vector<16x16xf32> to vector<16x16xbf16>
    %cst_36 = arith.constant dense<0.000000e+00> : vector<16x128xf32>
    %107 = tpu.matmul %106, %93, %cst_36 {dimension_numbers = #tpu.dot_dimension_numbers<[1], [0], [0], [1], [0, 0, 1, 1], [], []>} : vector<16x16xbf16>, vector<16x128xbf16>, vector<16x128xf32> -> vector<16x128xf32>
    %108 = arith.truncf %107 : vector<16x128xf32> to vector<16x128xbf16>
    %c0_37 = arith.constant 0 : index
    %c128_38 = arith.constant 128 : index
    %c0_39 = arith.constant 0 : index
    %109 = vector.load %arg4[%c0_37, %c128_38, %c0_39] : memref<2x640x32xbf16, #tpu.memory_space<vmem>>, vector<1x128x32xbf16>
    %110 = vector.shape_cast %109 : vector<1x128x32xbf16> to vector<128x32xbf16>
    %cst_40 = arith.constant dense<0.000000e+00> : vector<16x32xf32>
    %111 = tpu.matmul %108, %110, %cst_40 {dimension_numbers = #tpu.dot_dimension_numbers<[1], [0], [0], [1], [0, 0, 1, 1], [], []>} : vector<16x128xbf16>, vector<128x32xbf16>, vector<16x32xf32> -> vector<16x32xf32>
    %112 = arith.addf %87, %111 : vector<16x32xf32>
    %113 = vector.extract_strided_slice %61 {offsets = [0, 256], sizes = [16, 128], strides = [1, 1]} : vector<16x1536xf32> to vector<16x128xf32>
    %114 = arith.truncf %113 : vector<16x128xf32> to vector<16x128xbf16>
    %115 = vector.extract_strided_slice %61 {offsets = [0, 768], sizes = [16, 128], strides = [1, 1]} : vector<16x1536xf32> to vector<16x128xf32>
    %116 = arith.truncf %115 : vector<16x128xf32> to vector<16x128xbf16>
    %117 = vector.extract_strided_slice %61 {offsets = [0, 1280], sizes = [16, 128], strides = [1, 1]} : vector<16x1536xf32> to vector<16x128xf32>
    %118 = arith.truncf %117 : vector<16x128xf32> to vector<16x128xbf16>
    %cst_41 = arith.constant dense<0.000000e+00> : vector<16x16xf32>
    %119 = tpu.matmul %114, %116, %cst_41 {dimension_numbers = #tpu.dot_dimension_numbers<[1], [1], [0], [0], [0, 0, 1, 0], [], []>} : vector<16x128xbf16>, vector<16x128xbf16>, vector<16x16xf32> -> vector<16x16xf32>
    %120 = arith.addf %119, %53 : vector<16x16xf32>
    %cst_42 = arith.constant dense<0xFF800000> : vector<16xf32>
    %121 = vector.multi_reduction <maximumf>, %120, %cst_42 [1] : vector<16x16xf32> to vector<16xf32>
    %122 = vector.shape_cast %121 : vector<16xf32> to vector<16x1xf32>
    %123 = vector.broadcast %122 : vector<16x1xf32> to vector<16x16xf32>
    %124 = arith.subf %120, %123 : vector<16x16xf32>
    %125 = math.exp %124 : vector<16x16xf32>
    %cst_43 = arith.constant dense<0.000000e+00> : vector<16xf32>
    %126 = vector.multi_reduction <add>, %125, %cst_43 [1] : vector<16x16xf32> to vector<16xf32>
    %127 = vector.shape_cast %126 : vector<16xf32> to vector<16x1xf32>
    %128 = tpu.reciprocal %127 {approx = true} : vector<16x1xf32> -> vector<16x1xf32>
    %129 = vector.broadcast %128 : vector<16x1xf32> to vector<16x16xf32>
    %130 = arith.mulf %125, %129 : vector<16x16xf32>
    %131 = arith.truncf %130 : vector<16x16xf32> to vector<16x16xbf16>
    %cst_44 = arith.constant dense<0.000000e+00> : vector<16x128xf32>
    %132 = tpu.matmul %131, %118, %cst_44 {dimension_numbers = #tpu.dot_dimension_numbers<[1], [0], [0], [1], [0, 0, 1, 1], [], []>} : vector<16x16xbf16>, vector<16x128xbf16>, vector<16x128xf32> -> vector<16x128xf32>
    %133 = arith.truncf %132 : vector<16x128xf32> to vector<16x128xbf16>
    %c0_45 = arith.constant 0 : index
    %c256 = arith.constant 256 : index
    %c0_46 = arith.constant 0 : index
    %134 = vector.load %arg4[%c0_45, %c256, %c0_46] : memref<2x640x32xbf16, #tpu.memory_space<vmem>>, vector<1x128x32xbf16>
    %135 = vector.shape_cast %134 : vector<1x128x32xbf16> to vector<128x32xbf16>
    %cst_47 = arith.constant dense<0.000000e+00> : vector<16x32xf32>
    %136 = tpu.matmul %133, %135, %cst_47 {dimension_numbers = #tpu.dot_dimension_numbers<[1], [0], [0], [1], [0, 0, 1, 1], [], []>} : vector<16x128xbf16>, vector<128x32xbf16>, vector<16x32xf32> -> vector<16x32xf32>
    %137 = arith.addf %112, %136 : vector<16x32xf32>
    %138 = vector.extract_strided_slice %61 {offsets = [0, 384], sizes = [16, 128], strides = [1, 1]} : vector<16x1536xf32> to vector<16x128xf32>
    %139 = arith.truncf %138 : vector<16x128xf32> to vector<16x128xbf16>
    %140 = vector.extract_strided_slice %61 {offsets = [0, 896], sizes = [16, 128], strides = [1, 1]} : vector<16x1536xf32> to vector<16x128xf32>
    %141 = arith.truncf %140 : vector<16x128xf32> to vector<16x128xbf16>
    %142 = vector.extract_strided_slice %61 {offsets = [0, 1408], sizes = [16, 128], strides = [1, 1]} : vector<16x1536xf32> to vector<16x128xf32>
    %143 = arith.truncf %142 : vector<16x128xf32> to vector<16x128xbf16>
    %cst_48 = arith.constant dense<0.000000e+00> : vector<16x16xf32>
    %144 = tpu.matmul %139, %141, %cst_48 {dimension_numbers = #tpu.dot_dimension_numbers<[1], [1], [0], [0], [0, 0, 1, 0], [], []>} : vector<16x128xbf16>, vector<16x128xbf16>, vector<16x16xf32> -> vector<16x16xf32>
    %145 = arith.addf %144, %53 : vector<16x16xf32>
    %cst_49 = arith.constant dense<0xFF800000> : vector<16xf32>
    %146 = vector.multi_reduction <maximumf>, %145, %cst_49 [1] : vector<16x16xf32> to vector<16xf32>
    %147 = vector.shape_cast %146 : vector<16xf32> to vector<16x1xf32>
    %148 = vector.broadcast %147 : vector<16x1xf32> to vector<16x16xf32>
    %149 = arith.subf %145, %148 : vector<16x16xf32>
    %150 = math.exp %149 : vector<16x16xf32>
    %cst_50 = arith.constant dense<0.000000e+00> : vector<16xf32>
    %151 = vector.multi_reduction <add>, %150, %cst_50 [1] : vector<16x16xf32> to vector<16xf32>
    %152 = vector.shape_cast %151 : vector<16xf32> to vector<16x1xf32>
    %153 = tpu.reciprocal %152 {approx = true} : vector<16x1xf32> -> vector<16x1xf32>
    %154 = vector.broadcast %153 : vector<16x1xf32> to vector<16x16xf32>
    %155 = arith.mulf %150, %154 : vector<16x16xf32>
    %156 = arith.truncf %155 : vector<16x16xf32> to vector<16x16xbf16>
    %cst_51 = arith.constant dense<0.000000e+00> : vector<16x128xf32>
    %157 = tpu.matmul %156, %143, %cst_51 {dimension_numbers = #tpu.dot_dimension_numbers<[1], [0], [0], [1], [0, 0, 1, 1], [], []>} : vector<16x16xbf16>, vector<16x128xbf16>, vector<16x128xf32> -> vector<16x128xf32>
    %158 = arith.truncf %157 : vector<16x128xf32> to vector<16x128xbf16>
    %c0_52 = arith.constant 0 : index
    %c384 = arith.constant 384 : index
    %c0_53 = arith.constant 0 : index
    %159 = vector.load %arg4[%c0_52, %c384, %c0_53] : memref<2x640x32xbf16, #tpu.memory_space<vmem>>, vector<1x128x32xbf16>
    %160 = vector.shape_cast %159 : vector<1x128x32xbf16> to vector<128x32xbf16>
    %cst_54 = arith.constant dense<0.000000e+00> : vector<16x32xf32>
    %161 = tpu.matmul %158, %160, %cst_54 {dimension_numbers = #tpu.dot_dimension_numbers<[1], [0], [0], [1], [0, 0, 1, 1], [], []>} : vector<16x128xbf16>, vector<128x32xbf16>, vector<16x32xf32> -> vector<16x32xf32>
    %162 = arith.addf %137, %161 : vector<16x32xf32>
    %c0_55 = arith.constant 0 : index
    %c1_56 = arith.constant 1 : index
    %c0_57 = arith.constant 0 : index
    %163 = vector.load %arg5[%c0_55, %c1_56, %c0_57] : memref<2x7x1664xf32, #tpu.memory_space<vmem>>, vector<1x1x32xf32>
    %164 = vector.shape_cast %163 : vector<1x1x32xf32> to vector<1x32xf32>
    %165 = vector.broadcast %164 : vector<1x32xf32> to vector<16x32xf32>
    %166 = arith.addf %162, %165 : vector<16x32xf32>
    %167 = arith.addf %166, %44 : vector<16x32xf32>
    %c0_58 = arith.constant 0 : index
    %c3 = arith.constant 3 : index
    %c0_59 = arith.constant 0 : index
    %168 = vector.load %arg5[%c0_58, %c3, %c0_59] : memref<2x7x1664xf32, #tpu.memory_space<vmem>>, vector<1x1x32xf32>
    %169 = vector.shape_cast %168 : vector<1x1x32xf32> to vector<1x32xf32>
    %c0_60 = arith.constant 0 : index
    %c4 = arith.constant 4 : index
    %c0_61 = arith.constant 0 : index
    %170 = vector.load %arg5[%c0_60, %c4, %c0_61] : memref<2x7x1664xf32, #tpu.memory_space<vmem>>, vector<1x1x32xf32>
    %171 = vector.shape_cast %170 : vector<1x1x32xf32> to vector<1x32xf32>
    %cst_62 = arith.constant dense<0.000000e+00> : vector<16xf32>
    %172 = vector.multi_reduction <add>, %167, %cst_62 [1] : vector<16x32xf32> to vector<16xf32>
    %173 = vector.shape_cast %172 : vector<16xf32> to vector<16x1xf32>
    %cst_63 = arith.constant 3.200000e+01 : f32
    %174 = vector.broadcast %cst_63 : f32 to vector<16x1xf32>
    %175 = arith.divf %173, %174 : vector<16x1xf32>
    %176 = vector.broadcast %175 : vector<16x1xf32> to vector<16x32xf32>
    %177 = arith.subf %167, %176 : vector<16x32xf32>
    %178 = arith.mulf %177, %177 : vector<16x32xf32>
    %cst_64 = arith.constant dense<0.000000e+00> : vector<16xf32>
    %179 = vector.multi_reduction <add>, %178, %cst_64 [1] : vector<16x32xf32> to vector<16xf32>
    %180 = vector.shape_cast %179 : vector<16xf32> to vector<16x1xf32>
    %cst_65 = arith.constant 3.200000e+01 : f32
    %181 = vector.broadcast %cst_65 : f32 to vector<16x1xf32>
    %182 = arith.divf %180, %181 : vector<16x1xf32>
    %cst_66 = arith.constant 9.99999996E-13 : f32
    %183 = vector.broadcast %cst_66 : f32 to vector<16x1xf32>
    %184 = arith.addf %182, %183 : vector<16x1xf32>
    %185 = math.rsqrt %184 : vector<16x1xf32>
    %186 = vector.broadcast %185 : vector<16x1xf32> to vector<16x32xf32>
    %187 = arith.mulf %177, %186 : vector<16x32xf32>
    %188 = vector.broadcast %169 : vector<1x32xf32> to vector<16x32xf32>
    %189 = arith.mulf %187, %188 : vector<16x32xf32>
    %190 = vector.broadcast %171 : vector<1x32xf32> to vector<16x32xf32>
    %191 = arith.addf %189, %190 : vector<16x32xf32>
    %192 = arith.truncf %191 : vector<16x32xf32> to vector<16x32xbf16>
    %c0_67 = arith.constant 0 : index
    %c0_68 = arith.constant 0 : index
    %c1536 = arith.constant 1536 : index
    %193 = vector.load %arg3[%c0_67, %c0_68, %c1536] : memref<2x32x1664xbf16, #tpu.memory_space<vmem>>, vector<1x32x128xbf16>
    %194 = vector.shape_cast %193 : vector<1x32x128xbf16> to vector<32x128xbf16>
    %cst_69 = arith.constant dense<0.000000e+00> : vector<16x128xf32>
    %195 = tpu.matmul %192, %194, %cst_69 {dimension_numbers = #tpu.dot_dimension_numbers<[1], [0], [0], [1], [0, 0, 1, 1], [], []>} : vector<16x32xbf16>, vector<32x128xbf16>, vector<16x128xf32> -> vector<16x128xf32>
    %c0_70 = arith.constant 0 : index
    %c0_71 = arith.constant 0 : index
    %c1536_72 = arith.constant 1536 : index
    %196 = vector.load %arg5[%c0_70, %c0_71, %c1536_72] : memref<2x7x1664xf32, #tpu.memory_space<vmem>>, vector<1x1x128xf32>
    %197 = vector.shape_cast %196 : vector<1x1x128xf32> to vector<1x128xf32>
    %198 = vector.broadcast %197 : vector<1x128xf32> to vector<16x128xf32>
    %199 = arith.addf %195, %198 : vector<16x128xf32>
    %cst_73 = arith.constant 5.000000e-01 : f32
    %200 = vector.broadcast %cst_73 : f32 to vector<16x128xf32>
    %201 = arith.mulf %200, %199 : vector<16x128xf32>
    %cst_74 = arith.constant 4.471500e-02 : f32
    %202 = vector.broadcast %cst_74 : f32 to vector<16x128xf32>
    %203 = arith.mulf %202, %199 : vector<16x128xf32>
    %204 = arith.mulf %203, %199 : vector<16x128xf32>
    %205 = arith.mulf %204, %199 : vector<16x128xf32>
    %206 = arith.addf %199, %205 : vector<16x128xf32>
    %cst_75 = arith.constant 0.797884583 : f32
    %207 = vector.broadcast %cst_75 : f32 to vector<16x128xf32>
    %208 = arith.mulf %207, %206 : vector<16x128xf32>
    %209 = math.tanh %208 : vector<16x128xf32>
    %cst_76 = arith.constant 1.000000e+00 : f32
    %210 = vector.broadcast %cst_76 : f32 to vector<16x128xf32>
    %211 = arith.addf %210, %209 : vector<16x128xf32>
    %212 = arith.mulf %201, %211 : vector<16x128xf32>
    %213 = arith.truncf %212 : vector<16x128xf32> to vector<16x128xbf16>
    %c0_77 = arith.constant 0 : index
    %c512 = arith.constant 512 : index
    %c0_78 = arith.constant 0 : index
    %214 = vector.load %arg4[%c0_77, %c512, %c0_78] : memref<2x640x32xbf16, #tpu.memory_space<vmem>>, vector<1x128x32xbf16>
    %215 = vector.shape_cast %214 : vector<1x128x32xbf16> to vector<128x32xbf16>
    %cst_79 = arith.constant dense<0.000000e+00> : vector<16x32xf32>
    %216 = tpu.matmul %213, %215, %cst_79 {dimension_numbers = #tpu.dot_dimension_numbers<[1], [0], [0], [1], [0, 0, 1, 1], [], []>} : vector<16x128xbf16>, vector<128x32xbf16>, vector<16x32xf32> -> vector<16x32xf32>
    %c0_80 = arith.constant 0 : index
    %c2 = arith.constant 2 : index
    %c0_81 = arith.constant 0 : index
    %217 = vector.load %arg5[%c0_80, %c2, %c0_81] : memref<2x7x1664xf32, #tpu.memory_space<vmem>>, vector<1x1x32xf32>
    %218 = vector.shape_cast %217 : vector<1x1x32xf32> to vector<1x32xf32>
    %219 = vector.broadcast %218 : vector<1x32xf32> to vector<16x32xf32>
    %220 = arith.addf %216, %219 : vector<16x32xf32>
    %221 = arith.addf %220, %191 : vector<16x32xf32>
    %c0_82 = arith.constant 0 : index
    %c5 = arith.constant 5 : index
    %c0_83 = arith.constant 0 : index
    %222 = vector.load %arg5[%c0_82, %c5, %c0_83] : memref<2x7x1664xf32, #tpu.memory_space<vmem>>, vector<1x1x32xf32>
    %223 = vector.shape_cast %222 : vector<1x1x32xf32> to vector<1x32xf32>
    %c0_84 = arith.constant 0 : index
    %c6 = arith.constant 6 : index
    %c0_85 = arith.constant 0 : index
    %224 = vector.load %arg5[%c0_84, %c6, %c0_85] : memref<2x7x1664xf32, #tpu.memory_space<vmem>>, vector<1x1x32xf32>
    %225 = vector.shape_cast %224 : vector<1x1x32xf32> to vector<1x32xf32>
    %cst_86 = arith.constant dense<0.000000e+00> : vector<16xf32>
    %226 = vector.multi_reduction <add>, %221, %cst_86 [1] : vector<16x32xf32> to vector<16xf32>
    %227 = vector.shape_cast %226 : vector<16xf32> to vector<16x1xf32>
    %cst_87 = arith.constant 3.200000e+01 : f32
    %228 = vector.broadcast %cst_87 : f32 to vector<16x1xf32>
    %229 = arith.divf %227, %228 : vector<16x1xf32>
    %230 = vector.broadcast %229 : vector<16x1xf32> to vector<16x32xf32>
    %231 = arith.subf %221, %230 : vector<16x32xf32>
    %232 = arith.mulf %231, %231 : vector<16x32xf32>
    %cst_88 = arith.constant dense<0.000000e+00> : vector<16xf32>
    %233 = vector.multi_reduction <add>, %232, %cst_88 [1] : vector<16x32xf32> to vector<16xf32>
    %234 = vector.shape_cast %233 : vector<16xf32> to vector<16x1xf32>
    %cst_89 = arith.constant 3.200000e+01 : f32
    %235 = vector.broadcast %cst_89 : f32 to vector<16x1xf32>
    %236 = arith.divf %234, %235 : vector<16x1xf32>
    %cst_90 = arith.constant 9.99999996E-13 : f32
    %237 = vector.broadcast %cst_90 : f32 to vector<16x1xf32>
    %238 = arith.addf %236, %237 : vector<16x1xf32>
    %239 = math.rsqrt %238 : vector<16x1xf32>
    %240 = vector.broadcast %239 : vector<16x1xf32> to vector<16x32xf32>
    %241 = arith.mulf %231, %240 : vector<16x32xf32>
    %242 = vector.broadcast %223 : vector<1x32xf32> to vector<16x32xf32>
    %243 = arith.mulf %241, %242 : vector<16x32xf32>
    %244 = vector.broadcast %225 : vector<1x32xf32> to vector<16x32xf32>
    %245 = arith.addf %243, %244 : vector<16x32xf32>
    %246 = arith.truncf %245 : vector<16x32xf32> to vector<16x32xbf16>
    %c1_91 = arith.constant 1 : index
    %c0_92 = arith.constant 0 : index
    %c0_93 = arith.constant 0 : index
    %247 = vector.load %arg3[%c1_91, %c0_92, %c0_93] : memref<2x32x1664xbf16, #tpu.memory_space<vmem>>, vector<1x32x1536xbf16>
    %248 = vector.shape_cast %247 : vector<1x32x1536xbf16> to vector<32x1536xbf16>
    %cst_94 = arith.constant dense<0.000000e+00> : vector<16x1536xf32>
    %249 = tpu.matmul %246, %248, %cst_94 {dimension_numbers = #tpu.dot_dimension_numbers<[1], [0], [0], [1], [0, 0, 1, 1], [], []>} : vector<16x32xbf16>, vector<32x1536xbf16>, vector<16x1536xf32> -> vector<16x1536xf32>
    %c1_95 = arith.constant 1 : index
    %c0_96 = arith.constant 0 : index
    %c0_97 = arith.constant 0 : index
    %250 = vector.load %arg5[%c1_95, %c0_96, %c0_97] : memref<2x7x1664xf32, #tpu.memory_space<vmem>>, vector<1x1x1536xf32>
    %251 = vector.shape_cast %250 : vector<1x1x1536xf32> to vector<1x1536xf32>
    %252 = vector.broadcast %251 : vector<1x1536xf32> to vector<16x1536xf32>
    %253 = arith.addf %249, %252 : vector<16x1536xf32>
    %cst_98 = arith.constant 0.000000e+00 : f32
    %254 = vector.broadcast %cst_98 : f32 to vector<16x32xf32>
    %255 = vector.extract_strided_slice %253 {offsets = [0, 0], sizes = [16, 128], strides = [1, 1]} : vector<16x1536xf32> to vector<16x128xf32>
    %256 = arith.truncf %255 : vector<16x128xf32> to vector<16x128xbf16>
    %257 = vector.extract_strided_slice %253 {offsets = [0, 512], sizes = [16, 128], strides = [1, 1]} : vector<16x1536xf32> to vector<16x128xf32>
    %258 = arith.truncf %257 : vector<16x128xf32> to vector<16x128xbf16>
    %259 = vector.extract_strided_slice %253 {offsets = [0, 1024], sizes = [16, 128], strides = [1, 1]} : vector<16x1536xf32> to vector<16x128xf32>
    %260 = arith.truncf %259 : vector<16x128xf32> to vector<16x128xbf16>
    %cst_99 = arith.constant dense<0.000000e+00> : vector<16x16xf32>
    %261 = tpu.matmul %256, %258, %cst_99 {dimension_numbers = #tpu.dot_dimension_numbers<[1], [1], [0], [0], [0, 0, 1, 0], [], []>} : vector<16x128xbf16>, vector<16x128xbf16>, vector<16x16xf32> -> vector<16x16xf32>
    %262 = arith.addf %261, %53 : vector<16x16xf32>
    %cst_100 = arith.constant dense<0xFF800000> : vector<16xf32>
    %263 = vector.multi_reduction <maximumf>, %262, %cst_100 [1] : vector<16x16xf32> to vector<16xf32>
    %264 = vector.shape_cast %263 : vector<16xf32> to vector<16x1xf32>
    %265 = vector.broadcast %264 : vector<16x1xf32> to vector<16x16xf32>
    %266 = arith.subf %262, %265 : vector<16x16xf32>
    %267 = math.exp %266 : vector<16x16xf32>
    %cst_101 = arith.constant dense<0.000000e+00> : vector<16xf32>
    %268 = vector.multi_reduction <add>, %267, %cst_101 [1] : vector<16x16xf32> to vector<16xf32>
    %269 = vector.shape_cast %268 : vector<16xf32> to vector<16x1xf32>
    %270 = tpu.reciprocal %269 {approx = true} : vector<16x1xf32> -> vector<16x1xf32>
    %271 = vector.broadcast %270 : vector<16x1xf32> to vector<16x16xf32>
    %272 = arith.mulf %267, %271 : vector<16x16xf32>
    %273 = arith.truncf %272 : vector<16x16xf32> to vector<16x16xbf16>
    %cst_102 = arith.constant dense<0.000000e+00> : vector<16x128xf32>
    %274 = tpu.matmul %273, %260, %cst_102 {dimension_numbers = #tpu.dot_dimension_numbers<[1], [0], [0], [1], [0, 0, 1, 1], [], []>} : vector<16x16xbf16>, vector<16x128xbf16>, vector<16x128xf32> -> vector<16x128xf32>
    %275 = arith.truncf %274 : vector<16x128xf32> to vector<16x128xbf16>
    %c1_103 = arith.constant 1 : index
    %c0_104 = arith.constant 0 : index
    %c0_105 = arith.constant 0 : index
    %276 = vector.load %arg4[%c1_103, %c0_104, %c0_105] : memref<2x640x32xbf16, #tpu.memory_space<vmem>>, vector<1x128x32xbf16>
    %277 = vector.shape_cast %276 : vector<1x128x32xbf16> to vector<128x32xbf16>
    %cst_106 = arith.constant dense<0.000000e+00> : vector<16x32xf32>
    %278 = tpu.matmul %275, %277, %cst_106 {dimension_numbers = #tpu.dot_dimension_numbers<[1], [0], [0], [1], [0, 0, 1, 1], [], []>} : vector<16x128xbf16>, vector<128x32xbf16>, vector<16x32xf32> -> vector<16x32xf32>
    %279 = arith.addf %254, %278 : vector<16x32xf32>
    %280 = vector.extract_strided_slice %253 {offsets = [0, 128], sizes = [16, 128], strides = [1, 1]} : vector<16x1536xf32> to vector<16x128xf32>
    %281 = arith.truncf %280 : vector<16x128xf32> to vector<16x128xbf16>
    %282 = vector.extract_strided_slice %253 {offsets = [0, 640], sizes = [16, 128], strides = [1, 1]} : vector<16x1536xf32> to vector<16x128xf32>
    %283 = arith.truncf %282 : vector<16x128xf32> to vector<16x128xbf16>
    %284 = vector.extract_strided_slice %253 {offsets = [0, 1152], sizes = [16, 128], strides = [1, 1]} : vector<16x1536xf32> to vector<16x128xf32>
    %285 = arith.truncf %284 : vector<16x128xf32> to vector<16x128xbf16>
    %cst_107 = arith.constant dense<0.000000e+00> : vector<16x16xf32>
    %286 = tpu.matmul %281, %283, %cst_107 {dimension_numbers = #tpu.dot_dimension_numbers<[1], [1], [0], [0], [0, 0, 1, 0], [], []>} : vector<16x128xbf16>, vector<16x128xbf16>, vector<16x16xf32> -> vector<16x16xf32>
    %287 = arith.addf %286, %53 : vector<16x16xf32>
    %cst_108 = arith.constant dense<0xFF800000> : vector<16xf32>
    %288 = vector.multi_reduction <maximumf>, %287, %cst_108 [1] : vector<16x16xf32> to vector<16xf32>
    %289 = vector.shape_cast %288 : vector<16xf32> to vector<16x1xf32>
    %290 = vector.broadcast %289 : vector<16x1xf32> to vector<16x16xf32>
    %291 = arith.subf %287, %290 : vector<16x16xf32>
    %292 = math.exp %291 : vector<16x16xf32>
    %cst_109 = arith.constant dense<0.000000e+00> : vector<16xf32>
    %293 = vector.multi_reduction <add>, %292, %cst_109 [1] : vector<16x16xf32> to vector<16xf32>
    %294 = vector.shape_cast %293 : vector<16xf32> to vector<16x1xf32>
    %295 = tpu.reciprocal %294 {approx = true} : vector<16x1xf32> -> vector<16x1xf32>
    %296 = vector.broadcast %295 : vector<16x1xf32> to vector<16x16xf32>
    %297 = arith.mulf %292, %296 : vector<16x16xf32>
    %298 = arith.truncf %297 : vector<16x16xf32> to vector<16x16xbf16>
    %cst_110 = arith.constant dense<0.000000e+00> : vector<16x128xf32>
    %299 = tpu.matmul %298, %285, %cst_110 {dimension_numbers = #tpu.dot_dimension_numbers<[1], [0], [0], [1], [0, 0, 1, 1], [], []>} : vector<16x16xbf16>, vector<16x128xbf16>, vector<16x128xf32> -> vector<16x128xf32>
    %300 = arith.truncf %299 : vector<16x128xf32> to vector<16x128xbf16>
    %c1_111 = arith.constant 1 : index
    %c128_112 = arith.constant 128 : index
    %c0_113 = arith.constant 0 : index
    %301 = vector.load %arg4[%c1_111, %c128_112, %c0_113] : memref<2x640x32xbf16, #tpu.memory_space<vmem>>, vector<1x128x32xbf16>
    %302 = vector.shape_cast %301 : vector<1x128x32xbf16> to vector<128x32xbf16>
    %cst_114 = arith.constant dense<0.000000e+00> : vector<16x32xf32>
    %303 = tpu.matmul %300, %302, %cst_114 {dimension_numbers = #tpu.dot_dimension_numbers<[1], [0], [0], [1], [0, 0, 1, 1], [], []>} : vector<16x128xbf16>, vector<128x32xbf16>, vector<16x32xf32> -> vector<16x32xf32>
    %304 = arith.addf %279, %303 : vector<16x32xf32>
    %305 = vector.extract_strided_slice %253 {offsets = [0, 256], sizes = [16, 128], strides = [1, 1]} : vector<16x1536xf32> to vector<16x128xf32>
    %306 = arith.truncf %305 : vector<16x128xf32> to vector<16x128xbf16>
    %307 = vector.extract_strided_slice %253 {offsets = [0, 768], sizes = [16, 128], strides = [1, 1]} : vector<16x1536xf32> to vector<16x128xf32>
    %308 = arith.truncf %307 : vector<16x128xf32> to vector<16x128xbf16>
    %309 = vector.extract_strided_slice %253 {offsets = [0, 1280], sizes = [16, 128], strides = [1, 1]} : vector<16x1536xf32> to vector<16x128xf32>
    %310 = arith.truncf %309 : vector<16x128xf32> to vector<16x128xbf16>
    %cst_115 = arith.constant dense<0.000000e+00> : vector<16x16xf32>
    %311 = tpu.matmul %306, %308, %cst_115 {dimension_numbers = #tpu.dot_dimension_numbers<[1], [1], [0], [0], [0, 0, 1, 0], [], []>} : vector<16x128xbf16>, vector<16x128xbf16>, vector<16x16xf32> -> vector<16x16xf32>
    %312 = arith.addf %311, %53 : vector<16x16xf32>
    %cst_116 = arith.constant dense<0xFF800000> : vector<16xf32>
    %313 = vector.multi_reduction <maximumf>, %312, %cst_116 [1] : vector<16x16xf32> to vector<16xf32>
    %314 = vector.shape_cast %313 : vector<16xf32> to vector<16x1xf32>
    %315 = vector.broadcast %314 : vector<16x1xf32> to vector<16x16xf32>
    %316 = arith.subf %312, %315 : vector<16x16xf32>
    %317 = math.exp %316 : vector<16x16xf32>
    %cst_117 = arith.constant dense<0.000000e+00> : vector<16xf32>
    %318 = vector.multi_reduction <add>, %317, %cst_117 [1] : vector<16x16xf32> to vector<16xf32>
    %319 = vector.shape_cast %318 : vector<16xf32> to vector<16x1xf32>
    %320 = tpu.reciprocal %319 {approx = true} : vector<16x1xf32> -> vector<16x1xf32>
    %321 = vector.broadcast %320 : vector<16x1xf32> to vector<16x16xf32>
    %322 = arith.mulf %317, %321 : vector<16x16xf32>
    %323 = arith.truncf %322 : vector<16x16xf32> to vector<16x16xbf16>
    %cst_118 = arith.constant dense<0.000000e+00> : vector<16x128xf32>
    %324 = tpu.matmul %323, %310, %cst_118 {dimension_numbers = #tpu.dot_dimension_numbers<[1], [0], [0], [1], [0, 0, 1, 1], [], []>} : vector<16x16xbf16>, vector<16x128xbf16>, vector<16x128xf32> -> vector<16x128xf32>
    %325 = arith.truncf %324 : vector<16x128xf32> to vector<16x128xbf16>
    %c1_119 = arith.constant 1 : index
    %c256_120 = arith.constant 256 : index
    %c0_121 = arith.constant 0 : index
    %326 = vector.load %arg4[%c1_119, %c256_120, %c0_121] : memref<2x640x32xbf16, #tpu.memory_space<vmem>>, vector<1x128x32xbf16>
    %327 = vector.shape_cast %326 : vector<1x128x32xbf16> to vector<128x32xbf16>
    %cst_122 = arith.constant dense<0.000000e+00> : vector<16x32xf32>
    %328 = tpu.matmul %325, %327, %cst_122 {dimension_numbers = #tpu.dot_dimension_numbers<[1], [0], [0], [1], [0, 0, 1, 1], [], []>} : vector<16x128xbf16>, vector<128x32xbf16>, vector<16x32xf32> -> vector<16x32xf32>
    %329 = arith.addf %304, %328 : vector<16x32xf32>
    %330 = vector.extract_strided_slice %253 {offsets = [0, 384], sizes = [16, 128], strides = [1, 1]} : vector<16x1536xf32> to vector<16x128xf32>
    %331 = arith.truncf %330 : vector<16x128xf32> to vector<16x128xbf16>
    %332 = vector.extract_strided_slice %253 {offsets = [0, 896], sizes = [16, 128], strides = [1, 1]} : vector<16x1536xf32> to vector<16x128xf32>
    %333 = arith.truncf %332 : vector<16x128xf32> to vector<16x128xbf16>
    %334 = vector.extract_strided_slice %253 {offsets = [0, 1408], sizes = [16, 128], strides = [1, 1]} : vector<16x1536xf32> to vector<16x128xf32>
    %335 = arith.truncf %334 : vector<16x128xf32> to vector<16x128xbf16>
    %cst_123 = arith.constant dense<0.000000e+00> : vector<16x16xf32>
    %336 = tpu.matmul %331, %333, %cst_123 {dimension_numbers = #tpu.dot_dimension_numbers<[1], [1], [0], [0], [0, 0, 1, 0], [], []>} : vector<16x128xbf16>, vector<16x128xbf16>, vector<16x16xf32> -> vector<16x16xf32>
    %337 = arith.addf %336, %53 : vector<16x16xf32>
    %cst_124 = arith.constant dense<0xFF800000> : vector<16xf32>
    %338 = vector.multi_reduction <maximumf>, %337, %cst_124 [1] : vector<16x16xf32> to vector<16xf32>
    %339 = vector.shape_cast %338 : vector<16xf32> to vector<16x1xf32>
    %340 = vector.broadcast %339 : vector<16x1xf32> to vector<16x16xf32>
    %341 = arith.subf %337, %340 : vector<16x16xf32>
    %342 = math.exp %341 : vector<16x16xf32>
    %cst_125 = arith.constant dense<0.000000e+00> : vector<16xf32>
    %343 = vector.multi_reduction <add>, %342, %cst_125 [1] : vector<16x16xf32> to vector<16xf32>
    %344 = vector.shape_cast %343 : vector<16xf32> to vector<16x1xf32>
    %345 = tpu.reciprocal %344 {approx = true} : vector<16x1xf32> -> vector<16x1xf32>
    %346 = vector.broadcast %345 : vector<16x1xf32> to vector<16x16xf32>
    %347 = arith.mulf %342, %346 : vector<16x16xf32>
    %348 = arith.truncf %347 : vector<16x16xf32> to vector<16x16xbf16>
    %cst_126 = arith.constant dense<0.000000e+00> : vector<16x128xf32>
    %349 = tpu.matmul %348, %335, %cst_126 {dimension_numbers = #tpu.dot_dimension_numbers<[1], [0], [0], [1], [0, 0, 1, 1], [], []>} : vector<16x16xbf16>, vector<16x128xbf16>, vector<16x128xf32> -> vector<16x128xf32>
    %350 = arith.truncf %349 : vector<16x128xf32> to vector<16x128xbf16>
    %c1_127 = arith.constant 1 : index
    %c384_128 = arith.constant 384 : index
    %c0_129 = arith.constant 0 : index
    %351 = vector.load %arg4[%c1_127, %c384_128, %c0_129] : memref<2x640x32xbf16, #tpu.memory_space<vmem>>, vector<1x128x32xbf16>
    %352 = vector.shape_cast %351 : vector<1x128x32xbf16> to vector<128x32xbf16>
    %cst_130 = arith.constant dense<0.000000e+00> : vector<16x32xf32>
    %353 = tpu.matmul %350, %352, %cst_130 {dimension_numbers = #tpu.dot_dimension_numbers<[1], [0], [0], [1], [0, 0, 1, 1], [], []>} : vector<16x128xbf16>, vector<128x32xbf16>, vector<16x32xf32> -> vector<16x32xf32>
    %354 = arith.addf %329, %353 : vector<16x32xf32>
    %c1_131 = arith.constant 1 : index
    %c1_132 = arith.constant 1 : index
    %c0_133 = arith.constant 0 : index
    %355 = vector.load %arg5[%c1_131, %c1_132, %c0_133] : memref<2x7x1664xf32, #tpu.memory_space<vmem>>, vector<1x1x32xf32>
    %356 = vector.shape_cast %355 : vector<1x1x32xf32> to vector<1x32xf32>
    %357 = vector.broadcast %356 : vector<1x32xf32> to vector<16x32xf32>
    %358 = arith.addf %354, %357 : vector<16x32xf32>
    %359 = arith.addf %358, %245 : vector<16x32xf32>
    %c1_134 = arith.constant 1 : index
    %c3_135 = arith.constant 3 : index
    %c0_136 = arith.constant 0 : index
    %360 = vector.load %arg5[%c1_134, %c3_135, %c0_136] : memref<2x7x1664xf32, #tpu.memory_space<vmem>>, vector<1x1x32xf32>
    %361 = vector.shape_cast %360 : vector<1x1x32xf32> to vector<1x32xf32>
    %c1_137 = arith.constant 1 : index
    %c4_138 = arith.constant 4 : index
    %c0_139 = arith.constant 0 : index
    %362 = vector.load %arg5[%c1_137, %c4_138, %c0_139] : memref<2x7x1664xf32, #tpu.memory_space<vmem>>, vector<1x1x32xf32>
    %363 = vector.shape_cast %362 : vector<1x1x32xf32> to vector<1x32xf32>
    %cst_140 = arith.constant dense<0.000000e+00> : vector<16xf32>
    %364 = vector.multi_reduction <add>, %359, %cst_140 [1] : vector<16x32xf32> to vector<16xf32>
    %365 = vector.shape_cast %364 : vector<16xf32> to vector<16x1xf32>
    %cst_141 = arith.constant 3.200000e+01 : f32
    %366 = vector.broadcast %cst_141 : f32 to vector<16x1xf32>
    %367 = arith.divf %365, %366 : vector<16x1xf32>
    %368 = vector.broadcast %367 : vector<16x1xf32> to vector<16x32xf32>
    %369 = arith.subf %359, %368 : vector<16x32xf32>
    %370 = arith.mulf %369, %369 : vector<16x32xf32>
    %cst_142 = arith.constant dense<0.000000e+00> : vector<16xf32>
    %371 = vector.multi_reduction <add>, %370, %cst_142 [1] : vector<16x32xf32> to vector<16xf32>
    %372 = vector.shape_cast %371 : vector<16xf32> to vector<16x1xf32>
    %cst_143 = arith.constant 3.200000e+01 : f32
    %373 = vector.broadcast %cst_143 : f32 to vector<16x1xf32>
    %374 = arith.divf %372, %373 : vector<16x1xf32>
    %cst_144 = arith.constant 9.99999996E-13 : f32
    %375 = vector.broadcast %cst_144 : f32 to vector<16x1xf32>
    %376 = arith.addf %374, %375 : vector<16x1xf32>
    %377 = math.rsqrt %376 : vector<16x1xf32>
    %378 = vector.broadcast %377 : vector<16x1xf32> to vector<16x32xf32>
    %379 = arith.mulf %369, %378 : vector<16x32xf32>
    %380 = vector.broadcast %361 : vector<1x32xf32> to vector<16x32xf32>
    %381 = arith.mulf %379, %380 : vector<16x32xf32>
    %382 = vector.broadcast %363 : vector<1x32xf32> to vector<16x32xf32>
    %383 = arith.addf %381, %382 : vector<16x32xf32>
    %384 = arith.truncf %383 : vector<16x32xf32> to vector<16x32xbf16>
    %c1_145 = arith.constant 1 : index
    %c0_146 = arith.constant 0 : index
    %c1536_147 = arith.constant 1536 : index
    %385 = vector.load %arg3[%c1_145, %c0_146, %c1536_147] : memref<2x32x1664xbf16, #tpu.memory_space<vmem>>, vector<1x32x128xbf16>
    %386 = vector.shape_cast %385 : vector<1x32x128xbf16> to vector<32x128xbf16>
    %cst_148 = arith.constant dense<0.000000e+00> : vector<16x128xf32>
    %387 = tpu.matmul %384, %386, %cst_148 {dimension_numbers = #tpu.dot_dimension_numbers<[1], [0], [0], [1], [0, 0, 1, 1], [], []>} : vector<16x32xbf16>, vector<32x128xbf16>, vector<16x128xf32> -> vector<16x128xf32>
    %c1_149 = arith.constant 1 : index
    %c0_150 = arith.constant 0 : index
    %c1536_151 = arith.constant 1536 : index
    %388 = vector.load %arg5[%c1_149, %c0_150, %c1536_151] : memref<2x7x1664xf32, #tpu.memory_space<vmem>>, vector<1x1x128xf32>
    %389 = vector.shape_cast %388 : vector<1x1x128xf32> to vector<1x128xf32>
    %390 = vector.broadcast %389 : vector<1x128xf32> to vector<16x128xf32>
    %391 = arith.addf %387, %390 : vector<16x128xf32>
    %cst_152 = arith.constant 5.000000e-01 : f32
    %392 = vector.broadcast %cst_152 : f32 to vector<16x128xf32>
    %393 = arith.mulf %392, %391 : vector<16x128xf32>
    %cst_153 = arith.constant 4.471500e-02 : f32
    %394 = vector.broadcast %cst_153 : f32 to vector<16x128xf32>
    %395 = arith.mulf %394, %391 : vector<16x128xf32>
    %396 = arith.mulf %395, %391 : vector<16x128xf32>
    %397 = arith.mulf %396, %391 : vector<16x128xf32>
    %398 = arith.addf %391, %397 : vector<16x128xf32>
    %cst_154 = arith.constant 0.797884583 : f32
    %399 = vector.broadcast %cst_154 : f32 to vector<16x128xf32>
    %400 = arith.mulf %399, %398 : vector<16x128xf32>
    %401 = math.tanh %400 : vector<16x128xf32>
    %cst_155 = arith.constant 1.000000e+00 : f32
    %402 = vector.broadcast %cst_155 : f32 to vector<16x128xf32>
    %403 = arith.addf %402, %401 : vector<16x128xf32>
    %404 = arith.mulf %393, %403 : vector<16x128xf32>
    %405 = arith.truncf %404 : vector<16x128xf32> to vector<16x128xbf16>
    %c1_156 = arith.constant 1 : index
    %c512_157 = arith.constant 512 : index
    %c0_158 = arith.constant 0 : index
    %406 = vector.load %arg4[%c1_156, %c512_157, %c0_158] : memref<2x640x32xbf16, #tpu.memory_space<vmem>>, vector<1x128x32xbf16>
    %407 = vector.shape_cast %406 : vector<1x128x32xbf16> to vector<128x32xbf16>
    %cst_159 = arith.constant dense<0.000000e+00> : vector<16x32xf32>
    %408 = tpu.matmul %405, %407, %cst_159 {dimension_numbers = #tpu.dot_dimension_numbers<[1], [0], [0], [1], [0, 0, 1, 1], [], []>} : vector<16x128xbf16>, vector<128x32xbf16>, vector<16x32xf32> -> vector<16x32xf32>
    %c1_160 = arith.constant 1 : index
    %c2_161 = arith.constant 2 : index
    %c0_162 = arith.constant 0 : index
    %409 = vector.load %arg5[%c1_160, %c2_161, %c0_162] : memref<2x7x1664xf32, #tpu.memory_space<vmem>>, vector<1x1x32xf32>
    %410 = vector.shape_cast %409 : vector<1x1x32xf32> to vector<1x32xf32>
    %411 = vector.broadcast %410 : vector<1x32xf32> to vector<16x32xf32>
    %412 = arith.addf %408, %411 : vector<16x32xf32>
    %413 = arith.addf %412, %383 : vector<16x32xf32>
    %c1_163 = arith.constant 1 : index
    %c5_164 = arith.constant 5 : index
    %c0_165 = arith.constant 0 : index
    %414 = vector.load %arg5[%c1_163, %c5_164, %c0_165] : memref<2x7x1664xf32, #tpu.memory_space<vmem>>, vector<1x1x32xf32>
    %415 = vector.shape_cast %414 : vector<1x1x32xf32> to vector<1x32xf32>
    %c1_166 = arith.constant 1 : index
    %c6_167 = arith.constant 6 : index
    %c0_168 = arith.constant 0 : index
    %416 = vector.load %arg5[%c1_166, %c6_167, %c0_168] : memref<2x7x1664xf32, #tpu.memory_space<vmem>>, vector<1x1x32xf32>
    %417 = vector.shape_cast %416 : vector<1x1x32xf32> to vector<1x32xf32>
    %cst_169 = arith.constant dense<0.000000e+00> : vector<16xf32>
    %418 = vector.multi_reduction <add>, %413, %cst_169 [1] : vector<16x32xf32> to vector<16xf32>
    %419 = vector.shape_cast %418 : vector<16xf32> to vector<16x1xf32>
    %cst_170 = arith.constant 3.200000e+01 : f32
    %420 = vector.broadcast %cst_170 : f32 to vector<16x1xf32>
    %421 = arith.divf %419, %420 : vector<16x1xf32>
    %422 = vector.broadcast %421 : vector<16x1xf32> to vector<16x32xf32>
    %423 = arith.subf %413, %422 : vector<16x32xf32>
    %424 = arith.mulf %423, %423 : vector<16x32xf32>
    %cst_171 = arith.constant dense<0.000000e+00> : vector<16xf32>
    %425 = vector.multi_reduction <add>, %424, %cst_171 [1] : vector<16x32xf32> to vector<16xf32>
    %426 = vector.shape_cast %425 : vector<16xf32> to vector<16x1xf32>
    %cst_172 = arith.constant 3.200000e+01 : f32
    %427 = vector.broadcast %cst_172 : f32 to vector<16x1xf32>
    %428 = arith.divf %426, %427 : vector<16x1xf32>
    %cst_173 = arith.constant 9.99999996E-13 : f32
    %429 = vector.broadcast %cst_173 : f32 to vector<16x1xf32>
    %430 = arith.addf %428, %429 : vector<16x1xf32>
    %431 = math.rsqrt %430 : vector<16x1xf32>
    %432 = vector.broadcast %431 : vector<16x1xf32> to vector<16x32xf32>
    %433 = arith.mulf %423, %432 : vector<16x32xf32>
    %434 = vector.broadcast %415 : vector<1x32xf32> to vector<16x32xf32>
    %435 = arith.mulf %433, %434 : vector<16x32xf32>
    %436 = vector.broadcast %417 : vector<1x32xf32> to vector<16x32xf32>
    %437 = arith.addf %435, %436 : vector<16x32xf32>
    %438 = arith.truncf %437 : vector<16x32xf32> to vector<16x32xbf16>
    %c0_174 = arith.constant 0 : index
    %c0_175 = arith.constant 0 : index
    %439 = vector.load %arg6[%c0_174, %c0_175] : memref<160x128xbf16, #tpu.memory_space<vmem>>, vector<32x128xbf16>
    %cst_176 = arith.constant dense<0.000000e+00> : vector<16x128xf32>
    %440 = tpu.matmul %438, %439, %cst_176 {dimension_numbers = #tpu.dot_dimension_numbers<[1], [0], [0], [1], [0, 0, 1, 1], [], []>} : vector<16x32xbf16>, vector<32x128xbf16>, vector<16x128xf32> -> vector<16x128xf32>
    %c0_177 = arith.constant 0 : index
    %c0_178 = arith.constant 0 : index
    %441 = vector.load %arg7[%c0_177, %c0_178] : memref<2x128xf32, #tpu.memory_space<vmem>>, vector<1x128xf32>
    %442 = vector.broadcast %441 : vector<1x128xf32> to vector<16x128xf32>
    %443 = arith.addf %440, %442 : vector<16x128xf32>
    %cst_179 = arith.constant 0.000000e+00 : f32
    %444 = vector.broadcast %cst_179 : f32 to vector<16x128xf32>
    %445 = arith.maximumf %443, %444 : vector<16x128xf32>
    %446 = arith.truncf %445 : vector<16x128xf32> to vector<16x128xbf16>
    %c32 = arith.constant 32 : index
    %c0_180 = arith.constant 0 : index
    %447 = vector.load %arg6[%c32, %c0_180] : memref<160x128xbf16, #tpu.memory_space<vmem>>, vector<128x128xbf16>
    %cst_181 = arith.constant dense<0.000000e+00> : vector<16x128xf32>
    %448 = tpu.matmul %446, %447, %cst_181 {dimension_numbers = #tpu.dot_dimension_numbers<[1], [0], [0], [1], [0, 0, 1, 1], [], []>} : vector<16x128xbf16>, vector<128x128xbf16>, vector<16x128xf32> -> vector<16x128xf32>
    %c1_182 = arith.constant 1 : index
    %c0_183 = arith.constant 0 : index
    %449 = vector.load %arg7[%c1_182, %c0_183] : memref<2x128xf32, #tpu.memory_space<vmem>>, vector<1x128xf32>
    %450 = vector.broadcast %449 : vector<1x128xf32> to vector<16x128xf32>
    %451 = arith.addf %448, %450 : vector<16x128xf32>
    %c0_184 = arith.constant 0 : index
    %c0_185 = arith.constant 0 : index
    %452 = vector.load %arg8[%c0_184, %c0_185] : memref<16x128xf32, #tpu.memory_space<vmem>>, vector<16x128xf32>
    tpu.vector_store %arg8[%c0_184, %c0_185], %451 {strides = array<i32>} : memref<16x128xf32, #tpu.memory_space<vmem>>, vector<16x128xf32>,
    return
  }
}

</mosaic_0001>

<llo_original>
// kernel: bert_attention_sequence_embedding.1
$region0: #{bert_attention_sequence_embedding.1}
  #allocation0 [shape = 'u32[]', space=smem, size = 0x4, offset = 0x4, fixed_abs, tag = 'smem constant byte address 0x4 - core index']
  #allocation1 [shape = 'u32[144,128]{1,0:T(1,128)}', space=vmem, size = 0x12000, scoped, tag = 'internal scratch']
  %s0 = inlined_call_operand.vmem [shape: s32[16,3], index: 0, kind: input, shape index: {}]
  %s1 = inlined_call_operand.vmem [shape: f32[2,16], index: 1, kind: input, shape index: {}]
  %s2 = inlined_call_operand.vmem [shape: f32[147,32], index: 2, kind: input, shape index: {}]
  %s3 = inlined_call_operand.vmem [shape: bf16[2,32,1664], index: 3, kind: input, shape index: {}]
  %s4 = inlined_call_operand.vmem [shape: bf16[2,640,32], index: 4, kind: input, shape index: {}]
  %s5 = inlined_call_operand.vmem [shape: f32[2,7,1664], index: 5, kind: input, shape index: {}]
  %s6 = inlined_call_operand.vmem [shape: bf16[160,128], index: 6, kind: input, shape index: {}]
  %s7 = inlined_call_operand.vmem [shape: f32[2,128], index: 7, kind: input, shape index: {}]
  %s8 = inlined_call_operand.vmem [shape: f32[16,128], index: 8, kind: output, shape index: {}]
  %s9 = sld [smem:[#allocation0]]
  $region42: #{bert_attention_sequence_embedding.1} parent=0
    _
  %s11 = ssub.s32 1, %s9
  %s12 = scalar_select 0, %s11, %s9
  // Predicated region
  $region2: #{bert_attention_sequence_embedding.1} parent=0 // pred_check
    _
  $region3: #{bert_attention_sequence_embedding.1} parent=0 // pred_check_branch
    %14 = sbr.rel (0) target = $region5
  $region4: #{bert_attention_sequence_embedding.1} parent=0 // pred_region
    _
  $region5: #{bert_attention_sequence_embedding.1} parent=0 // pred_fallthru
    _
  // Predicated region
  $region6: #{bert_attention_sequence_embedding.1} parent=0 // pred_check
    _
  $region7: #{bert_attention_sequence_embedding.1} parent=0 // pred_check_branch
    %16 = sbr.rel (0) target = $region9
  $region8: #{bert_attention_sequence_embedding.1} parent=0 // pred_region
    _
  $region9: #{bert_attention_sequence_embedding.1} parent=0 // pred_fallthru
    _
  // Predicated region
  $region10: #{bert_attention_sequence_embedding.1} parent=0 // pred_check
    _
  $region11: #{bert_attention_sequence_embedding.1} parent=0 // pred_check_branch
    %18 = sbr.rel (0) target = $region13
  $region12: #{bert_attention_sequence_embedding.1} parent=0 // pred_region
    _
  $region13: #{bert_attention_sequence_embedding.1} parent=0 // pred_fallthru
    _
  // Predicated region
  $region14: #{bert_attention_sequence_embedding.1} parent=0 // pred_check
    _
  $region15: #{bert_attention_sequence_embedding.1} parent=0 // pred_check_branch
    %20 = sbr.rel (0) target = $region17
  $region16: #{bert_attention_sequence_embedding.1} parent=0 // pred_region
    _
  $region17: #{bert_attention_sequence_embedding.1} parent=0 // pred_fallthru
    _
  // Predicated region
  $region18: #{bert_attention_sequence_embedding.1} parent=0 // pred_check
    _
  $region19: #{bert_attention_sequence_embedding.1} parent=0 // pred_check_branch
    %22 = sbr.rel (0) target = $region21
  $region20: #{bert_attention_sequence_embedding.1} parent=0 // pred_region
    _
  $region21: #{bert_attention_sequence_embedding.1} parent=0 // pred_fallthru
    _
  // Predicated region
  $region22: #{bert_attention_sequence_embedding.1} parent=0 // pred_check
    _
  $region23: #{bert_attention_sequence_embedding.1} parent=0 // pred_check_branch
    %24 = sbr.rel (0) target = $region25
  $region24: #{bert_attention_sequence_embedding.1} parent=0 // pred_region
    _
  $region25: #{bert_attention_sequence_embedding.1} parent=0 // pred_fallthru
    _
  // Predicated region
  $region26: #{bert_attention_sequence_embedding.1} parent=0 // pred_check
    _
  $region27: #{bert_attention_sequence_embedding.1} parent=0 // pred_check_branch
    %26 = sbr.rel (0) target = $region29
  $region28: #{bert_attention_sequence_embedding.1} parent=0 // pred_region
    _
  $region29: #{bert_attention_sequence_embedding.1} parent=0 // pred_fallthru
    _
  // Predicated region
  $region30: #{bert_attention_sequence_embedding.1} parent=0 // pred_check
    _
  $region31: #{bert_attention_sequence_embedding.1} parent=0 // pred_check_branch
    %28 = sbr.rel (0) target = $region33
  $region32: #{bert_attention_sequence_embedding.1} parent=0 // pred_region
    _
  $region33: #{bert_attention_sequence_embedding.1} parent=0 // pred_fallthru
    _
  %v30 = vld [vmem:[%s0] sm:$0xff]
  %v31 = vld [vmem:[%s0 + $0x8] sm:$0xff]
  %v32 = vcvt.s32.f32 %v30
  %v33 = vcvt.s32.f32 %v31
  %v34 = vlaneseq
  %v35 = vand.u32 %v34, 127
  %36 = vset.pattern.permute.xlu0 0
  %37 = vperm.xlu0 %36, %v30
  %v38 = vpop.permute.xlu0 %37
  %39 = vset.pattern.permute.xlu0 0
  %40 = vperm.xlu0 %39, %v31
  %v41 = vpop.permute.xlu0 %40
  %vm42 = vcmp.eq.s32.totalorder %v38, %v35
  %vm43 = vcmp.eq.s32.totalorder %v41, %v35
  %v44 = vsel %vm42, 1, 0
  %v45 = vsel %vm43, 1, 0
  %v46 = vcvt.s32.f32 %v44
  %v47 = vcvt.s32.f32 %v45
  %48 = vset.pattern.permute.xlu0 1
  %49 = vperm.xlu0 %48, %v30
  %v50 = vpop.permute.xlu0 %49
  %51 = vset.pattern.permute.xlu0 1
  %52 = vperm.xlu0 %51, %v31
  %v53 = vpop.permute.xlu0 %52
  %vm54 = vcmp.eq.s32.totalorder %v50, %v35
  %vm55 = vcmp.eq.s32.totalorder %v53, %v35
  %v56 = vsel %vm54, 1, 0
  %v57 = vsel %vm55, 1, 0
  %v58 = vcvt.s32.f32 %v56
  %v59 = vcvt.s32.f32 %v57
  %v60 = vld [vmem:[%s2] sm:$0xff]
  %v61 = vld [vmem:[%s2 + $0x8] sm:$0xff]
  %v62 = vld [vmem:[%s2 + $0x10] sm:$0xff]
  %v63 = vld [vmem:[%s2 + $0x18] sm:$0xff]
  %v64 = vld [vmem:[%s2 + $0x20] sm:$0xff]
  %v65 = vld [vmem:[%s2 + $0x28] sm:$0xff]
  %v66 = vld [vmem:[%s2 + $0x30] sm:$0xff]
  %v67 = vld [vmem:[%s2 + $0x38] sm:$0xff]
  %v68 = vld [vmem:[%s2 + $0x40] sm:$0xff]
  %v69 = vld [vmem:[%s2 + $0x48] sm:$0xff]
  %v70 = vld [vmem:[%s2 + $0x50] sm:$0xff]
  %v71 = vld [vmem:[%s2 + $0x58] sm:$0xff]
  %v72 = vld [vmem:[%s2 + $0x60] sm:$0xff]
  %v73 = vld [vmem:[%s2 + $0x68] sm:$0xff]
  %v74 = vld [vmem:[%s2 + $0x70] sm:$0xff]
  %v75 = vld [vmem:[%s2 + $0x78] sm:$0xff]
  %v76 = vld [vmem:[%s2 + $0x80] sm:$0xff]
  %v77 = vld [vmem:[%s2 + $0x88] sm:$0xff]
  %vm78 = vcmask 130048
  %v80 = vsel %vm78, %v58, 0
  %v83 = vsel %vm78, %v59, 0
  %85 = vmatprep.subr.mxu0 0.0
  %86 = vmatpush1.msra.mxu0 %v76
  %87 = vmatprep.subr.mxu0 0.0
  %88 = vmatpush1.msra.mxu0 %v77
  %89 = vmatprep.subr.mxu0 0.0
  %90 = vmatpush1.msra.mxu0 0.0
  %91 = vmatprep.subr.mxu0 0.0
  %92 = vmatpush1.msra.mxu0 0.0
  %93 = vmatprep.subr.mxu0 0.0
  %94 = vmatpush1.msra.mxu0 0.0
  %95 = vmatprep.subr.mxu0 0.0
  %96 = vmatpush1.msra.mxu0 0.0
  %97 = vmatprep.subr.mxu0 0.0
  %98 = vmatpush1.msra.mxu0 0.0
  %99 = vmatprep.subr.mxu0 0.0
  %100 = vmatpush1.msra.mxu0 0.0
  %101 = vmatprep.subr.mxu0 0.0
  %102 = vmatpush1.msra.mxu0 0.0
  %103 = vmatprep.subr.mxu0 0.0
  %104 = vmatpush1.msra.mxu0 0.0
  %105 = vmatprep.subr.mxu0 0.0
  %106 = vmatpush1.msra.mxu0 0.0
  %107 = vmatprep.subr.mxu0 0.0
  %108 = vmatpush1.msra.mxu0 0.0
  %109 = vmatprep.subr.mxu0 0.0
  %110 = vmatpush1.msra.mxu0 0.0
  %111 = vmatprep.subr.mxu0 0.0
  %112 = vmatpush1.msra.mxu0 0.0
  %113 = vmatprep.subr.mxu0 0.0
  %114 = vmatpush1.msra.mxu0 0.0
  %115 = vmatprep.subr.mxu0 0.0
  %116 = vmatpush1.msra.mxu0 0.0
  %117 = vmatprep.subr.mxu0 0.0
  %118 = vmatpush1.msra.mxu0 0.0
  %119 = vmatprep.subr.mxu0 0.0
  %120 = vmatpush1.msra.mxu0 0.0
  %121 = vmatprep.subr.mxu0 0.0
  %122 = vmatpush1.msra.mxu0 0.0
  %123 = vmatprep.subr.mxu0 0.0
  %124 = vmatpush1.msra.mxu0 0.0
  %125 = vmatprep.subr.mxu0 0.0
  %126 = vmatpush1.msra.mxu0 0.0
  %127 = vmatprep.subr.mxu0 0.0
  %128 = vmatpush1.msra.mxu0 0.0
  %129 = vmatprep.subr.mxu0 0.0
  %130 = vmatpush1.msra.mxu0 0.0
  %131 = vmatprep.subr.mxu0 0.0
  %132 = vmatpush1.msra.mxu0 0.0
  %133 = vmatprep.subr.mxu0 0.0
  %134 = vmatpush1.msra.mxu0 0.0
  %135 = vmatprep.subr.mxu0 0.0
  %136 = vmatpush1.msra.mxu0 0.0
  %137 = vmatprep.subr.mxu0 0.0
  %138 = vmatpush1.msra.mxu0 0.0
  %139 = vmatprep.subr.mxu0 0.0
  %140 = vmatpush1.msra.mxu0 0.0
  %141 = vmatprep.subr.mxu0 0.0
  %142 = vmatpush1.msra.mxu0 0.0
  %143 = vmatprep.subr.mxu0 0.0
  %144 = vmatpush1.msra.mxu0 0.0
  %145 = vmatprep.subr.mxu0 0.0
  %146 = vmatpush1.msra.mxu0 0.0
  %147 = vmatprep.subr.mxu0 0.0
  %148 = vmatpush1.msra.mxu0 0.0
  %149 = vmatprep.mubr.f32.mxu0 0.0
  %150 = vmatmul.mubr.f32.gmra.mrb[0].mxu0 %v80
  %v151 = vpop.f32.mrb[0].mxu0
  %v152 = vadd.f32 0.0, %v151
  %v153 = vpop.f32.mrb[0].mxu0
  %154 = vmatprep.mubr.f32.mxu0 0.0
  %155 = vmatmul.mubr.f32.gmra.mrb[0].mxu0 %v83
  %v156 = vpop.f32.mrb[0].mxu0
  %v157 = vadd.f32 0.0, %v156
  %v158 = vpop.f32.mrb[0].mxu0
  %159 = vdwg.mxu0
  %160 = vmatprep.subr.mxu0 0.0
  %161 = vmatpush1.msra.mxu0 %v60
  %162 = vmatprep.subr.mxu0 0.0
  %163 = vmatpush1.msra.mxu0 %v61
  %164 = vmatprep.subr.mxu0 0.0
  %165 = vmatpush1.msra.mxu0 %v62
  %166 = vmatprep.subr.mxu0 0.0
  %167 = vmatpush1.msra.mxu0 %v63
  %168 = vmatprep.subr.mxu0 0.0
  %169 = vmatpush1.msra.mxu0 %v64
  %170 = vmatprep.subr.mxu0 0.0
  %171 = vmatpush1.msra.mxu0 %v65
  %172 = vmatprep.subr.mxu0 0.0
  %173 = vmatpush1.msra.mxu0 %v66
  %174 = vmatprep.subr.mxu0 0.0
  %175 = vmatpush1.msra.mxu0 %v67
  %176 = vmatprep.subr.mxu0 0.0
  %177 = vmatpush1.msra.mxu0 %v68
  %178 = vmatprep.subr.mxu0 0.0
  %179 = vmatpush1.msra.mxu0 %v69
  %180 = vmatprep.subr.mxu0 0.0
  %181 = vmatpush1.msra.mxu0 %v70
  %182 = vmatprep.subr.mxu0 0.0
  %183 = vmatpush1.msra.mxu0 %v71
  %184 = vmatprep.subr.mxu0 0.0
  %185 = vmatpush1.msra.mxu0 %v72
  %186 = vmatprep.subr.mxu0 0.0
  %187 = vmatpush1.msra.mxu0 %v73
  %188 = vmatprep.subr.mxu0 0.0
  %189 = vmatpush1.msra.mxu0 %v74
  %190 = vmatprep.subr.mxu0 0.0
  %191 = vmatpush1.msra.mxu0 %v75
  %192 = vmatprep.subr.mxu0 0.0
  %193 = vmatpush1.msra.mxu0 0.0
  %194 = vmatprep.subr.mxu0 0.0
  %195 = vmatpush1.msra.mxu0 0.0
  %196 = vmatprep.subr.mxu0 0.0
  %197 = vmatpush1.msra.mxu0 0.0
  %198 = vmatprep.subr.mxu0 0.0
  %199 = vmatpush1.msra.mxu0 0.0
  %200 = vmatprep.subr.mxu0 0.0
  %201 = vmatpush1.msra.mxu0 0.0
  %202 = vmatprep.subr.mxu0 0.0
  %203 = vmatpush1.msra.mxu0 0.0
  %204 = vmatprep.subr.mxu0 0.0
  %205 = vmatpush1.msra.mxu0 0.0
  %206 = vmatprep.subr.mxu0 0.0
  %207 = vmatpush1.msra.mxu0 0.0
  %208 = vmatprep.subr.mxu0 0.0
  %209 = vmatpush1.msra.mxu0 0.0
  %210 = vmatprep.subr.mxu0 0.0
  %211 = vmatpush1.msra.mxu0 0.0
  %212 = vmatprep.subr.mxu0 0.0
  %213 = vmatpush1.msra.mxu0 0.0
  %214 = vmatprep.subr.mxu0 0.0
  %215 = vmatpush1.msra.mxu0 0.0
  %216 = vmatprep.subr.mxu0 0.0
  %217 = vmatpush1.msra.mxu0 0.0
  %218 = vmatprep.subr.mxu0 0.0
  %219 = vmatpush1.msra.mxu0 0.0
  %220 = vmatprep.subr.mxu0 0.0
  %221 = vmatpush1.msra.mxu0 0.0
  %222 = vmatprep.subr.mxu0 0.0
  %223 = vmatpush1.msra.mxu0 0.0
  %224 = vmatprep.mubr.f32.mxu0 0.0
  %225 = vmatmul.mubr.f32.gmra.mrb[0].mxu0 %v46
  %v226 = vpop.f32.mrb[0].mxu0
  %v227 = vadd.f32 %v152, %v226
  %v228 = vpop.f32.mrb[0].mxu0
  %229 = vmatprep.mubr.f32.mxu0 0.0
  %230 = vmatmul.mubr.f32.gmra.mrb[0].mxu0 %v47
  %v231 = vpop.f32.mrb[0].mxu0
  %v232 = vadd.f32 %v157, %v231
  %v233 = vpop.f32.mrb[0].mxu0
  %234 = vdwg.mxu0
  %v235 = vld [vmem:[%s2 + $0x90] sm:$0x1]
  %v236 = vlaneseq
  %v237 = vshrl.u32 %v236, 7
  %v238 = vsub.s32 0, %v237
  %v239 = vrot.slane %v235, %v238
  %v240 = vadd.f32 %v227, %v239
  %v241 = vadd.f32 %v232, %v239
  %v242 = vld [vmem:[%s2 + $0x91] sm:$0x1]
  %v243 = vld [vmem:[%s2 + $0x92] sm:$0x1]
  %vm244 = vcmask 261120
  %v245 = vsel %vm244, %v240, 0.0
  %246 = vadd.xlane.f32.xlu0 %v245
  %v247 = vpop.xlane.xlu0 %246
  %v248 = vsel %vm244, %v241, 0.0
  %249 = vadd.xlane.f32.xlu0 %v248
  %v250 = vpop.xlane.xlu0 %249
  %v251 = vrcp.pop 32.0
  %v252 = vmul.f32 %v247, %v251
  %v253 = vmul.f32 %v250, %v251
  %v254 = vsub.f32 %v240, %v252
  %v255 = vsub.f32 %v241, %v253
  %v256 = vmul.f32 %v254, %v254
  %v257 = vmul.f32 %v255, %v255
  %v258 = vsel %vm244, %v256, 0.0
  %259 = vadd.xlane.f32.xlu0 %v258
  %v260 = vpop.xlane.xlu0 %259
  %v261 = vsel %vm244, %v257, 0.0
  %262 = vadd.xlane.f32.xlu0 %v261
  %v263 = vpop.xlane.xlu0 %262
  %v264 = vmul.f32 %v260, %v251
  %v265 = vmul.f32 %v263, %v251
  %v266 = vadd.f32 %v264, 1e-12
  %v267 = vadd.f32 %v265, 1e-12
  %v268 = vrsqrt.pop %v266
  %v269 = vrsqrt.pop %v267
  %v270 = vmul.f32 %v254, %v268
  %v271 = vmul.f32 %v255, %v269
  %v272 = vlaneseq
  %v273 = vshrl.u32 %v272, 7
  %v274 = vsub.s32 0, %v273
  %v275 = vrot.slane %v242, %v274
  %v276 = vmul.f32 %v270, %v275
  %v277 = vmul.f32 %v271, %v275
  %v278 = vlaneseq
  %v279 = vshrl.u32 %v278, 7
  %v280 = vsub.s32 0, %v279
  %v281 = vrot.slane %v243, %v280
  %v282 = vadd.f32 %v276, %v281
  %v283 = vadd.f32 %v277, %v281
  %v284 = vld [vmem:[%s1 + $0x1] sm:$0x1]
  %286 = vset.pattern.permute.xlu0 2
  %287 = vperm.xlu0 %286, %v32
  %v288 = vpop.permute.xlu0 %287
  %291 = vset.pattern.permute.xlu0 2
  %292 = vperm.xlu0 %291, %v33
  %v293 = vpop.permute.xlu0 %292
  %v295 = vlaneseq
  %v296 = vshrl.u32 %v295, 7
  %v297 = vsub.s32 0, %v296
  %v298 = vrot.slane %v284, %v297
  %vm299 = vcmp.eq.f32.partialorder %v288, %v298
  %vm300 = vcmp.eq.f32.partialorder %v293, %v298
  %v301 = vld [vmem:[%s1] sm:$0x1]
  %v302 = vlaneseq
  %v303 = vshrl.u32 %v302, 7
  %v304 = vsub.s32 0, %v303
  %v305 = vrot.slane %v301, %v304
  %v306 = vsel %vm299, %v305, -10000.0
  %v307 = vsel %vm300, %v305, -10000.0
  %v308 = vpack.c.bf16 %v283, %v282
  %v309 = vld [vmem:[%s3] sm:$0xff]
  %v310 = vld [vmem:[%s3 + $0x8] sm:$0xff]
  %v311 = vld [vmem:[%s3 + $0x10] sm:$0xff]
  %v312 = vld [vmem:[%s3 + $0x18] sm:$0xff]
  %v313 = vld [vmem:[%s3 + $0x20] sm:$0xff]
  %v314 = vld [vmem:[%s3 + $0x28] sm:$0xff]
  %v315 = vld [vmem:[%s3 + $0x34] sm:$0xff]
  %v316 = vld [vmem:[%s3 + $0x3c] sm:$0xff]
  %v317 = vld [vmem:[%s3 + $0x44] sm:$0xff]
  %v318 = vld [vmem:[%s3 + $0x4c] sm:$0xff]
  %v319 = vld [vmem:[%s3 + $0x54] sm:$0xff]
  %v320 = vld [vmem:[%s3 + $0x5c] sm:$0xff]
  %v321 = vld [vmem:[%s3 + $0x68] sm:$0xff]
  %v322 = vld [vmem:[%s3 + $0x70] sm:$0xff]
  %v323 = vld [vmem:[%s3 + $0x78] sm:$0xff]
  %v324 = vld [vmem:[%s3 + $0x80] sm:$0xff]
  %v325 = vld [vmem:[%s3 + $0x88] sm:$0xff]
  %v326 = vld [vmem:[%s3 + $0x90] sm:$0xff]
  %v327 = vld [vmem:[%s3 + $0x9c] sm:$0xff]
  %v328 = vld [vmem:[%s3 + $0xa4] sm:$0xff]
  %v329 = vld [vmem:[%s3 + $0xac] sm:$0xff]
  %v330 = vld [vmem:[%s3 + $0xb4] sm:$0xff]
  %v331 = vld [vmem:[%s3 + $0xbc] sm:$0xff]
  %v332 = vld [vmem:[%s3 + $0xc4] sm:$0xff]
  %v333 = vld [vmem:[%s5] ss:$8 sm:$0xf]
  %v334 = vld [vmem:[%s5] ss:$8 sm:$0xf0]
  %v335 = vor.u32 %v333, %v334
  %s336 = scalar_lea.vmem %s5, 64
  %v337 = vld [vmem:[%s336] ss:$8 sm:$0xf]
  %v340 = vlaneseq
  %v341 = vshrl.u32 %v340, 7
  %v342 = vsub.s32 0, %v341
  %v343 = vrot.slane %v335, %v342
  %v344 = vlaneseq
  %v345 = vshrl.u32 %v344, 7
  %v346 = vsub.s32 1, %v345
  %v347 = vrot.slane %v335, %v346
  %v348 = vlaneseq
  %v349 = vshrl.u32 %v348, 7
  %v350 = vsub.s32 2, %v349
  %v351 = vrot.slane %v335, %v350
  %v352 = vlaneseq
  %v353 = vshrl.u32 %v352, 7
  %v354 = vsub.s32 3, %v353
  %v355 = vrot.slane %v335, %v354
  %v356 = vlaneseq
  %v357 = vshrl.u32 %v356, 7
  %v358 = vsub.s32 4, %v357
  %v359 = vrot.slane %v335, %v358
  %v360 = vlaneseq
  %v361 = vshrl.u32 %v360, 7
  %v362 = vsub.s32 5, %v361
  %v363 = vrot.slane %v335, %v362
  %v364 = vlaneseq
  %v365 = vshrl.u32 %v364, 7
  %v366 = vsub.s32 6, %v365
  %v367 = vrot.slane %v335, %v366
  %v368 = vlaneseq
  %v369 = vshrl.u32 %v368, 7
  %v370 = vsub.s32 7, %v369
  %v371 = vrot.slane %v335, %v370
  %v372 = vlaneseq
  %v373 = vshrl.u32 %v372, 7
  %v374 = vsub.s32 0, %v373
  %v375 = vrot.slane %v337, %v374
  %v376 = vlaneseq
  %v377 = vshrl.u32 %v376, 7
  %v378 = vsub.s32 1, %v377
  %v379 = vrot.slane %v337, %v378
  %v380 = vlaneseq
  %v381 = vshrl.u32 %v380, 7
  %v382 = vsub.s32 2, %v381
  %v383 = vrot.slane %v337, %v382
  %v384 = vlaneseq
  %v385 = vshrl.u32 %v384, 7
  %v386 = vsub.s32 3, %v385
  %v387 = vrot.slane %v337, %v386
  %v424 = vunpack.c.l.b16 %v309
  %v425 = vunpack.c.h.b16 %v309
  %v426 = vunpack.c.l.b16 %v310
  %v427 = vunpack.c.h.b16 %v310
  %v428 = vunpack.c.l.b16 %v311
  %v429 = vunpack.c.h.b16 %v311
  %v430 = vunpack.c.l.b16 %v312
  %v431 = vunpack.c.h.b16 %v312
  %v432 = vunpack.c.l.b16 %v313
  %v433 = vunpack.c.h.b16 %v313
  %v434 = vunpack.c.l.b16 %v314
  %v435 = vunpack.c.h.b16 %v314
  %v436 = vunpack.c.l.b16 %v315
  %v437 = vunpack.c.h.b16 %v315
  %v438 = vunpack.c.l.b16 %v316
  %v439 = vunpack.c.h.b16 %v316
  %v440 = vunpack.c.l.b16 %v317
  %v441 = vunpack.c.h.b16 %v317
  %v442 = vunpack.c.l.b16 %v318
  %v443 = vunpack.c.h.b16 %v318
  %v444 = vunpack.c.l.b16 %v319
  %v445 = vunpack.c.h.b16 %v319
  %v446 = vunpack.c.l.b16 %v320
  %v447 = vunpack.c.h.b16 %v320
  %v448 = vunpack.c.l.b16 %v321
  %v449 = vunpack.c.h.b16 %v321
  %v450 = vunpack.c.l.b16 %v322
  %v451 = vunpack.c.h.b16 %v322
  %v452 = vunpack.c.l.b16 %v323
  %v453 = vunpack.c.h.b16 %v323
  %v454 = vunpack.c.l.b16 %v324
  %v455 = vunpack.c.h.b16 %v324
  %v456 = vunpack.c.l.b16 %v325
  %v457 = vunpack.c.h.b16 %v325
  %v458 = vunpack.c.l.b16 %v326
  %v459 = vunpack.c.h.b16 %v326
  %v460 = vunpack.c.l.b16 %v327
  %v461 = vunpack.c.h.b16 %v327
  %v462 = vunpack.c.l.b16 %v328
  %v463 = vunpack.c.h.b16 %v328
  %v464 = vunpack.c.l.b16 %v329
  %v465 = vunpack.c.h.b16 %v329
  %v466 = vunpack.c.l.b16 %v330
  %v467 = vunpack.c.h.b16 %v330
  %v468 = vunpack.c.l.b16 %v331
  %v469 = vunpack.c.h.b16 %v331
  %v470 = vunpack.c.l.b16 %v332
  %v471 = vunpack.c.h.b16 %v332
  %v472 = vpack.c.b16 %v436, %v424
  %v473 = vpack.c.b16 %v437, %v425
  %v474 = vpack.c.b16 %v438, %v426
  %v475 = vpack.c.b16 %v439, %v427
  %v476 = vpack.c.b16 %v440, %v428
  %v477 = vpack.c.b16 %v441, %v429
  %v478 = vpack.c.b16 %v442, %v430
  %v479 = vpack.c.b16 %v443, %v431
  %v480 = vpack.c.b16 %v444, %v432
  %v481 = vpack.c.b16 %v445, %v433
  %v482 = vpack.c.b16 %v446, %v434
  %v483 = vpack.c.b16 %v447, %v435
  %v484 = vpack.c.b16 %v460, %v448
  %v485 = vpack.c.b16 %v461, %v449
  %v486 = vpack.c.b16 %v462, %v450
  %v487 = vpack.c.b16 %v463, %v451
  %v488 = vpack.c.b16 %v464, %v452
  %v489 = vpack.c.b16 %v465, %v453
  %v490 = vpack.c.b16 %v466, %v454
  %v491 = vpack.c.b16 %v467, %v455
  %v492 = vpack.c.b16 %v468, %v456
  %v493 = vpack.c.b16 %v469, %v457
  %v494 = vpack.c.b16 %v470, %v458
  %v495 = vpack.c.b16 %v471, %v459
  %v521 = vsel %vm244, %v308, 0
  %523 = vmatprep.subr.bf16.mxu0 %v473
  %524 = vmatpush1.bf16.msra.mxu0 %v472
  %525 = vmatprep.subr.bf16.mxu0 %v485
  %526 = vmatpush1.bf16.msra.mxu0 %v484
  %527 = vmatprep.subr.bf16.mxu0 0
  %528 = vmatpush1.bf16.msra.mxu0 0
  %529 = vmatprep.subr.bf16.mxu0 0
  %530 = vmatpush1.bf16.msra.mxu0 0
  %531 = vmatprep.subr.bf16.mxu0 0
  %532 = vmatpush1.bf16.msra.mxu0 0
  %533 = vmatprep.subr.bf16.mxu0 0
  %534 = vmatpush1.bf16.msra.mxu0 0
  %535 = vmatprep.subr.bf16.mxu0 0
  %536 = vmatpush1.bf16.msra.mxu0 0
  %537 = vmatprep.subr.bf16.mxu0 0
  %538 = vmatpush1.bf16.msra.mxu0 0
  %539 = vmatprep.subr.bf16.mxu0 0
  %540 = vmatpush1.bf16.msra.mxu0 0
  %541 = vmatprep.subr.bf16.mxu0 0
  %542 = vmatpush1.bf16.msra.mxu0 0
  %543 = vmatprep.subr.bf16.mxu0 0
  %544 = vmatpush1.bf16.msra.mxu0 0
  %545 = vmatprep.subr.bf16.mxu0 0
  %546 = vmatpush1.bf16.msra.mxu0 0
  %547 = vmatprep.subr.bf16.mxu0 0
  %548 = vmatpush1.bf16.msra.mxu0 0
  %549 = vmatprep.subr.bf16.mxu0 0
  %550 = vmatpush1.bf16.msra.mxu0 0
  %551 = vmatprep.subr.bf16.mxu0 0
  %552 = vmatpush1.bf16.msra.mxu0 0
  %553 = vmatprep.subr.bf16.mxu0 0
  %554 = vmatpush1.bf16.msra.mxu0 0
  %555 = vmatprep.mubr.bf16.mxu0 0
  %556 = vmatmul.mubr.bf16.gmra.mrb[0].mxu0 %v521
  %v557 = vpop.f32.mrb[0].mxu0
  %v558 = vadd.f32 %v343, %v557
  %v559 = vpop.f32.mrb[0].mxu0
  %v560 = vadd.f32 %v347, %v559
  %v561 = vpop.f32.mrb[0].mxu0
  %v562 = vadd.f32 %v343, %v561
  %v563 = vpop.f32.mrb[0].mxu0
  %v564 = vadd.f32 %v347, %v563
  %565 = vdwg.mxu0
  %566 = vmatprep.subr.bf16.mxu0 %v475
  %567 = vmatpush1.bf16.msra.mxu0 %v474
  %568 = vmatprep.subr.bf16.mxu0 %v487
  %569 = vmatpush1.bf16.msra.mxu0 %v486
  %570 = vmatprep.subr.bf16.mxu0 0
  %571 = vmatpush1.bf16.msra.mxu0 0
  %572 = vmatprep.subr.bf16.mxu0 0
  %573 = vmatpush1.bf16.msra.mxu0 0
  %574 = vmatprep.subr.bf16.mxu0 0
  %575 = vmatpush1.bf16.msra.mxu0 0
  %576 = vmatprep.subr.bf16.mxu0 0
  %577 = vmatpush1.bf16.msra.mxu0 0
  %578 = vmatprep.subr.bf16.mxu0 0
  %579 = vmatpush1.bf16.msra.mxu0 0
  %580 = vmatprep.subr.bf16.mxu0 0
  %581 = vmatpush1.bf16.msra.mxu0 0
  %582 = vmatprep.subr.bf16.mxu0 0
  %583 = vmatpush1.bf16.msra.mxu0 0
  %584 = vmatprep.subr.bf16.mxu0 0
  %585 = vmatpush1.bf16.msra.mxu0 0
  %586 = vmatprep.subr.bf16.mxu0 0
  %587 = vmatpush1.bf16.msra.mxu0 0
  %588 = vmatprep.subr.bf16.mxu0 0
  %589 = vmatpush1.bf16.msra.mxu0 0
  %590 = vmatprep.subr.bf16.mxu0 0
  %591 = vmatpush1.bf16.msra.mxu0 0
  %592 = vmatprep.subr.bf16.mxu0 0
  %593 = vmatpush1.bf16.msra.mxu0 0
  %594 = vmatprep.subr.bf16.mxu0 0
  %595 = vmatpush1.bf16.msra.mxu0 0
  %596 = vmatprep.subr.bf16.mxu0 0
  %597 = vmatpush1.bf16.msra.mxu0 0
  %598 = vmatprep.mubr.bf16.mxu0 0
  %599 = vmatmul.mubr.bf16.gmra.mrb[0].mxu0 %v521
  %v600 = vpop.f32.mrb[0].mxu0
  %v601 = vadd.f32 %v351, %v600
  %v602 = vpop.f32.mrb[0].mxu0
  %v603 = vadd.f32 %v355, %v602
  %v604 = vpop.f32.mrb[0].mxu0
  %v605 = vadd.f32 %v351, %v604
  %v606 = vpop.f32.mrb[0].mxu0
  %v607 = vadd.f32 %v355, %v606
  %608 = vdwg.mxu0
  %609 = vmatprep.subr.bf16.mxu0 %v477
  %610 = vmatpush1.bf16.msra.mxu0 %v476
  %611 = vmatprep.subr.bf16.mxu0 %v489
  %612 = vmatpush1.bf16.msra.mxu0 %v488
  %613 = vmatprep.subr.bf16.mxu0 0
  %614 = vmatpush1.bf16.msra.mxu0 0
  %615 = vmatprep.subr.bf16.mxu0 0
  %616 = vmatpush1.bf16.msra.mxu0 0
  %617 = vmatprep.subr.bf16.mxu0 0
  %618 = vmatpush1.bf16.msra.mxu0 0
  %619 = vmatprep.subr.bf16.mxu0 0
  %620 = vmatpush1.bf16.msra.mxu0 0
  %621 = vmatprep.subr.bf16.mxu0 0
  %622 = vmatpush1.bf16.msra.mxu0 0
  %623 = vmatprep.subr.bf16.mxu0 0
  %624 = vmatpush1.bf16.msra.mxu0 0
  %625 = vmatprep.subr.bf16.mxu0 0
  %626 = vmatpush1.bf16.msra.mxu0 0
  %627 = vmatprep.subr.bf16.mxu0 0
  %628 = vmatpush1.bf16.msra.mxu0 0
  %629 = vmatprep.subr.bf16.mxu0 0
  %630 = vmatpush1.bf16.msra.mxu0 0
  %631 = vmatprep.subr.bf16.mxu0 0
  %632 = vmatpush1.bf16.msra.mxu0 0
  %633 = vmatprep.subr.bf16.mxu0 0
  %634 = vmatpush1.bf16.msra.mxu0 0
  %635 = vmatprep.subr.bf16.mxu0 0
  %636 = vmatpush1.bf16.msra.mxu0 0
  %637 = vmatprep.subr.bf16.mxu0 0
  %638 = vmatpush1.bf16.msra.mxu0 0
  %639 = vmatprep.subr.bf16.mxu0 0
  %640 = vmatpush1.bf16.msra.mxu0 0
  %641 = vmatprep.mubr.bf16.mxu0 0
  %642 = vmatmul.mubr.bf16.gmra.mrb[0].mxu0 %v521
  %v643 = vpop.f32.mrb[0].mxu0
  %v644 = vadd.f32 %v359, %v643
  %v645 = vpop.f32.mrb[0].mxu0
  %v646 = vadd.f32 %v363, %v645
  %v647 = vpop.f32.mrb[0].mxu0
  %v648 = vadd.f32 %v359, %v647
  %v649 = vpop.f32.mrb[0].mxu0
  %v650 = vadd.f32 %v363, %v649
  %651 = vdwg.mxu0
  %652 = vmatprep.subr.bf16.mxu0 %v479
  %653 = vmatpush1.bf16.msra.mxu0 %v478
  %654 = vmatprep.subr.bf16.mxu0 %v491
  %655 = vmatpush1.bf16.msra.mxu0 %v490
  %656 = vmatprep.subr.bf16.mxu0 0
  %657 = vmatpush1.bf16.msra.mxu0 0
  %658 = vmatprep.subr.bf16.mxu0 0
  %659 = vmatpush1.bf16.msra.mxu0 0
  %660 = vmatprep.subr.bf16.mxu0 0
  %661 = vmatpush1.bf16.msra.mxu0 0
  %662 = vmatprep.subr.bf16.mxu0 0
  %663 = vmatpush1.bf16.msra.mxu0 0
  %664 = vmatprep.subr.bf16.mxu0 0
  %665 = vmatpush1.bf16.msra.mxu0 0
  %666 = vmatprep.subr.bf16.mxu0 0
  %667 = vmatpush1.bf16.msra.mxu0 0
  %668 = vmatprep.subr.bf16.mxu0 0
  %669 = vmatpush1.bf16.msra.mxu0 0
  %670 = vmatprep.subr.bf16.mxu0 0
  %671 = vmatpush1.bf16.msra.mxu0 0
  %672 = vmatprep.subr.bf16.mxu0 0
  %673 = vmatpush1.bf16.msra.mxu0 0
  %674 = vmatprep.subr.bf16.mxu0 0
  %675 = vmatpush1.bf16.msra.mxu0 0
  %676 = vmatprep.subr.bf16.mxu0 0
  %677 = vmatpush1.bf16.msra.mxu0 0
  %678 = vmatprep.subr.bf16.mxu0 0
  %679 = vmatpush1.bf16.msra.mxu0 0
  %680 = vmatprep.subr.bf16.mxu0 0
  %681 = vmatpush1.bf16.msra.mxu0 0
  %682 = vmatprep.subr.bf16.mxu0 0
  %683 = vmatpush1.bf16.msra.mxu0 0
  %684 = vmatprep.mubr.bf16.mxu0 0
  %685 = vmatmul.mubr.bf16.gmra.mrb[0].mxu0 %v521
  %v686 = vpop.f32.mrb[0].mxu0
  %v687 = vadd.f32 %v367, %v686
  %v688 = vpop.f32.mrb[0].mxu0
  %v689 = vadd.f32 %v371, %v688
  %v690 = vpop.f32.mrb[0].mxu0
  %v691 = vadd.f32 %v367, %v690
  %v692 = vpop.f32.mrb[0].mxu0
  %v693 = vadd.f32 %v371, %v692
  %694 = vdwg.mxu0
  %695 = vmatprep.subr.bf16.mxu0 %v481
  %696 = vmatpush1.bf16.msra.mxu0 %v480
  %697 = vmatprep.subr.bf16.mxu0 %v493
  %698 = vmatpush1.bf16.msra.mxu0 %v492
  %699 = vmatprep.subr.bf16.mxu0 0
  %700 = vmatpush1.bf16.msra.mxu0 0
  %701 = vmatprep.subr.bf16.mxu0 0
  %702 = vmatpush1.bf16.msra.mxu0 0
  %703 = vmatprep.subr.bf16.mxu0 0
  %704 = vmatpush1.bf16.msra.mxu0 0
  %705 = vmatprep.subr.bf16.mxu0 0
  %706 = vmatpush1.bf16.msra.mxu0 0
  %707 = vmatprep.subr.bf16.mxu0 0
  %708 = vmatpush1.bf16.msra.mxu0 0
  %709 = vmatprep.subr.bf16.mxu0 0
  %710 = vmatpush1.bf16.msra.mxu0 0
  %711 = vmatprep.subr.bf16.mxu0 0
  %712 = vmatpush1.bf16.msra.mxu0 0
  %713 = vmatprep.subr.bf16.mxu0 0
  %714 = vmatpush1.bf16.msra.mxu0 0
  %715 = vmatprep.subr.bf16.mxu0 0
  %716 = vmatpush1.bf16.msra.mxu0 0
  %717 = vmatprep.subr.bf16.mxu0 0
  %718 = vmatpush1.bf16.msra.mxu0 0
  %719 = vmatprep.subr.bf16.mxu0 0
  %720 = vmatpush1.bf16.msra.mxu0 0
  %721 = vmatprep.subr.bf16.mxu0 0
  %722 = vmatpush1.bf16.msra.mxu0 0
  %723 = vmatprep.subr.bf16.mxu0 0
  %724 = vmatpush1.bf16.msra.mxu0 0
  %725 = vmatprep.subr.bf16.mxu0 0
  %726 = vmatpush1.bf16.msra.mxu0 0
  %727 = vmatprep.mubr.bf16.mxu0 0
  %728 = vmatmul.mubr.bf16.gmra.mrb[0].mxu0 %v521
  %v729 = vpop.f32.mrb[0].mxu0
  %v730 = vadd.f32 %v375, %v729
  %v731 = vpop.f32.mrb[0].mxu0
  %v732 = vadd.f32 %v379, %v731
  %v733 = vpop.f32.mrb[0].mxu0
  %v734 = vadd.f32 %v375, %v733
  %v735 = vpop.f32.mrb[0].mxu0
  %v736 = vadd.f32 %v379, %v735
  %737 = vdwg.mxu0
  %738 = vmatprep.subr.bf16.mxu0 %v483
  %739 = vmatpush1.bf16.msra.mxu0 %v482
  %740 = vmatprep.subr.bf16.mxu0 %v495
  %741 = vmatpush1.bf16.msra.mxu0 %v494
  %742 = vmatprep.subr.bf16.mxu0 0
  %743 = vmatpush1.bf16.msra.mxu0 0
  %744 = vmatprep.subr.bf16.mxu0 0
  %745 = vmatpush1.bf16.msra.mxu0 0
  %746 = vmatprep.subr.bf16.mxu0 0
  %747 = vmatpush1.bf16.msra.mxu0 0
  %748 = vmatprep.subr.bf16.mxu0 0
  %749 = vmatpush1.bf16.msra.mxu0 0
  %750 = vmatprep.subr.bf16.mxu0 0
  %751 = vmatpush1.bf16.msra.mxu0 0
  %752 = vmatprep.subr.bf16.mxu0 0
  %753 = vmatpush1.bf16.msra.mxu0 0
  %754 = vmatprep.subr.bf16.mxu0 0
  %755 = vmatpush1.bf16.msra.mxu0 0
  %756 = vmatprep.subr.bf16.mxu0 0
  %757 = vmatpush1.bf16.msra.mxu0 0
  %758 = vmatprep.subr.bf16.mxu0 0
  %759 = vmatpush1.bf16.msra.mxu0 0
  %760 = vmatprep.subr.bf16.mxu0 0
  %761 = vmatpush1.bf16.msra.mxu0 0
  %762 = vmatprep.subr.bf16.mxu0 0
  %763 = vmatpush1.bf16.msra.mxu0 0
  %764 = vmatprep.subr.bf16.mxu0 0
  %765 = vmatpush1.bf16.msra.mxu0 0
  %766 = vmatprep.subr.bf16.mxu0 0
  %767 = vmatpush1.bf16.msra.mxu0 0
  %768 = vmatprep.subr.bf16.mxu0 0
  %769 = vmatpush1.bf16.msra.mxu0 0
  %770 = vmatprep.mubr.bf16.mxu0 0
  %771 = vmatmul.mubr.bf16.gmra.mrb[0].mxu0 %v521
  %v772 = vpop.f32.mrb[0].mxu0
  %v773 = vadd.f32 %v383, %v772
  %v774 = vpop.f32.mrb[0].mxu0
  %v775 = vadd.f32 %v387, %v774
  %v776 = vpop.f32.mrb[0].mxu0
  %v777 = vadd.f32 %v383, %v776
  %v778 = vpop.f32.mrb[0].mxu0
  %v779 = vadd.f32 %v387, %v778
  %780 = vdwg.mxu0
  %v781 = vpack.c.bf16 %v562, %v558
  %v782 = vpack.c.bf16 %v648, %v644
  %v783 = vpack.c.bf16 %v734, %v730
  %784 = vmatprep.subr.bf16.mxu0 0
  %785 = vmatpush1.bf16.xpose.msra.mxu0 %v782
  %786 = vmatprep.subr.bf16.mxu0 0
  %787 = vmatpush1.bf16.xpose.msra.mxu0 0
  %788 = vmatprep.subr.bf16.mxu0 0
  %789 = vmatpush1.bf16.xpose.msra.mxu0 0
  %790 = vmatprep.subr.bf16.mxu0 0
  %791 = vmatpush1.bf16.xpose.msra.mxu0 0
  %792 = vmatprep.subr.bf16.mxu0 0
  %793 = vmatpush1.bf16.xpose.msra.mxu0 0
  %794 = vmatprep.subr.bf16.mxu0 0
  %795 = vmatpush1.bf16.xpose.msra.mxu0 0
  %796 = vmatprep.subr.bf16.mxu0 0
  %797 = vmatpush1.bf16.xpose.msra.mxu0 0
  %798 = vmatprep.subr.bf16.mxu0 0
  %799 = vmatpush1.bf16.xpose.msra.mxu0 0
  %800 = vmatprep.subr.bf16.mxu0 0
  %801 = vmatpush1.bf16.xpose.msra.mxu0 0
  %802 = vmatprep.subr.bf16.mxu0 0
  %803 = vmatpush1.bf16.xpose.msra.mxu0 0
  %804 = vmatprep.subr.bf16.mxu0 0
  %805 = vmatpush1.bf16.xpose.msra.mxu0 0
  %806 = vmatprep.subr.bf16.mxu0 0
  %807 = vmatpush1.bf16.xpose.msra.mxu0 0
  %808 = vmatprep.subr.bf16.mxu0 0
  %809 = vmatpush1.bf16.xpose.msra.mxu0 0
  %810 = vmatprep.subr.bf16.mxu0 0
  %811 = vmatpush1.bf16.xpose.msra.mxu0 0
  %812 = vmatprep.subr.bf16.mxu0 0
  %813 = vmatpush1.bf16.xpose.msra.mxu0 0
  %814 = vmatprep.subr.bf16.mxu0 0
  %815 = vmatpush1.bf16.xpose.msra.mxu0 0
  %816 = vmatprep.mubr.bf16.mxu0 0
  %817 = vmatmul.mubr.bf16.gmra.mrb[0].mxu0 %v781
  %v818 = vpop.f32.mrb[0].mxu0
  %v819 = vadd.f32 %v306, %v818
  %v820 = vpop.f32.mrb[0].mxu0
  %v821 = vpop.f32.mrb[0].mxu0
  %v822 = vadd.f32 %v307, %v821
  %v823 = vpop.f32.mrb[0].mxu0
  %824 = vdwg.mxu0
  %v825 = vsel %vm78, %v819, -inf
  %826 = vmax.xlane.f32.xlu0 %v825
  %v827 = vpop.xlane.xlu0 %826
  %v828 = vsel %vm78, %v822, -inf
  %829 = vmax.xlane.f32.xlu0 %v828
  %v830 = vpop.xlane.xlu0 %829
  %v831 = vsub.f32 %v819, %v827
  %v832 = vsub.f32 %v822, %v830
  %v833 = vmul.f32 %v831, 1.442695
  %v834 = vpow.pop %v833
  %v835 = vmul.f32 %v832, 1.442695
  %v836 = vpow.pop %v835
  %v837 = vsel %vm78, %v834, 0.0
  %838 = vadd.xlane.f32.xlu0 %v837
  %v839 = vpop.xlane.xlu0 %838
  %v840 = vsel %vm78, %v836, 0.0
  %841 = vadd.xlane.f32.xlu0 %v840
  %v842 = vpop.xlane.xlu0 %841
  %v843 = vrcp.pop %v839
  %v844 = vrcp.pop %v842
  %v845 = vmul.f32 %v834, %v843
  %v846 = vmul.f32 %v836, %v844
  %v847 = vpack.c.bf16 %v846, %v845
  %v849 = vsel %vm78, %v847, 0
  %851 = vmatprep.subr.bf16.mxu0 0
  %852 = vmatpush1.bf16.msra.mxu0 %v783
  %853 = vmatprep.subr.bf16.mxu0 0
  %854 = vmatpush1.bf16.msra.mxu0 0
  %855 = vmatprep.subr.bf16.mxu0 0
  %856 = vmatpush1.bf16.msra.mxu0 0
  %857 = vmatprep.subr.bf16.mxu0 0
  %858 = vmatpush1.bf16.msra.mxu0 0
  %859 = vmatprep.subr.bf16.mxu0 0
  %860 = vmatpush1.bf16.msra.mxu0 0
  %861 = vmatprep.subr.bf16.mxu0 0
  %862 = vmatpush1.bf16.msra.mxu0 0
  %863 = vmatprep.subr.bf16.mxu0 0
  %864 = vmatpush1.bf16.msra.mxu0 0
  %865 = vmatprep.subr.bf16.mxu0 0
  %866 = vmatpush1.bf16.msra.mxu0 0
  %867 = vmatprep.subr.bf16.mxu0 0
  %868 = vmatpush1.bf16.msra.mxu0 0
  %869 = vmatprep.subr.bf16.mxu0 0
  %870 = vmatpush1.bf16.msra.mxu0 0
  %871 = vmatprep.subr.bf16.mxu0 0
  %872 = vmatpush1.bf16.msra.mxu0 0
  %873 = vmatprep.subr.bf16.mxu0 0
  %874 = vmatpush1.bf16.msra.mxu0 0
  %875 = vmatprep.subr.bf16.mxu0 0
  %876 = vmatpush1.bf16.msra.mxu0 0
  %877 = vmatprep.subr.bf16.mxu0 0
  %878 = vmatpush1.bf16.msra.mxu0 0
  %879 = vmatprep.subr.bf16.mxu0 0
  %880 = vmatpush1.bf16.msra.mxu0 0
  %881 = vmatprep.subr.bf16.mxu0 0
  %882 = vmatpush1.bf16.msra.mxu0 0
  %883 = vmatprep.mubr.bf16.mxu0 0
  %884 = vmatmul.mubr.bf16.gmra.mrb[0].mxu0 %v849
  %v885 = vpop.f32.mrb[0].mxu0
  %v886 = vadd.f32 0.0, %v885
  %v887 = vpop.f32.mrb[0].mxu0
  %v888 = vpop.f32.mrb[0].mxu0
  %v889 = vadd.f32 0.0, %v888
  %v890 = vpop.f32.mrb[0].mxu0
  %891 = vdwg.mxu0
  %v892 = vpack.c.bf16 %v889, %v886
  %v893 = vld [vmem:[%s4] sm:$0xf]
  %v894 = vld [vmem:[%s4 + $0x4] sm:$0xf]
  %v895 = vld [vmem:[%s4 + $0x8] sm:$0xf]
  %v896 = vld [vmem:[%s4 + $0xc] sm:$0xf]
  %v897 = vld [vmem:[%s4 + $0x10] sm:$0xf]
  %v898 = vld [vmem:[%s4 + $0x14] sm:$0xf]
  %v899 = vld [vmem:[%s4 + $0x18] sm:$0xf]
  %v900 = vld [vmem:[%s4 + $0x1c] sm:$0xf]
  %v901 = vld [vmem:[%s4 + $0x20] sm:$0xf]
  %v902 = vld [vmem:[%s4 + $0x24] sm:$0xf]
  %v903 = vld [vmem:[%s4 + $0x28] sm:$0xf]
  %v904 = vld [vmem:[%s4 + $0x2c] sm:$0xf]
  %v905 = vld [vmem:[%s4 + $0x30] sm:$0xf]
  %v906 = vld [vmem:[%s4 + $0x34] sm:$0xf]
  %v907 = vld [vmem:[%s4 + $0x38] sm:$0xf]
  %v908 = vld [vmem:[%s4 + $0x3c] sm:$0xf]
  %v909 = vpack.c.bf16 %v564, %v560
  %v910 = vpack.c.bf16 %v650, %v646
  %v911 = vpack.c.bf16 %v736, %v732
  %912 = vmatprep.subr.bf16.mxu0 0
  %913 = vmatpush1.bf16.xpose.msra.mxu0 %v910
  %914 = vmatprep.subr.bf16.mxu0 0
  %915 = vmatpush1.bf16.xpose.msra.mxu0 0
  %916 = vmatprep.subr.bf16.mxu0 0
  %917 = vmatpush1.bf16.xpose.msra.mxu0 0
  %918 = vmatprep.subr.bf16.mxu0 0
  %919 = vmatpush1.bf16.xpose.msra.mxu0 0
  %920 = vmatprep.subr.bf16.mxu0 0
  %921 = vmatpush1.bf16.xpose.msra.mxu0 0
  %922 = vmatprep.subr.bf16.mxu0 0
  %923 = vmatpush1.bf16.xpose.msra.mxu0 0
  %924 = vmatprep.subr.bf16.mxu0 0
  %925 = vmatpush1.bf16.xpose.msra.mxu0 0
  %926 = vmatprep.subr.bf16.mxu0 0
  %927 = vmatpush1.bf16.xpose.msra.mxu0 0
  %928 = vmatprep.subr.bf16.mxu0 0
  %929 = vmatpush1.bf16.xpose.msra.mxu0 0
  %930 = vmatprep.subr.bf16.mxu0 0
  %931 = vmatpush1.bf16.xpose.msra.mxu0 0
  %932 = vmatprep.subr.bf16.mxu0 0
  %933 = vmatpush1.bf16.xpose.msra.mxu0 0
  %934 = vmatprep.subr.bf16.mxu0 0
  %935 = vmatpush1.bf16.xpose.msra.mxu0 0
  %936 = vmatprep.subr.bf16.mxu0 0
  %937 = vmatpush1.bf16.xpose.msra.mxu0 0
  %938 = vmatprep.subr.bf16.mxu0 0
  %939 = vmatpush1.bf16.xpose.msra.mxu0 0
  %940 = vmatprep.subr.bf16.mxu0 0
  %941 = vmatpush1.bf16.xpose.msra.mxu0 0
  %942 = vmatprep.subr.bf16.mxu0 0
  %943 = vmatpush1.bf16.xpose.msra.mxu0 0
  %944 = vmatprep.mubr.bf16.mxu0 0
  %945 = vmatmul.mubr.bf16.gmra.mrb[0].mxu0 %v909
  %v946 = vpop.f32.mrb[0].mxu0
  %v947 = vadd.f32 %v306, %v946
  %v948 = vpop.f32.mrb[0].mxu0
  %v949 = vpop.f32.mrb[0].mxu0
  %v950 = vadd.f32 %v307, %v949
  %v951 = vpop.f32.mrb[0].mxu0
  %952 = vdwg.mxu0
  %v953 = vsel %vm78, %v947, -inf
  %954 = vmax.xlane.f32.xlu0 %v953
  %v955 = vpop.xlane.xlu0 %954
  %v956 = vsel %vm78, %v950, -inf
  %957 = vmax.xlane.f32.xlu0 %v956
  %v958 = vpop.xlane.xlu0 %957
  %v959 = vsub.f32 %v947, %v955
  %v960 = vsub.f32 %v950, %v958
  %v961 = vmul.f32 %v959, 1.442695
  %v962 = vpow.pop %v961
  %v963 = vmul.f32 %v960, 1.442695
  %v964 = vpow.pop %v963
  %v965 = vsel %vm78, %v962, 0.0
  %966 = vadd.xlane.f32.xlu0 %v965
  %v967 = vpop.xlane.xlu0 %966
  %v968 = vsel %vm78, %v964, 0.0
  %969 = vadd.xlane.f32.xlu0 %v968
  %v970 = vpop.xlane.xlu0 %969
  %v971 = vrcp.pop %v967
  %v972 = vrcp.pop %v970
  %v973 = vmul.f32 %v962, %v971
  %v974 = vmul.f32 %v964, %v972
  %v975 = vpack.c.bf16 %v974, %v973
  %v977 = vsel %vm78, %v975, 0
  %979 = vmatprep.subr.bf16.mxu0 0
  %980 = vmatpush1.bf16.msra.mxu0 %v911
  %981 = vmatprep.subr.bf16.mxu0 0
  %982 = vmatpush1.bf16.msra.mxu0 0
  %983 = vmatprep.subr.bf16.mxu0 0
  %984 = vmatpush1.bf16.msra.mxu0 0
  %985 = vmatprep.subr.bf16.mxu0 0
  %986 = vmatpush1.bf16.msra.mxu0 0
  %987 = vmatprep.subr.bf16.mxu0 0
  %988 = vmatpush1.bf16.msra.mxu0 0
  %989 = vmatprep.subr.bf16.mxu0 0
  %990 = vmatpush1.bf16.msra.mxu0 0
  %991 = vmatprep.subr.bf16.mxu0 0
  %992 = vmatpush1.bf16.msra.mxu0 0
  %993 = vmatprep.subr.bf16.mxu0 0
  %994 = vmatpush1.bf16.msra.mxu0 0
  %995 = vmatprep.subr.bf16.mxu0 0
  %996 = vmatpush1.bf16.msra.mxu0 0
  %997 = vmatprep.subr.bf16.mxu0 0
  %998 = vmatpush1.bf16.msra.mxu0 0
  %999 = vmatprep.subr.bf16.mxu0 0
  %1000 = vmatpush1.bf16.msra.mxu0 0
  %1001 = vmatprep.subr.bf16.mxu0 0
  %1002 = vmatpush1.bf16.msra.mxu0 0
  %1003 = vmatprep.subr.bf16.mxu0 0
  %1004 = vmatpush1.bf16.msra.mxu0 0
  %1005 = vmatprep.subr.bf16.mxu0 0
  %1006 = vmatpush1.bf16.msra.mxu0 0
  %1007 = vmatprep.subr.bf16.mxu0 0
  %1008 = vmatpush1.bf16.msra.mxu0 0
  %1009 = vmatprep.subr.bf16.mxu0 0
  %1010 = vmatpush1.bf16.msra.mxu0 0
  %1011 = vmatprep.mubr.bf16.mxu0 0
  %1012 = vmatmul.mubr.bf16.gmra.mrb[0].mxu0 %v977
  %v1013 = vpop.f32.mrb[0].mxu0
  %v1014 = vadd.f32 0.0, %v1013
  %v1015 = vpop.f32.mrb[0].mxu0
  %v1016 = vpop.f32.mrb[0].mxu0
  %v1017 = vadd.f32 0.0, %v1016
  %v1018 = vpop.f32.mrb[0].mxu0
  %1019 = vdwg.mxu0
  %v1020 = vpack.c.bf16 %v1017, %v1014
  %v1021 = vld [vmem:[%s4 + $0x40] sm:$0xf]
  %v1022 = vld [vmem:[%s4 + $0x44] sm:$0xf]
  %v1023 = vld [vmem:[%s4 + $0x48] sm:$0xf]
  %v1024 = vld [vmem:[%s4 + $0x4c] sm:$0xf]
  %v1025 = vld [vmem:[%s4 + $0x50] sm:$0xf]
  %v1026 = vld [vmem:[%s4 + $0x54] sm:$0xf]
  %v1027 = vld [vmem:[%s4 + $0x58] sm:$0xf]
  %v1028 = vld [vmem:[%s4 + $0x5c] sm:$0xf]
  %v1029 = vld [vmem:[%s4 + $0x60] sm:$0xf]
  %v1030 = vld [vmem:[%s4 + $0x64] sm:$0xf]
  %v1031 = vld [vmem:[%s4 + $0x68] sm:$0xf]
  %v1032 = vld [vmem:[%s4 + $0x6c] sm:$0xf]
  %v1033 = vld [vmem:[%s4 + $0x70] sm:$0xf]
  %v1034 = vld [vmem:[%s4 + $0x74] sm:$0xf]
  %v1035 = vld [vmem:[%s4 + $0x78] sm:$0xf]
  %v1036 = vld [vmem:[%s4 + $0x7c] sm:$0xf]
  %v1053 = vunpack.c.l.b16 %v1021
  %v1054 = vunpack.c.l.b16 %v1022
  %v1055 = vunpack.c.l.b16 %v1023
  %v1056 = vunpack.c.l.b16 %v1024
  %v1057 = vunpack.c.l.b16 %v1025
  %v1058 = vunpack.c.l.b16 %v1026
  %v1059 = vunpack.c.l.b16 %v1027
  %v1060 = vunpack.c.l.b16 %v1028
  %v1061 = vunpack.c.l.b16 %v1029
  %v1062 = vunpack.c.l.b16 %v1030
  %v1063 = vunpack.c.l.b16 %v1031
  %v1064 = vunpack.c.l.b16 %v1032
  %v1065 = vunpack.c.l.b16 %v1033
  %v1066 = vunpack.c.l.b16 %v1034
  %v1067 = vunpack.c.l.b16 %v1035
  %v1068 = vunpack.c.l.b16 %v1036
  %v1069 = vpack.c.b16 %v1054, %v1053
  %v1070 = vpack.c.b16 %v1056, %v1055
  %v1071 = vpack.c.b16 %v1058, %v1057
  %v1072 = vpack.c.b16 %v1060, %v1059
  %v1073 = vpack.c.b16 %v1062, %v1061
  %v1074 = vpack.c.b16 %v1064, %v1063
  %v1075 = vpack.c.b16 %v1066, %v1065
  %v1076 = vpack.c.b16 %v1068, %v1067
  %1085 = vmatprep.subr.bf16.mxu0 0
  %1086 = vmatpush1.bf16.msra.mxu0 %v1069
  %1087 = vmatprep.subr.bf16.mxu0 0
  %1088 = vmatpush1.bf16.msra.mxu0 %v1070
  %1089 = vmatprep.subr.bf16.mxu0 0
  %1090 = vmatpush1.bf16.msra.mxu0 %v1071
  %1091 = vmatprep.subr.bf16.mxu0 0
  %1092 = vmatpush1.bf16.msra.mxu0 %v1072
  %1093 = vmatprep.subr.bf16.mxu0 0
  %1094 = vmatpush1.bf16.msra.mxu0 %v1073
  %1095 = vmatprep.subr.bf16.mxu0 0
  %1096 = vmatpush1.bf16.msra.mxu0 %v1074
  %1097 = vmatprep.subr.bf16.mxu0 0
  %1098 = vmatpush1.bf16.msra.mxu0 %v1075
  %1099 = vmatprep.subr.bf16.mxu0 0
  %1100 = vmatpush1.bf16.msra.mxu0 %v1076
  %1101 = vmatprep.subr.bf16.mxu0 0
  %1102 = vmatpush1.bf16.msra.mxu0 0
  %1103 = vmatprep.subr.bf16.mxu0 0
  %1104 = vmatpush1.bf16.msra.mxu0 0
  %1105 = vmatprep.subr.bf16.mxu0 0
  %1106 = vmatpush1.bf16.msra.mxu0 0
  %1107 = vmatprep.subr.bf16.mxu0 0
  %1108 = vmatpush1.bf16.msra.mxu0 0
  %1109 = vmatprep.subr.bf16.mxu0 0
  %1110 = vmatpush1.bf16.msra.mxu0 0
  %1111 = vmatprep.subr.bf16.mxu0 0
  %1112 = vmatpush1.bf16.msra.mxu0 0
  %1113 = vmatprep.subr.bf16.mxu0 0
  %1114 = vmatpush1.bf16.msra.mxu0 0
  %1115 = vmatprep.subr.bf16.mxu0 0
  %1116 = vmatpush1.bf16.msra.mxu0 0
  %1117 = vmatprep.mubr.bf16.mxu0 0
  %1118 = vmatmul.mubr.bf16.gmra.mrb[0].mxu0 %v1020
  %v1119 = vpop.f32.mrb[0].mxu0
  %v1120 = vadd.f32 0.0, %v1119
  %v1121 = vpop.f32.mrb[0].mxu0
  %v1122 = vpop.f32.mrb[0].mxu0
  %v1123 = vadd.f32 0.0, %v1122
  %v1124 = vpop.f32.mrb[0].mxu0
  %1125 = vdwg.mxu0
  %v1142 = vunpack.c.l.b16 %v893
  %v1143 = vunpack.c.l.b16 %v894
  %v1144 = vunpack.c.l.b16 %v895
  %v1145 = vunpack.c.l.b16 %v896
  %v1146 = vunpack.c.l.b16 %v897
  %v1147 = vunpack.c.l.b16 %v898
  %v1148 = vunpack.c.l.b16 %v899
  %v1149 = vunpack.c.l.b16 %v900
  %v1150 = vunpack.c.l.b16 %v901
  %v1151 = vunpack.c.l.b16 %v902
  %v1152 = vunpack.c.l.b16 %v903
  %v1153 = vunpack.c.l.b16 %v904
  %v1154 = vunpack.c.l.b16 %v905
  %v1155 = vunpack.c.l.b16 %v906
  %v1156 = vunpack.c.l.b16 %v907
  %v1157 = vunpack.c.l.b16 %v908
  %v1158 = vpack.c.b16 %v1143, %v1142
  %v1159 = vpack.c.b16 %v1145, %v1144
  %v1160 = vpack.c.b16 %v1147, %v1146
  %v1161 = vpack.c.b16 %v1149, %v1148
  %v1162 = vpack.c.b16 %v1151, %v1150
  %v1163 = vpack.c.b16 %v1153, %v1152
  %v1164 = vpack.c.b16 %v1155, %v1154
  %v1165 = vpack.c.b16 %v1157, %v1156
  %1174 = vmatprep.subr.bf16.mxu0 0
  %1175 = vmatpush1.bf16.msra.mxu0 %v1158
  %1176 = vmatprep.subr.bf16.mxu0 0
  %1177 = vmatpush1.bf16.msra.mxu0 %v1159
  %1178 = vmatprep.subr.bf16.mxu0 0
  %1179 = vmatpush1.bf16.msra.mxu0 %v1160
  %1180 = vmatprep.subr.bf16.mxu0 0
  %1181 = vmatpush1.bf16.msra.mxu0 %v1161
  %1182 = vmatprep.subr.bf16.mxu0 0
  %1183 = vmatpush1.bf16.msra.mxu0 %v1162
  %1184 = vmatprep.subr.bf16.mxu0 0
  %1185 = vmatpush1.bf16.msra.mxu0 %v1163
  %1186 = vmatprep.subr.bf16.mxu0 0
  %1187 = vmatpush1.bf16.msra.mxu0 %v1164
  %1188 = vmatprep.subr.bf16.mxu0 0
  %1189 = vmatpush1.bf16.msra.mxu0 %v1165
  %1190 = vmatprep.subr.bf16.mxu0 0
  %1191 = vmatpush1.bf16.msra.mxu0 0
  %1192 = vmatprep.subr.bf16.mxu0 0
  %1193 = vmatpush1.bf16.msra.mxu0 0
  %1194 = vmatprep.subr.bf16.mxu0 0
  %1195 = vmatpush1.bf16.msra.mxu0 0
  %1196 = vmatprep.subr.bf16.mxu0 0
  %1197 = vmatpush1.bf16.msra.mxu0 0
  %1198 = vmatprep.subr.bf16.mxu0 0
  %1199 = vmatpush1.bf16.msra.mxu0 0
  %1200 = vmatprep.subr.bf16.mxu0 0
  %1201 = vmatpush1.bf16.msra.mxu0 0
  %1202 = vmatprep.subr.bf16.mxu0 0
  %1203 = vmatpush1.bf16.msra.mxu0 0
  %1204 = vmatprep.subr.bf16.mxu0 0
  %1205 = vmatpush1.bf16.msra.mxu0 0
  %1206 = vmatprep.mubr.bf16.mxu0 0
  %1207 = vmatmul.mubr.bf16.gmra.mrb[0].mxu0 %v892
  %v1208 = vpop.f32.mrb[0].mxu0
  %v1209 = vadd.f32 %v1120, %v1208
  %v1210 = vpop.f32.mrb[0].mxu0
  %v1211 = vpop.f32.mrb[0].mxu0
  %v1212 = vadd.f32 %v1123, %v1211
  %v1213 = vpop.f32.mrb[0].mxu0
  %1214 = vdwg.mxu0
  %v1215 = vpack.c.bf16 %v605, %v601
  %v1216 = vpack.c.bf16 %v691, %v687
  %v1217 = vpack.c.bf16 %v777, %v773
  %1218 = vmatprep.subr.bf16.mxu0 0
  %1219 = vmatpush1.bf16.xpose.msra.mxu0 %v1216
  %1220 = vmatprep.subr.bf16.mxu0 0
  %1221 = vmatpush1.bf16.xpose.msra.mxu0 0
  %1222 = vmatprep.subr.bf16.mxu0 0
  %1223 = vmatpush1.bf16.xpose.msra.mxu0 0
  %1224 = vmatprep.subr.bf16.mxu0 0
  %1225 = vmatpush1.bf16.xpose.msra.mxu0 0
  %1226 = vmatprep.subr.bf16.mxu0 0
  %1227 = vmatpush1.bf16.xpose.msra.mxu0 0
  %1228 = vmatprep.subr.bf16.mxu0 0
  %1229 = vmatpush1.bf16.xpose.msra.mxu0 0
  %1230 = vmatprep.subr.bf16.mxu0 0
  %1231 = vmatpush1.bf16.xpose.msra.mxu0 0
  %1232 = vmatprep.subr.bf16.mxu0 0
  %1233 = vmatpush1.bf16.xpose.msra.mxu0 0
  %1234 = vmatprep.subr.bf16.mxu0 0
  %1235 = vmatpush1.bf16.xpose.msra.mxu0 0
  %1236 = vmatprep.subr.bf16.mxu0 0
  %1237 = vmatpush1.bf16.xpose.msra.mxu0 0
  %1238 = vmatprep.subr.bf16.mxu0 0
  %1239 = vmatpush1.bf16.xpose.msra.mxu0 0
  %1240 = vmatprep.subr.bf16.mxu0 0
  %1241 = vmatpush1.bf16.xpose.msra.mxu0 0
  %1242 = vmatprep.subr.bf16.mxu0 0
  %1243 = vmatpush1.bf16.xpose.msra.mxu0 0
  %1244 = vmatprep.subr.bf16.mxu0 0
  %1245 = vmatpush1.bf16.xpose.msra.mxu0 0
  %1246 = vmatprep.subr.bf16.mxu0 0
  %1247 = vmatpush1.bf16.xpose.msra.mxu0 0
  %1248 = vmatprep.subr.bf16.mxu0 0
  %1249 = vmatpush1.bf16.xpose.msra.mxu0 0
  %1250 = vmatprep.mubr.bf16.mxu0 0
  %1251 = vmatmul.mubr.bf16.gmra.mrb[0].mxu0 %v1215
  %v1252 = vpop.f32.mrb[0].mxu0
  %v1253 = vadd.f32 %v306, %v1252
  %v1254 = vpop.f32.mrb[0].mxu0
  %v1255 = vpop.f32.mrb[0].mxu0
  %v1256 = vadd.f32 %v307, %v1255
  %v1257 = vpop.f32.mrb[0].mxu0
  %1258 = vdwg.mxu0
  %v1259 = vsel %vm78, %v1253, -inf
  %1260 = vmax.xlane.f32.xlu0 %v1259
  %v1261 = vpop.xlane.xlu0 %1260
  %v1262 = vsel %vm78, %v1256, -inf
  %1263 = vmax.xlane.f32.xlu0 %v1262
  %v1264 = vpop.xlane.xlu0 %1263
  %v1265 = vsub.f32 %v1253, %v1261
  %v1266 = vsub.f32 %v1256, %v1264
  %v1267 = vmul.f32 %v1265, 1.442695
  %v1268 = vpow.pop %v1267
  %v1269 = vmul.f32 %v1266, 1.442695
  %v1270 = vpow.pop %v1269
  %v1271 = vsel %vm78, %v1268, 0.0
  %1272 = vadd.xlane.f32.xlu0 %v1271
  %v1273 = vpop.xlane.xlu0 %1272
  %v1274 = vsel %vm78, %v1270, 0.0
  %1275 = vadd.xlane.f32.xlu0 %v1274
  %v1276 = vpop.xlane.xlu0 %1275
  %v1277 = vrcp.pop %v1273
  %v1278 = vrcp.pop %v1276
  %v1279 = vmul.f32 %v1268, %v1277
  %v1280 = vmul.f32 %v1270, %v1278
  %v1281 = vpack.c.bf16 %v1280, %v1279
  %v1283 = vsel %vm78, %v1281, 0
  %1285 = vmatprep.subr.bf16.mxu0 0
  %1286 = vmatpush1.bf16.msra.mxu0 %v1217
  %1287 = vmatprep.subr.bf16.mxu0 0
  %1288 = vmatpush1.bf16.msra.mxu0 0
  %1289 = vmatprep.subr.bf16.mxu0 0
  %1290 = vmatpush1.bf16.msra.mxu0 0
  %1291 = vmatprep.subr.bf16.mxu0 0
  %1292 = vmatpush1.bf16.msra.mxu0 0
  %1293 = vmatprep.subr.bf16.mxu0 0
  %1294 = vmatpush1.bf16.msra.mxu0 0
  %1295 = vmatprep.subr.bf16.mxu0 0
  %1296 = vmatpush1.bf16.msra.mxu0 0
  %1297 = vmatprep.subr.bf16.mxu0 0
  %1298 = vmatpush1.bf16.msra.mxu0 0
  %1299 = vmatprep.subr.bf16.mxu0 0
  %1300 = vmatpush1.bf16.msra.mxu0 0
  %1301 = vmatprep.subr.bf16.mxu0 0
  %1302 = vmatpush1.bf16.msra.mxu0 0
  %1303 = vmatprep.subr.bf16.mxu0 0
  %1304 = vmatpush1.bf16.msra.mxu0 0
  %1305 = vmatprep.subr.bf16.mxu0 0
  %1306 = vmatpush1.bf16.msra.mxu0 0
  %1307 = vmatprep.subr.bf16.mxu0 0
  %1308 = vmatpush1.bf16.msra.mxu0 0
  %1309 = vmatprep.subr.bf16.mxu0 0
  %1310 = vmatpush1.bf16.msra.mxu0 0
  %1311 = vmatprep.subr.bf16.mxu0 0
  %1312 = vmatpush1.bf16.msra.mxu0 0
  %1313 = vmatprep.subr.bf16.mxu0 0
  %1314 = vmatpush1.bf16.msra.mxu0 0
  %1315 = vmatprep.subr.bf16.mxu0 0
  %1316 = vmatpush1.bf16.msra.mxu0 0
  %1317 = vmatprep.mubr.bf16.mxu0 0
  %1318 = vmatmul.mubr.bf16.gmra.mrb[0].mxu0 %v1283
  %v1319 = vpop.f32.mrb[0].mxu0
  %v1320 = vadd.f32 0.0, %v1319
  %v1321 = vpop.f32.mrb[0].mxu0
  %v1322 = vpop.f32.mrb[0].mxu0
  %v1323 = vadd.f32 0.0, %v1322
  %v1324 = vpop.f32.mrb[0].mxu0
  %1325 = vdwg.mxu0
  %v1326 = vpack.c.bf16 %v1323, %v1320
  %v1327 = vld [vmem:[%s4 + $0x80] sm:$0xf]
  %v1328 = vld [vmem:[%s4 + $0x84] sm:$0xf]
  %v1329 = vld [vmem:[%s4 + $0x88] sm:$0xf]
  %v1330 = vld [vmem:[%s4 + $0x8c] sm:$0xf]
  %v1331 = vld [vmem:[%s4 + $0x90] sm:$0xf]
  %v1332 = vld [vmem:[%s4 + $0x94] sm:$0xf]
  %v1333 = vld [vmem:[%s4 + $0x98] sm:$0xf]
  %v1334 = vld [vmem:[%s4 + $0x9c] sm:$0xf]
  %v1335 = vld [vmem:[%s4 + $0xa0] sm:$0xf]
  %v1336 = vld [vmem:[%s4 + $0xa4] sm:$0xf]
  %v1337 = vld [vmem:[%s4 + $0xa8] sm:$0xf]
  %v1338 = vld [vmem:[%s4 + $0xac] sm:$0xf]
  %v1339 = vld [vmem:[%s4 + $0xb0] sm:$0xf]
  %v1340 = vld [vmem:[%s4 + $0xb4] sm:$0xf]
  %v1341 = vld [vmem:[%s4 + $0xb8] sm:$0xf]
  %v1342 = vld [vmem:[%s4 + $0xbc] sm:$0xf]
  %v1359 = vunpack.c.l.b16 %v1327
  %v1360 = vunpack.c.l.b16 %v1328
  %v1361 = vunpack.c.l.b16 %v1329
  %v1362 = vunpack.c.l.b16 %v1330
  %v1363 = vunpack.c.l.b16 %v1331
  %v1364 = vunpack.c.l.b16 %v1332
  %v1365 = vunpack.c.l.b16 %v1333
  %v1366 = vunpack.c.l.b16 %v1334
  %v1367 = vunpack.c.l.b16 %v1335
  %v1368 = vunpack.c.l.b16 %v1336
  %v1369 = vunpack.c.l.b16 %v1337
  %v1370 = vunpack.c.l.b16 %v1338
  %v1371 = vunpack.c.l.b16 %v1339
  %v1372 = vunpack.c.l.b16 %v1340
  %v1373 = vunpack.c.l.b16 %v1341
  %v1374 = vunpack.c.l.b16 %v1342
  %v1375 = vpack.c.b16 %v1360, %v1359
  %v1376 = vpack.c.b16 %v1362, %v1361
  %v1377 = vpack.c.b16 %v1364, %v1363
  %v1378 = vpack.c.b16 %v1366, %v1365
  %v1379 = vpack.c.b16 %v1368, %v1367
  %v1380 = vpack.c.b16 %v1370, %v1369
  %v1381 = vpack.c.b16 %v1372, %v1371
  %v1382 = vpack.c.b16 %v1374, %v1373
  %1391 = vmatprep.subr.bf16.mxu0 0
  %1392 = vmatpush1.bf16.msra.mxu0 %v1375
  %1393 = vmatprep.subr.bf16.mxu0 0
  %1394 = vmatpush1.bf16.msra.mxu0 %v1376
  %1395 = vmatprep.subr.bf16.mxu0 0
  %1396 = vmatpush1.bf16.msra.mxu0 %v1377
  %1397 = vmatprep.subr.bf16.mxu0 0
  %1398 = vmatpush1.bf16.msra.mxu0 %v1378
  %1399 = vmatprep.subr.bf16.mxu0 0
  %1400 = vmatpush1.bf16.msra.mxu0 %v1379
  %1401 = vmatprep.subr.bf16.mxu0 0
  %1402 = vmatpush1.bf16.msra.mxu0 %v1380
  %1403 = vmatprep.subr.bf16.mxu0 0
  %1404 = vmatpush1.bf16.msra.mxu0 %v1381
  %1405 = vmatprep.subr.bf16.mxu0 0
  %1406 = vmatpush1.bf16.msra.mxu0 %v1382
  %1407 = vmatprep.subr.bf16.mxu0 0
  %1408 = vmatpush1.bf16.msra.mxu0 0
  %1409 = vmatprep.subr.bf16.mxu0 0
  %1410 = vmatpush1.bf16.msra.mxu0 0
  %1411 = vmatprep.subr.bf16.mxu0 0
  %1412 = vmatpush1.bf16.msra.mxu0 0
  %1413 = vmatprep.subr.bf16.mxu0 0
  %1414 = vmatpush1.bf16.msra.mxu0 0
  %1415 = vmatprep.subr.bf16.mxu0 0
  %1416 = vmatpush1.bf16.msra.mxu0 0
  %1417 = vmatprep.subr.bf16.mxu0 0
  %1418 = vmatpush1.bf16.msra.mxu0 0
  %1419 = vmatprep.subr.bf16.mxu0 0
  %1420 = vmatpush1.bf16.msra.mxu0 0
  %1421 = vmatprep.subr.bf16.mxu0 0
  %1422 = vmatpush1.bf16.msra.mxu0 0
  %1423 = vmatprep.mubr.bf16.mxu0 0
  %1424 = vmatmul.mubr.bf16.gmra.mrb[0].mxu0 %v1326
  %v1425 = vpop.f32.mrb[0].mxu0
  %v1426 = vadd.f32 0.0, %v1425
  %v1427 = vpop.f32.mrb[0].mxu0
  %v1428 = vpop.f32.mrb[0].mxu0
  %v1429 = vadd.f32 0.0, %v1428
  %v1430 = vpop.f32.mrb[0].mxu0
  %1431 = vdwg.mxu0
  %v1432 = vadd.f32 %v1209, %v1426
  %v1433 = vadd.f32 %v1212, %v1429
  %v1434 = vpack.c.bf16 %v607, %v603
  %v1435 = vpack.c.bf16 %v693, %v689
  %v1436 = vpack.c.bf16 %v779, %v775
  %1437 = vmatprep.subr.bf16.mxu0 0
  %1438 = vmatpush1.bf16.xpose.msra.mxu0 %v1435
  %1439 = vmatprep.subr.bf16.mxu0 0
  %1440 = vmatpush1.bf16.xpose.msra.mxu0 0
  %1441 = vmatprep.subr.bf16.mxu0 0
  %1442 = vmatpush1.bf16.xpose.msra.mxu0 0
  %1443 = vmatprep.subr.bf16.mxu0 0
  %1444 = vmatpush1.bf16.xpose.msra.mxu0 0
  %1445 = vmatprep.subr.bf16.mxu0 0
  %1446 = vmatpush1.bf16.xpose.msra.mxu0 0
  %1447 = vmatprep.subr.bf16.mxu0 0
  %1448 = vmatpush1.bf16.xpose.msra.mxu0 0
  %1449 = vmatprep.subr.bf16.mxu0 0
  %1450 = vmatpush1.bf16.xpose.msra.mxu0 0
  %1451 = vmatprep.subr.bf16.mxu0 0
  %1452 = vmatpush1.bf16.xpose.msra.mxu0 0
  %1453 = vmatprep.subr.bf16.mxu0 0
  %1454 = vmatpush1.bf16.xpose.msra.mxu0 0
  %1455 = vmatprep.subr.bf16.mxu0 0
  %1456 = vmatpush1.bf16.xpose.msra.mxu0 0
  %1457 = vmatprep.subr.bf16.mxu0 0
  %1458 = vmatpush1.bf16.xpose.msra.mxu0 0
  %1459 = vmatprep.subr.bf16.mxu0 0
  %1460 = vmatpush1.bf16.xpose.msra.mxu0 0
  %1461 = vmatprep.subr.bf16.mxu0 0
  %1462 = vmatpush1.bf16.xpose.msra.mxu0 0
  %1463 = vmatprep.subr.bf16.mxu0 0
  %1464 = vmatpush1.bf16.xpose.msra.mxu0 0
  %1465 = vmatprep.subr.bf16.mxu0 0
  %1466 = vmatpush1.bf16.xpose.msra.mxu0 0
  %1467 = vmatprep.subr.bf16.mxu0 0
  %1468 = vmatpush1.bf16.xpose.msra.mxu0 0
  %1469 = vmatprep.mubr.bf16.mxu0 0
  %1470 = vmatmul.mubr.bf16.gmra.mrb[0].mxu0 %v1434
  %v1471 = vpop.f32.mrb[0].mxu0
  %v1472 = vadd.f32 %v306, %v1471
  %v1473 = vpop.f32.mrb[0].mxu0
  %v1474 = vpop.f32.mrb[0].mxu0
  %v1475 = vadd.f32 %v307, %v1474
  %v1476 = vpop.f32.mrb[0].mxu0
  %1477 = vdwg.mxu0
  %v1478 = vsel %vm78, %v1472, -inf
  %1479 = vmax.xlane.f32.xlu0 %v1478
  %v1480 = vpop.xlane.xlu0 %1479
  %v1481 = vsel %vm78, %v1475, -inf
  %1482 = vmax.xlane.f32.xlu0 %v1481
  %v1483 = vpop.xlane.xlu0 %1482
  %v1484 = vsub.f32 %v1472, %v1480
  %v1485 = vsub.f32 %v1475, %v1483
  %v1486 = vmul.f32 %v1484, 1.442695
  %v1487 = vpow.pop %v1486
  %v1488 = vmul.f32 %v1485, 1.442695
  %v1489 = vpow.pop %v1488
  %v1490 = vsel %vm78, %v1487, 0.0
  %1491 = vadd.xlane.f32.xlu0 %v1490
  %v1492 = vpop.xlane.xlu0 %1491
  %v1493 = vsel %vm78, %v1489, 0.0
  %1494 = vadd.xlane.f32.xlu0 %v1493
  %v1495 = vpop.xlane.xlu0 %1494
  %v1496 = vrcp.pop %v1492
  %v1497 = vrcp.pop %v1495
  %v1498 = vmul.f32 %v1487, %v1496
  %v1499 = vmul.f32 %v1489, %v1497
  %v1500 = vpack.c.bf16 %v1499, %v1498
  %v1502 = vsel %vm78, %v1500, 0
  %1504 = vmatprep.subr.bf16.mxu0 0
  %1505 = vmatpush1.bf16.msra.mxu0 %v1436
  %1506 = vmatprep.subr.bf16.mxu0 0
  %1507 = vmatpush1.bf16.msra.mxu0 0
  %1508 = vmatprep.subr.bf16.mxu0 0
  %1509 = vmatpush1.bf16.msra.mxu0 0
  %1510 = vmatprep.subr.bf16.mxu0 0
  %1511 = vmatpush1.bf16.msra.mxu0 0
  %1512 = vmatprep.subr.bf16.mxu0 0
  %1513 = vmatpush1.bf16.msra.mxu0 0
  %1514 = vmatprep.subr.bf16.mxu0 0
  %1515 = vmatpush1.bf16.msra.mxu0 0
  %1516 = vmatprep.subr.bf16.mxu0 0
  %1517 = vmatpush1.bf16.msra.mxu0 0
  %1518 = vmatprep.subr.bf16.mxu0 0
  %1519 = vmatpush1.bf16.msra.mxu0 0
  %1520 = vmatprep.subr.bf16.mxu0 0
  %1521 = vmatpush1.bf16.msra.mxu0 0
  %1522 = vmatprep.subr.bf16.mxu0 0
  %1523 = vmatpush1.bf16.msra.mxu0 0
  %1524 = vmatprep.subr.bf16.mxu0 0
  %1525 = vmatpush1.bf16.msra.mxu0 0
  %1526 = vmatprep.subr.bf16.mxu0 0
  %1527 = vmatpush1.bf16.msra.mxu0 0
  %1528 = vmatprep.subr.bf16.mxu0 0
  %1529 = vmatpush1.bf16.msra.mxu0 0
  %1530 = vmatprep.subr.bf16.mxu0 0
  %1531 = vmatpush1.bf16.msra.mxu0 0
  %1532 = vmatprep.subr.bf16.mxu0 0
  %1533 = vmatpush1.bf16.msra.mxu0 0
  %1534 = vmatprep.subr.bf16.mxu0 0
  %1535 = vmatpush1.bf16.msra.mxu0 0
  %1536 = vmatprep.mubr.bf16.mxu0 0
  %1537 = vmatmul.mubr.bf16.gmra.mrb[0].mxu0 %v1502
  %v1538 = vpop.f32.mrb[0].mxu0
  %v1539 = vadd.f32 0.0, %v1538
  %v1540 = vpop.f32.mrb[0].mxu0
  %v1541 = vpop.f32.mrb[0].mxu0
  %v1542 = vadd.f32 0.0, %v1541
  %v1543 = vpop.f32.mrb[0].mxu0
  %1544 = vdwg.mxu0
  %v1545 = vpack.c.bf16 %v1542, %v1539
  %v1546 = vld [vmem:[%s4 + $0xc0] sm:$0xf]
  %v1547 = vld [vmem:[%s4 + $0xc4] sm:$0xf]
  %v1548 = vld [vmem:[%s4 + $0xc8] sm:$0xf]
  %v1549 = vld [vmem:[%s4 + $0xcc] sm:$0xf]
  %v1550 = vld [vmem:[%s4 + $0xd0] sm:$0xf]
  %v1551 = vld [vmem:[%s4 + $0xd4] sm:$0xf]
  %v1552 = vld [vmem:[%s4 + $0xd8] sm:$0xf]
  %v1553 = vld [vmem:[%s4 + $0xdc] sm:$0xf]
  %v1554 = vld [vmem:[%s4 + $0xe0] sm:$0xf]
  %v1555 = vld [vmem:[%s4 + $0xe4] sm:$0xf]
  %v1556 = vld [vmem:[%s4 + $0xe8] sm:$0xf]
  %v1557 = vld [vmem:[%s4 + $0xec] sm:$0xf]
  %v1558 = vld [vmem:[%s4 + $0xf0] sm:$0xf]
  %v1559 = vld [vmem:[%s4 + $0xf4] sm:$0xf]
  %v1560 = vld [vmem:[%s4 + $0xf8] sm:$0xf]
  %v1561 = vld [vmem:[%s4 + $0xfc] sm:$0xf]
  %v1578 = vunpack.c.l.b16 %v1546
  %v1579 = vunpack.c.l.b16 %v1547
  %v1580 = vunpack.c.l.b16 %v1548
  %v1581 = vunpack.c.l.b16 %v1549
  %v1582 = vunpack.c.l.b16 %v1550
  %v1583 = vunpack.c.l.b16 %v1551
  %v1584 = vunpack.c.l.b16 %v1552
  %v1585 = vunpack.c.l.b16 %v1553
  %v1586 = vunpack.c.l.b16 %v1554
  %v1587 = vunpack.c.l.b16 %v1555
  %v1588 = vunpack.c.l.b16 %v1556
  %v1589 = vunpack.c.l.b16 %v1557
  %v1590 = vunpack.c.l.b16 %v1558
  %v1591 = vunpack.c.l.b16 %v1559
  %v1592 = vunpack.c.l.b16 %v1560
  %v1593 = vunpack.c.l.b16 %v1561
  %v1594 = vpack.c.b16 %v1579, %v1578
  %v1595 = vpack.c.b16 %v1581, %v1580
  %v1596 = vpack.c.b16 %v1583, %v1582
  %v1597 = vpack.c.b16 %v1585, %v1584
  %v1598 = vpack.c.b16 %v1587, %v1586
  %v1599 = vpack.c.b16 %v1589, %v1588
  %v1600 = vpack.c.b16 %v1591, %v1590
  %v1601 = vpack.c.b16 %v1593, %v1592
  %1610 = vmatprep.subr.bf16.mxu0 0
  %1611 = vmatpush1.bf16.msra.mxu0 %v1594
  %1612 = vmatprep.subr.bf16.mxu0 0
  %1613 = vmatpush1.bf16.msra.mxu0 %v1595
  %1614 = vmatprep.subr.bf16.mxu0 0
  %1615 = vmatpush1.bf16.msra.mxu0 %v1596
  %1616 = vmatprep.subr.bf16.mxu0 0
  %1617 = vmatpush1.bf16.msra.mxu0 %v1597
  %1618 = vmatprep.subr.bf16.mxu0 0
  %1619 = vmatpush1.bf16.msra.mxu0 %v1598
  %1620 = vmatprep.subr.bf16.mxu0 0
  %1621 = vmatpush1.bf16.msra.mxu0 %v1599
  %1622 = vmatprep.subr.bf16.mxu0 0
  %1623 = vmatpush1.bf16.msra.mxu0 %v1600
  %1624 = vmatprep.subr.bf16.mxu0 0
  %1625 = vmatpush1.bf16.msra.mxu0 %v1601
  %1626 = vmatprep.subr.bf16.mxu0 0
  %1627 = vmatpush1.bf16.msra.mxu0 0
  %1628 = vmatprep.subr.bf16.mxu0 0
  %1629 = vmatpush1.bf16.msra.mxu0 0
  %1630 = vmatprep.subr.bf16.mxu0 0
  %1631 = vmatpush1.bf16.msra.mxu0 0
  %1632 = vmatprep.subr.bf16.mxu0 0
  %1633 = vmatpush1.bf16.msra.mxu0 0
  %1634 = vmatprep.subr.bf16.mxu0 0
  %1635 = vmatpush1.bf16.msra.mxu0 0
  %1636 = vmatprep.subr.bf16.mxu0 0
  %1637 = vmatpush1.bf16.msra.mxu0 0
  %1638 = vmatprep.subr.bf16.mxu0 0
  %1639 = vmatpush1.bf16.msra.mxu0 0
  %1640 = vmatprep.subr.bf16.mxu0 0
  %1641 = vmatpush1.bf16.msra.mxu0 0
  %1642 = vmatprep.mubr.bf16.mxu0 0
  %1643 = vmatmul.mubr.bf16.gmra.mrb[0].mxu0 %v1545
  %v1644 = vpop.f32.mrb[0].mxu0
  %v1645 = vadd.f32 0.0, %v1644
  %v1646 = vpop.f32.mrb[0].mxu0
  %v1647 = vpop.f32.mrb[0].mxu0
  %v1648 = vadd.f32 0.0, %v1647
  %v1649 = vpop.f32.mrb[0].mxu0
  %1650 = vdwg.mxu0
  %v1651 = vadd.f32 %v1432, %v1645
  %v1652 = vadd.f32 %v1433, %v1648
  %v1653 = vld [vmem:[%s5 + $0x1] ss:$0 sm:$0xff]
  %v1654 = vadd.f32 %v1651, %v1653
  %v1655 = vadd.f32 %v1652, %v1653
  %v1656 = vadd.f32 %v1654, %v282
  %v1657 = vadd.f32 %v1655, %v283
  %v1658 = vld [vmem:[%s5 + $0x3] ss:$0 sm:$0xff]
  %v1659 = vld [vmem:[%s5 + $0x4] ss:$0 sm:$0xff]
  %v1660 = vsel %vm244, %v1656, 0.0
  %1661 = vadd.xlane.f32.xlu0 %v1660
  %v1662 = vpop.xlane.xlu0 %1661
  %v1663 = vsel %vm244, %v1657, 0.0
  %1664 = vadd.xlane.f32.xlu0 %v1663
  %v1665 = vpop.xlane.xlu0 %1664
  %v1666 = vmul.f32 %v1662, %v251
  %v1667 = vmul.f32 %v1665, %v251
  %v1668 = vsub.f32 %v1656, %v1666
  %v1669 = vsub.f32 %v1657, %v1667
  %v1670 = vmul.f32 %v1668, %v1668
  %v1671 = vmul.f32 %v1669, %v1669
  %v1672 = vsel %vm244, %v1670, 0.0
  %1673 = vadd.xlane.f32.xlu0 %v1672
  %v1674 = vpop.xlane.xlu0 %1673
  %v1675 = vsel %vm244, %v1671, 0.0
  %1676 = vadd.xlane.f32.xlu0 %v1675
  %v1677 = vpop.xlane.xlu0 %1676
  %v1678 = vmul.f32 %v1674, %v251
  %v1679 = vmul.f32 %v1677, %v251
  %v1680 = vadd.f32 %v1678, 1e-12
  %v1681 = vadd.f32 %v1679, 1e-12
  %v1682 = vrsqrt.pop %v1680
  %v1683 = vrsqrt.pop %v1681
  %v1684 = vmul.f32 %v1668, %v1682
  %v1685 = vmul.f32 %v1669, %v1683
  %v1686 = vmul.f32 %v1684, %v1658
  %v1687 = vmul.f32 %v1685, %v1658
  %v1688 = vadd.f32 %v1686, %v1659
  %v1689 = vadd.f32 %v1687, %v1659
  %v1690 = vpack.c.bf16 %v1689, %v1688
  %v1691 = vld [vmem:[%s3 + $0x30] sm:$0xf]
  %v1692 = vld [vmem:[%s3 + $0x64] sm:$0xf]
  %v1693 = vld [vmem:[%s3 + $0x98] sm:$0xf]
  %v1694 = vld [vmem:[%s3 + $0xcc] sm:$0xf]
  %v1695 = vld [vmem:[%s5 + $0x60] ss:$0 sm:$0xff]
  %v1700 = vunpack.c.l.b16 %v1691
  %v1701 = vunpack.c.l.b16 %v1692
  %v1702 = vunpack.c.l.b16 %v1693
  %v1703 = vunpack.c.l.b16 %v1694
  %v1704 = vpack.c.b16 %v1701, %v1700
  %v1705 = vpack.c.b16 %v1703, %v1702
  %v1709 = vsel %vm244, %v1690, 0
  %1711 = vmatprep.subr.bf16.mxu0 0
  %1712 = vmatpush1.bf16.msra.mxu0 %v1704
  %1713 = vmatprep.subr.bf16.mxu0 0
  %1714 = vmatpush1.bf16.msra.mxu0 %v1705
  %1715 = vmatprep.subr.bf16.mxu0 0
  %1716 = vmatpush1.bf16.msra.mxu0 0
  %1717 = vmatprep.subr.bf16.mxu0 0
  %1718 = vmatpush1.bf16.msra.mxu0 0
  %1719 = vmatprep.subr.bf16.mxu0 0
  %1720 = vmatpush1.bf16.msra.mxu0 0
  %1721 = vmatprep.subr.bf16.mxu0 0
  %1722 = vmatpush1.bf16.msra.mxu0 0
  %1723 = vmatprep.subr.bf16.mxu0 0
  %1724 = vmatpush1.bf16.msra.mxu0 0
  %1725 = vmatprep.subr.bf16.mxu0 0
  %1726 = vmatpush1.bf16.msra.mxu0 0
  %1727 = vmatprep.subr.bf16.mxu0 0
  %1728 = vmatpush1.bf16.msra.mxu0 0
  %1729 = vmatprep.subr.bf16.mxu0 0
  %1730 = vmatpush1.bf16.msra.mxu0 0
  %1731 = vmatprep.subr.bf16.mxu0 0
  %1732 = vmatpush1.bf16.msra.mxu0 0
  %1733 = vmatprep.subr.bf16.mxu0 0
  %1734 = vmatpush1.bf16.msra.mxu0 0
  %1735 = vmatprep.subr.bf16.mxu0 0
  %1736 = vmatpush1.bf16.msra.mxu0 0
  %1737 = vmatprep.subr.bf16.mxu0 0
  %1738 = vmatpush1.bf16.msra.mxu0 0
  %1739 = vmatprep.subr.bf16.mxu0 0
  %1740 = vmatpush1.bf16.msra.mxu0 0
  %1741 = vmatprep.subr.bf16.mxu0 0
  %1742 = vmatpush1.bf16.msra.mxu0 0
  %1743 = vmatprep.mubr.bf16.mxu0 0
  %1744 = vmatmul.mubr.bf16.gmra.mrb[0].mxu0 %v1709
  %v1745 = vpop.f32.mrb[0].mxu0
  %v1746 = vadd.f32 %v1695, %v1745
  %v1747 = vpop.f32.mrb[0].mxu0
  %v1748 = vpop.f32.mrb[0].mxu0
  %v1749 = vadd.f32 %v1695, %v1748
  %v1750 = vpop.f32.mrb[0].mxu0
  %1751 = vdwg.mxu0
  %v1752 = vmul.f32 %v1746, 0.5
  %v1753 = vmul.f32 %v1749, 0.5
  %v1754 = vmul.f32 %v1746, 0.044715
  %v1755 = vmul.f32 %v1749, 0.044715
  %v1756 = vmul.f32 %v1754, %v1746
  %v1757 = vmul.f32 %v1755, %v1749
  %v1758 = vmul.f32 %v1756, %v1746
  %v1759 = vmul.f32 %v1757, %v1749
  %v1760 = vadd.f32 %v1746, %v1758
  %v1761 = vadd.f32 %v1749, %v1759
  %v1762 = vmul.f32 %v1760, 0.7978846
  %v1763 = vmul.f32 %v1761, 0.7978846
  %v1764 = vtanh.pop %v1762
  %v1765 = vtanh.pop %v1763
  %v1766 = vadd.f32 %v1764, 1.0
  %v1767 = vadd.f32 %v1765, 1.0
  %v1768 = vmul.f32 %v1752, %v1766
  %v1769 = vmul.f32 %v1753, %v1767
  %v1770 = vpack.c.bf16 %v1769, %v1768
  %v1771 = vld [vmem:[%s4 + $0x100] sm:$0xf]
  %v1772 = vld [vmem:[%s4 + $0x104] sm:$0xf]
  %v1773 = vld [vmem:[%s4 + $0x108] sm:$0xf]
  %v1774 = vld [vmem:[%s4 + $0x10c] sm:$0xf]
  %v1775 = vld [vmem:[%s4 + $0x110] sm:$0xf]
  %v1776 = vld [vmem:[%s4 + $0x114] sm:$0xf]
  %v1777 = vld [vmem:[%s4 + $0x118] sm:$0xf]
  %v1778 = vld [vmem:[%s4 + $0x11c] sm:$0xf]
  %v1779 = vld [vmem:[%s4 + $0x120] sm:$0xf]
  %v1780 = vld [vmem:[%s4 + $0x124] sm:$0xf]
  %v1781 = vld [vmem:[%s4 + $0x128] sm:$0xf]
  %v1782 = vld [vmem:[%s4 + $0x12c] sm:$0xf]
  %v1783 = vld [vmem:[%s4 + $0x130] sm:$0xf]
  %v1784 = vld [vmem:[%s4 + $0x134] sm:$0xf]
  %v1785 = vld [vmem:[%s4 + $0x138] sm:$0xf]
  %v1786 = vld [vmem:[%s4 + $0x13c] sm:$0xf]
  %v1787 = vld [vmem:[%s5 + $0x2] ss:$0 sm:$0xff]
  %v1804 = vunpack.c.l.b16 %v1771
  %v1805 = vunpack.c.l.b16 %v1772
  %v1806 = vunpack.c.l.b16 %v1773
  %v1807 = vunpack.c.l.b16 %v1774
  %v1808 = vunpack.c.l.b16 %v1775
  %v1809 = vunpack.c.l.b16 %v1776
  %v1810 = vunpack.c.l.b16 %v1777
  %v1811 = vunpack.c.l.b16 %v1778
  %v1812 = vunpack.c.l.b16 %v1779
  %v1813 = vunpack.c.l.b16 %v1780
  %v1814 = vunpack.c.l.b16 %v1781
  %v1815 = vunpack.c.l.b16 %v1782
  %v1816 = vunpack.c.l.b16 %v1783
  %v1817 = vunpack.c.l.b16 %v1784
  %v1818 = vunpack.c.l.b16 %v1785
  %v1819 = vunpack.c.l.b16 %v1786
  %v1820 = vpack.c.b16 %v1805, %v1804
  %v1821 = vpack.c.b16 %v1807, %v1806
  %v1822 = vpack.c.b16 %v1809, %v1808
  %v1823 = vpack.c.b16 %v1811, %v1810
  %v1824 = vpack.c.b16 %v1813, %v1812
  %v1825 = vpack.c.b16 %v1815, %v1814
  %v1826 = vpack.c.b16 %v1817, %v1816
  %v1827 = vpack.c.b16 %v1819, %v1818
  %1836 = vmatprep.subr.bf16.mxu0 0
  %1837 = vmatpush1.bf16.msra.mxu0 %v1820
  %1838 = vmatprep.subr.bf16.mxu0 0
  %1839 = vmatpush1.bf16.msra.mxu0 %v1821
  %1840 = vmatprep.subr.bf16.mxu0 0
  %1841 = vmatpush1.bf16.msra.mxu0 %v1822
  %1842 = vmatprep.subr.bf16.mxu0 0
  %1843 = vmatpush1.bf16.msra.mxu0 %v1823
  %1844 = vmatprep.subr.bf16.mxu0 0
  %1845 = vmatpush1.bf16.msra.mxu0 %v1824
  %1846 = vmatprep.subr.bf16.mxu0 0
  %1847 = vmatpush1.bf16.msra.mxu0 %v1825
  %1848 = vmatprep.subr.bf16.mxu0 0
  %1849 = vmatpush1.bf16.msra.mxu0 %v1826
  %1850 = vmatprep.subr.bf16.mxu0 0
  %1851 = vmatpush1.bf16.msra.mxu0 %v1827
  %1852 = vmatprep.subr.bf16.mxu0 0
  %1853 = vmatpush1.bf16.msra.mxu0 0
  %1854 = vmatprep.subr.bf16.mxu0 0
  %1855 = vmatpush1.bf16.msra.mxu0 0
  %1856 = vmatprep.subr.bf16.mxu0 0
  %1857 = vmatpush1.bf16.msra.mxu0 0
  %1858 = vmatprep.subr.bf16.mxu0 0
  %1859 = vmatpush1.bf16.msra.mxu0 0
  %1860 = vmatprep.subr.bf16.mxu0 0
  %1861 = vmatpush1.bf16.msra.mxu0 0
  %1862 = vmatprep.subr.bf16.mxu0 0
  %1863 = vmatpush1.bf16.msra.mxu0 0
  %1864 = vmatprep.subr.bf16.mxu0 0
  %1865 = vmatpush1.bf16.msra.mxu0 0
  %1866 = vmatprep.subr.bf16.mxu0 0
  %1867 = vmatpush1.bf16.msra.mxu0 0
  %1868 = vmatprep.mubr.bf16.mxu0 0
  %1869 = vmatmul.mubr.bf16.gmra.mrb[0].mxu0 %v1770
  %v1870 = vpop.f32.mrb[0].mxu0
  %v1871 = vadd.f32 %v1787, %v1870
  %v1872 = vpop.f32.mrb[0].mxu0
  %v1873 = vpop.f32.mrb[0].mxu0
  %v1874 = vadd.f32 %v1787, %v1873
  %v1875 = vpop.f32.mrb[0].mxu0
  %1876 = vdwg.mxu0
  %v1877 = vadd.f32 %v1871, %v1688
  %v1878 = vadd.f32 %v1874, %v1689
  %v1879 = vld [vmem:[%s5 + $0x5] ss:$0 sm:$0xff]
  %v1880 = vld [vmem:[%s5 + $0x6] ss:$0 sm:$0xff]
  %v1881 = vsel %vm244, %v1877, 0.0
  %1882 = vadd.xlane.f32.xlu0 %v1881
  %v1883 = vpop.xlane.xlu0 %1882
  %v1884 = vsel %vm244, %v1878, 0.0
  %1885 = vadd.xlane.f32.xlu0 %v1884
  %v1886 = vpop.xlane.xlu0 %1885
  %v1887 = vmul.f32 %v1883, %v251
  %v1888 = vmul.f32 %v1886, %v251
  %v1889 = vsub.f32 %v1877, %v1887
  %v1890 = vsub.f32 %v1878, %v1888
  %v1891 = vmul.f32 %v1889, %v1889
  %v1892 = vmul.f32 %v1890, %v1890
  %v1893 = vsel %vm244, %v1891, 0.0
  %1894 = vadd.xlane.f32.xlu0 %v1893
  %v1895 = vpop.xlane.xlu0 %1894
  %v1896 = vsel %vm244, %v1892, 0.0
  %1897 = vadd.xlane.f32.xlu0 %v1896
  %v1898 = vpop.xlane.xlu0 %1897
  %v1899 = vmul.f32 %v1895, %v251
  %v1900 = vmul.f32 %v1898, %v251
  %v1901 = vadd.f32 %v1899, 1e-12
  %v1902 = vadd.f32 %v1900, 1e-12
  %v1903 = vrsqrt.pop %v1901
  %v1904 = vrsqrt.pop %v1902
  %v1905 = vmul.f32 %v1889, %v1903
  %v1906 = vmul.f32 %v1890, %v1904
  %v1907 = vmul.f32 %v1905, %v1879
  %v1908 = vmul.f32 %v1906, %v1879
  %v1909 = vadd.f32 %v1907, %v1880
  %v1910 = vadd.f32 %v1908, %v1880
  %v1911 = vpack.c.bf16 %v1910, %v1909
  %s1912 = scalar_lea.vmem %s3, 208
  %v1913 = vld [vmem:[%s1912] sm:$0xff]
  %v1914 = vld [vmem:[%s1912 + $0x8] sm:$0xff]
  %v1915 = vld [vmem:[%s1912 + $0x10] sm:$0xff]
  %v1916 = vld [vmem:[%s1912 + $0x18] sm:$0xff]
  %v1917 = vld [vmem:[%s1912 + $0x20] sm:$0xff]
  %v1918 = vld [vmem:[%s1912 + $0x28] sm:$0xff]
  %v1919 = vld [vmem:[%s1912 + $0x34] sm:$0xff]
  %v1920 = vld [vmem:[%s1912 + $0x3c] sm:$0xff]
  %v1921 = vld [vmem:[%s1912 + $0x44] sm:$0xff]
  %v1922 = vld [vmem:[%s1912 + $0x4c] sm:$0xff]
  %v1923 = vld [vmem:[%s1912 + $0x54] sm:$0xff]
  %v1924 = vld [vmem:[%s1912 + $0x5c] sm:$0xff]
  %v1925 = vld [vmem:[%s1912 + $0x68] sm:$0xff]
  %v1926 = vld [vmem:[%s1912 + $0x70] sm:$0xff]
  %v1927 = vld [vmem:[%s1912 + $0x78] sm:$0xff]
  %v1928 = vld [vmem:[%s1912 + $0x80] sm:$0xff]
  %v1929 = vld [vmem:[%s1912 + $0x88] sm:$0xff]
  %v1930 = vld [vmem:[%s1912 + $0x90] sm:$0xff]
  %v1931 = vld [vmem:[%s1912 + $0x9c] sm:$0xff]
  %v1932 = vld [vmem:[%s1912 + $0xa4] sm:$0xff]
  %v1933 = vld [vmem:[%s1912 + $0xac] sm:$0xff]
  %v1934 = vld [vmem:[%s1912 + $0xb4] sm:$0xff]
  %v1935 = vld [vmem:[%s1912 + $0xbc] sm:$0xff]
  %v1936 = vld [vmem:[%s1912 + $0xc4] sm:$0xff]
  %s1937 = scalar_lea.vmem %s5, 104
  %v1938 = vld [vmem:[%s1937] ss:$8 sm:$0xf]
  %v1939 = vld [vmem:[%s1937] ss:$8 sm:$0xf0]
  %v1940 = vor.u32 %v1938, %v1939
  %s1941 = scalar_lea.vmem %s1937, 64
  %v1942 = vld [vmem:[%s1941] ss:$8 sm:$0xf]
  %v1945 = vlaneseq
  %v1946 = vshrl.u32 %v1945, 7
  %v1947 = vsub.s32 0, %v1946
  %v1948 = vrot.slane %v1940, %v1947
  %v1949 = vlaneseq
  %v1950 = vshrl.u32 %v1949, 7
  %v1951 = vsub.s32 1, %v1950
  %v1952 = vrot.slane %v1940, %v1951
  %v1953 = vlaneseq
  %v1954 = vshrl.u32 %v1953, 7
  %v1955 = vsub.s32 2, %v1954
  %v1956 = vrot.slane %v1940, %v1955
  %v1957 = vlaneseq
  %v1958 = vshrl.u32 %v1957, 7
  %v1959 = vsub.s32 3, %v1958
  %v1960 = vrot.slane %v1940, %v1959
  %v1961 = vlaneseq
  %v1962 = vshrl.u32 %v1961, 7
  %v1963 = vsub.s32 4, %v1962
  %v1964 = vrot.slane %v1940, %v1963
  %v1965 = vlaneseq
  %v1966 = vshrl.u32 %v1965, 7
  %v1967 = vsub.s32 5, %v1966
  %v1968 = vrot.slane %v1940, %v1967
  %v1969 = vlaneseq
  %v1970 = vshrl.u32 %v1969, 7
  %v1971 = vsub.s32 6, %v1970
  %v1972 = vrot.slane %v1940, %v1971
  %v1973 = vlaneseq
  %v1974 = vshrl.u32 %v1973, 7
  %v1975 = vsub.s32 7, %v1974
  %v1976 = vrot.slane %v1940, %v1975
  %v1977 = vlaneseq
  %v1978 = vshrl.u32 %v1977, 7
  %v1979 = vsub.s32 0, %v1978
  %v1980 = vrot.slane %v1942, %v1979
  %v1981 = vlaneseq
  %v1982 = vshrl.u32 %v1981, 7
  %v1983 = vsub.s32 1, %v1982
  %v1984 = vrot.slane %v1942, %v1983
  %v1985 = vlaneseq
  %v1986 = vshrl.u32 %v1985, 7
  %v1987 = vsub.s32 2, %v1986
  %v1988 = vrot.slane %v1942, %v1987
  %v1989 = vlaneseq
  %v1990 = vshrl.u32 %v1989, 7
  %v1991 = vsub.s32 3, %v1990
  %v1992 = vrot.slane %v1942, %v1991
  %v2029 = vunpack.c.l.b16 %v1913
  %v2030 = vunpack.c.h.b16 %v1913
  %v2031 = vunpack.c.l.b16 %v1914
  %v2032 = vunpack.c.h.b16 %v1914
  %v2033 = vunpack.c.l.b16 %v1915
  %v2034 = vunpack.c.h.b16 %v1915
  %v2035 = vunpack.c.l.b16 %v1916
  %v2036 = vunpack.c.h.b16 %v1916
  %v2037 = vunpack.c.l.b16 %v1917
  %v2038 = vunpack.c.h.b16 %v1917
  %v2039 = vunpack.c.l.b16 %v1918
  %v2040 = vunpack.c.h.b16 %v1918
  %v2041 = vunpack.c.l.b16 %v1919
  %v2042 = vunpack.c.h.b16 %v1919
  %v2043 = vunpack.c.l.b16 %v1920
  %v2044 = vunpack.c.h.b16 %v1920
  %v2045 = vunpack.c.l.b16 %v1921
  %v2046 = vunpack.c.h.b16 %v1921
  %v2047 = vunpack.c.l.b16 %v1922
  %v2048 = vunpack.c.h.b16 %v1922
  %v2049 = vunpack.c.l.b16 %v1923
  %v2050 = vunpack.c.h.b16 %v1923
  %v2051 = vunpack.c.l.b16 %v1924
  %v2052 = vunpack.c.h.b16 %v1924
  %v2053 = vunpack.c.l.b16 %v1925
  %v2054 = vunpack.c.h.b16 %v1925
  %v2055 = vunpack.c.l.b16 %v1926
  %v2056 = vunpack.c.h.b16 %v1926
  %v2057 = vunpack.c.l.b16 %v1927
  %v2058 = vunpack.c.h.b16 %v1927
  %v2059 = vunpack.c.l.b16 %v1928
  %v2060 = vunpack.c.h.b16 %v1928
  %v2061 = vunpack.c.l.b16 %v1929
  %v2062 = vunpack.c.h.b16 %v1929
  %v2063 = vunpack.c.l.b16 %v1930
  %v2064 = vunpack.c.h.b16 %v1930
  %v2065 = vunpack.c.l.b16 %v1931
  %v2066 = vunpack.c.h.b16 %v1931
  %v2067 = vunpack.c.l.b16 %v1932
  %v2068 = vunpack.c.h.b16 %v1932
  %v2069 = vunpack.c.l.b16 %v1933
  %v2070 = vunpack.c.h.b16 %v1933
  %v2071 = vunpack.c.l.b16 %v1934
  %v2072 = vunpack.c.h.b16 %v1934
  %v2073 = vunpack.c.l.b16 %v1935
  %v2074 = vunpack.c.h.b16 %v1935
  %v2075 = vunpack.c.l.b16 %v1936
  %v2076 = vunpack.c.h.b16 %v1936
  %v2077 = vpack.c.b16 %v2041, %v2029
  %v2078 = vpack.c.b16 %v2042, %v2030
  %v2079 = vpack.c.b16 %v2043, %v2031
  %v2080 = vpack.c.b16 %v2044, %v2032
  %v2081 = vpack.c.b16 %v2045, %v2033
  %v2082 = vpack.c.b16 %v2046, %v2034
  %v2083 = vpack.c.b16 %v2047, %v2035
  %v2084 = vpack.c.b16 %v2048, %v2036
  %v2085 = vpack.c.b16 %v2049, %v2037
  %v2086 = vpack.c.b16 %v2050, %v2038
  %v2087 = vpack.c.b16 %v2051, %v2039
  %v2088 = vpack.c.b16 %v2052, %v2040
  %v2089 = vpack.c.b16 %v2065, %v2053
  %v2090 = vpack.c.b16 %v2066, %v2054
  %v2091 = vpack.c.b16 %v2067, %v2055
  %v2092 = vpack.c.b16 %v2068, %v2056
  %v2093 = vpack.c.b16 %v2069, %v2057
  %v2094 = vpack.c.b16 %v2070, %v2058
  %v2095 = vpack.c.b16 %v2071, %v2059
  %v2096 = vpack.c.b16 %v2072, %v2060
  %v2097 = vpack.c.b16 %v2073, %v2061
  %v2098 = vpack.c.b16 %v2074, %v2062
  %v2099 = vpack.c.b16 %v2075, %v2063
  %v2100 = vpack.c.b16 %v2076, %v2064
  %v2126 = vsel %vm244, %v1911, 0
  %2128 = vmatprep.subr.bf16.mxu0 %v2078
  %2129 = vmatpush1.bf16.msra.mxu0 %v2077
  %2130 = vmatprep.subr.bf16.mxu0 %v2090
  %2131 = vmatpush1.bf16.msra.mxu0 %v2089
  %2132 = vmatprep.subr.bf16.mxu0 0
  %2133 = vmatpush1.bf16.msra.mxu0 0
  %2134 = vmatprep.subr.bf16.mxu0 0
  %2135 = vmatpush1.bf16.msra.mxu0 0
  %2136 = vmatprep.subr.bf16.mxu0 0
  %2137 = vmatpush1.bf16.msra.mxu0 0
  %2138 = vmatprep.subr.bf16.mxu0 0
  %2139 = vmatpush1.bf16.msra.mxu0 0
  %2140 = vmatprep.subr.bf16.mxu0 0
  %2141 = vmatpush1.bf16.msra.mxu0 0
  %2142 = vmatprep.subr.bf16.mxu0 0
  %2143 = vmatpush1.bf16.msra.mxu0 0
  %2144 = vmatprep.subr.bf16.mxu0 0
  %2145 = vmatpush1.bf16.msra.mxu0 0
  %2146 = vmatprep.subr.bf16.mxu0 0
  %2147 = vmatpush1.bf16.msra.mxu0 0
  %2148 = vmatprep.subr.bf16.mxu0 0
  %2149 = vmatpush1.bf16.msra.mxu0 0
  %2150 = vmatprep.subr.bf16.mxu0 0
  %2151 = vmatpush1.bf16.msra.mxu0 0
  %2152 = vmatprep.subr.bf16.mxu0 0
  %2153 = vmatpush1.bf16.msra.mxu0 0
  %2154 = vmatprep.subr.bf16.mxu0 0
  %2155 = vmatpush1.bf16.msra.mxu0 0
  %2156 = vmatprep.subr.bf16.mxu0 0
  %2157 = vmatpush1.bf16.msra.mxu0 0
  %2158 = vmatprep.subr.bf16.mxu0 0
  %2159 = vmatpush1.bf16.msra.mxu0 0
  %2160 = vmatprep.mubr.bf16.mxu0 0
  %2161 = vmatmul.mubr.bf16.gmra.mrb[0].mxu0 %v2126
  %v2162 = vpop.f32.mrb[0].mxu0
  %v2163 = vadd.f32 %v1948, %v2162
  %v2164 = vpop.f32.mrb[0].mxu0
  %v2165 = vadd.f32 %v1952, %v2164
  %v2166 = vpop.f32.mrb[0].mxu0
  %v2167 = vadd.f32 %v1948, %v2166
  %v2168 = vpop.f32.mrb[0].mxu0
  %v2169 = vadd.f32 %v1952, %v2168
  %2170 = vdwg.mxu0
  %2171 = vmatprep.subr.bf16.mxu0 %v2080
  %2172 = vmatpush1.bf16.msra.mxu0 %v2079
  %2173 = vmatprep.subr.bf16.mxu0 %v2092
  %2174 = vmatpush1.bf16.msra.mxu0 %v2091
  %2175 = vmatprep.subr.bf16.mxu0 0
  %2176 = vmatpush1.bf16.msra.mxu0 0
  %2177 = vmatprep.subr.bf16.mxu0 0
  %2178 = vmatpush1.bf16.msra.mxu0 0
  %2179 = vmatprep.subr.bf16.mxu0 0
  %2180 = vmatpush1.bf16.msra.mxu0 0
  %2181 = vmatprep.subr.bf16.mxu0 0
  %2182 = vmatpush1.bf16.msra.mxu0 0
  %2183 = vmatprep.subr.bf16.mxu0 0
  %2184 = vmatpush1.bf16.msra.mxu0 0
  %2185 = vmatprep.subr.bf16.mxu0 0
  %2186 = vmatpush1.bf16.msra.mxu0 0
  %2187 = vmatprep.subr.bf16.mxu0 0
  %2188 = vmatpush1.bf16.msra.mxu0 0
  %2189 = vmatprep.subr.bf16.mxu0 0
  %2190 = vmatpush1.bf16.msra.mxu0 0
  %2191 = vmatprep.subr.bf16.mxu0 0
  %2192 = vmatpush1.bf16.msra.mxu0 0
  %2193 = vmatprep.subr.bf16.mxu0 0
  %2194 = vmatpush1.bf16.msra.mxu0 0
  %2195 = vmatprep.subr.bf16.mxu0 0
  %2196 = vmatpush1.bf16.msra.mxu0 0
  %2197 = vmatprep.subr.bf16.mxu0 0
  %2198 = vmatpush1.bf16.msra.mxu0 0
  %2199 = vmatprep.subr.bf16.mxu0 0
  %2200 = vmatpush1.bf16.msra.mxu0 0
  %2201 = vmatprep.subr.bf16.mxu0 0
  %2202 = vmatpush1.bf16.msra.mxu0 0
  %2203 = vmatprep.mubr.bf16.mxu0 0
  %2204 = vmatmul.mubr.bf16.gmra.mrb[0].mxu0 %v2126
  %v2205 = vpop.f32.mrb[0].mxu0
  %v2206 = vadd.f32 %v1956, %v2205
  %v2207 = vpop.f32.mrb[0].mxu0
  %v2208 = vadd.f32 %v1960, %v2207
  %v2209 = vpop.f32.mrb[0].mxu0
  %v2210 = vadd.f32 %v1956, %v2209
  %v2211 = vpop.f32.mrb[0].mxu0
  %v2212 = vadd.f32 %v1960, %v2211
  %2213 = vdwg.mxu0
  %2214 = vmatprep.subr.bf16.mxu0 %v2082
  %2215 = vmatpush1.bf16.msra.mxu0 %v2081
  %2216 = vmatprep.subr.bf16.mxu0 %v2094
  %2217 = vmatpush1.bf16.msra.mxu0 %v2093
  %2218 = vmatprep.subr.bf16.mxu0 0
  %2219 = vmatpush1.bf16.msra.mxu0 0
  %2220 = vmatprep.subr.bf16.mxu0 0
  %2221 = vmatpush1.bf16.msra.mxu0 0
  %2222 = vmatprep.subr.bf16.mxu0 0
  %2223 = vmatpush1.bf16.msra.mxu0 0
  %2224 = vmatprep.subr.bf16.mxu0 0
  %2225 = vmatpush1.bf16.msra.mxu0 0
  %2226 = vmatprep.subr.bf16.mxu0 0
  %2227 = vmatpush1.bf16.msra.mxu0 0
  %2228 = vmatprep.subr.bf16.mxu0 0
  %2229 = vmatpush1.bf16.msra.mxu0 0
  %2230 = vmatprep.subr.bf16.mxu0 0
  %2231 = vmatpush1.bf16.msra.mxu0 0
  %2232 = vmatprep.subr.bf16.mxu0 0
  %2233 = vmatpush1.bf16.msra.mxu0 0
  %2234 = vmatprep.subr.bf16.mxu0 0
  %2235 = vmatpush1.bf16.msra.mxu0 0
  %2236 = vmatprep.subr.bf16.mxu0 0
  %2237 = vmatpush1.bf16.msra.mxu0 0
  %2238 = vmatprep.subr.bf16.mxu0 0
  %2239 = vmatpush1.bf16.msra.mxu0 0
  %2240 = vmatprep.subr.bf16.mxu0 0
  %2241 = vmatpush1.bf16.msra.mxu0 0
  %2242 = vmatprep.subr.bf16.mxu0 0
  %2243 = vmatpush1.bf16.msra.mxu0 0
  %2244 = vmatprep.subr.bf16.mxu0 0
  %2245 = vmatpush1.bf16.msra.mxu0 0
  %2246 = vmatprep.mubr.bf16.mxu0 0
  %2247 = vmatmul.mubr.bf16.gmra.mrb[0].mxu0 %v2126
  %v2248 = vpop.f32.mrb[0].mxu0
  %v2249 = vadd.f32 %v1964, %v2248
  %v2250 = vpop.f32.mrb[0].mxu0
  %v2251 = vadd.f32 %v1968, %v2250
  %v2252 = vpop.f32.mrb[0].mxu0
  %v2253 = vadd.f32 %v1964, %v2252
  %v2254 = vpop.f32.mrb[0].mxu0
  %v2255 = vadd.f32 %v1968, %v2254
  %2256 = vdwg.mxu0
  %2257 = vmatprep.subr.bf16.mxu0 %v2084
  %2258 = vmatpush1.bf16.msra.mxu0 %v2083
  %2259 = vmatprep.subr.bf16.mxu0 %v2096
  %2260 = vmatpush1.bf16.msra.mxu0 %v2095
  %2261 = vmatprep.subr.bf16.mxu0 0
  %2262 = vmatpush1.bf16.msra.mxu0 0
  %2263 = vmatprep.subr.bf16.mxu0 0
  %2264 = vmatpush1.bf16.msra.mxu0 0
  %2265 = vmatprep.subr.bf16.mxu0 0
  %2266 = vmatpush1.bf16.msra.mxu0 0
  %2267 = vmatprep.subr.bf16.mxu0 0
  %2268 = vmatpush1.bf16.msra.mxu0 0
  %2269 = vmatprep.subr.bf16.mxu0 0
  %2270 = vmatpush1.bf16.msra.mxu0 0
  %2271 = vmatprep.subr.bf16.mxu0 0
  %2272 = vmatpush1.bf16.msra.mxu0 0
  %2273 = vmatprep.subr.bf16.mxu0 0
  %2274 = vmatpush1.bf16.msra.mxu0 0
  %2275 = vmatprep.subr.bf16.mxu0 0
  %2276 = vmatpush1.bf16.msra.mxu0 0
  %2277 = vmatprep.subr.bf16.mxu0 0
  %2278 = vmatpush1.bf16.msra.mxu0 0
  %2279 = vmatprep.subr.bf16.mxu0 0
  %2280 = vmatpush1.bf16.msra.mxu0 0
  %2281 = vmatprep.subr.bf16.mxu0 0
  %2282 = vmatpush1.bf16.msra.mxu0 0
  %2283 = vmatprep.subr.bf16.mxu0 0
  %2284 = vmatpush1.bf16.msra.mxu0 0
  %2285 = vmatprep.subr.bf16.mxu0 0
  %2286 = vmatpush1.bf16.msra.mxu0 0
  %2287 = vmatprep.subr.bf16.mxu0 0
  %2288 = vmatpush1.bf16.msra.mxu0 0
  %2289 = vmatprep.mubr.bf16.mxu0 0
  %2290 = vmatmul.mubr.bf16.gmra.mrb[0].mxu0 %v2126
  %v2291 = vpop.f32.mrb[0].mxu0
  %v2292 = vadd.f32 %v1972, %v2291
  %v2293 = vpop.f32.mrb[0].mxu0
  %v2294 = vadd.f32 %v1976, %v2293
  %v2295 = vpop.f32.mrb[0].mxu0
  %v2296 = vadd.f32 %v1972, %v2295
  %v2297 = vpop.f32.mrb[0].mxu0
  %v2298 = vadd.f32 %v1976, %v2297
  %2299 = vdwg.mxu0
  %2300 = vmatprep.subr.bf16.mxu0 %v2086
  %2301 = vmatpush1.bf16.msra.mxu0 %v2085
  %2302 = vmatprep.subr.bf16.mxu0 %v2098
  %2303 = vmatpush1.bf16.msra.mxu0 %v2097
  %2304 = vmatprep.subr.bf16.mxu0 0
  %2305 = vmatpush1.bf16.msra.mxu0 0
  %2306 = vmatprep.subr.bf16.mxu0 0
  %2307 = vmatpush1.bf16.msra.mxu0 0
  %2308 = vmatprep.subr.bf16.mxu0 0
  %2309 = vmatpush1.bf16.msra.mxu0 0
  %2310 = vmatprep.subr.bf16.mxu0 0
  %2311 = vmatpush1.bf16.msra.mxu0 0
  %2312 = vmatprep.subr.bf16.mxu0 0
  %2313 = vmatpush1.bf16.msra.mxu0 0
  %2314 = vmatprep.subr.bf16.mxu0 0
  %2315 = vmatpush1.bf16.msra.mxu0 0
  %2316 = vmatprep.subr.bf16.mxu0 0
  %2317 = vmatpush1.bf16.msra.mxu0 0
  %2318 = vmatprep.subr.bf16.mxu0 0
  %2319 = vmatpush1.bf16.msra.mxu0 0
  %2320 = vmatprep.subr.bf16.mxu0 0
  %2321 = vmatpush1.bf16.msra.mxu0 0
  %2322 = vmatprep.subr.bf16.mxu0 0
  %2323 = vmatpush1.bf16.msra.mxu0 0
  %2324 = vmatprep.subr.bf16.mxu0 0
  %2325 = vmatpush1.bf16.msra.mxu0 0
  %2326 = vmatprep.subr.bf16.mxu0 0
  %2327 = vmatpush1.bf16.msra.mxu0 0
  %2328 = vmatprep.subr.bf16.mxu0 0
  %2329 = vmatpush1.bf16.msra.mxu0 0
  %2330 = vmatprep.subr.bf16.mxu0 0
  %2331 = vmatpush1.bf16.msra.mxu0 0
  %2332 = vmatprep.mubr.bf16.mxu0 0
  %2333 = vmatmul.mubr.bf16.gmra.mrb[0].mxu0 %v2126
  %v2334 = vpop.f32.mrb[0].mxu0
  %v2335 = vadd.f32 %v1980, %v2334
  %v2336 = vpop.f32.mrb[0].mxu0
  %v2337 = vadd.f32 %v1984, %v2336
  %v2338 = vpop.f32.mrb[0].mxu0
  %v2339 = vadd.f32 %v1980, %v2338
  %v2340 = vpop.f32.mrb[0].mxu0
  %v2341 = vadd.f32 %v1984, %v2340
  %2342 = vdwg.mxu0
  %2343 = vmatprep.subr.bf16.mxu0 %v2088
  %2344 = vmatpush1.bf16.msra.mxu0 %v2087
  %2345 = vmatprep.subr.bf16.mxu0 %v2100
  %2346 = vmatpush1.bf16.msra.mxu0 %v2099
  %2347 = vmatprep.subr.bf16.mxu0 0
  %2348 = vmatpush1.bf16.msra.mxu0 0
  %2349 = vmatprep.subr.bf16.mxu0 0
  %2350 = vmatpush1.bf16.msra.mxu0 0
  %2351 = vmatprep.subr.bf16.mxu0 0
  %2352 = vmatpush1.bf16.msra.mxu0 0
  %2353 = vmatprep.subr.bf16.mxu0 0
  %2354 = vmatpush1.bf16.msra.mxu0 0
  %2355 = vmatprep.subr.bf16.mxu0 0
  %2356 = vmatpush1.bf16.msra.mxu0 0
  %2357 = vmatprep.subr.bf16.mxu0 0
  %2358 = vmatpush1.bf16.msra.mxu0 0
  %2359 = vmatprep.subr.bf16.mxu0 0
  %2360 = vmatpush1.bf16.msra.mxu0 0
  %2361 = vmatprep.subr.bf16.mxu0 0
  %2362 = vmatpush1.bf16.msra.mxu0 0
  %2363 = vmatprep.subr.bf16.mxu0 0
  %2364 = vmatpush1.bf16.msra.mxu0 0
  %2365 = vmatprep.subr.bf16.mxu0 0
  %2366 = vmatpush1.bf16.msra.mxu0 0
  %2367 = vmatprep.subr.bf16.mxu0 0
  %2368 = vmatpush1.bf16.msra.mxu0 0
  %2369 = vmatprep.subr.bf16.mxu0 0
  %2370 = vmatpush1.bf16.msra.mxu0 0
  %2371 = vmatprep.subr.bf16.mxu0 0
  %2372 = vmatpush1.bf16.msra.mxu0 0
  %2373 = vmatprep.subr.bf16.mxu0 0
  %2374 = vmatpush1.bf16.msra.mxu0 0
  %2375 = vmatprep.mubr.bf16.mxu0 0
  %2376 = vmatmul.mubr.bf16.gmra.mrb[0].mxu0 %v2126
  %v2377 = vpop.f32.mrb[0].mxu0
  %v2378 = vadd.f32 %v1988, %v2377
  %v2379 = vpop.f32.mrb[0].mxu0
  %v2380 = vadd.f32 %v1992, %v2379
  %v2381 = vpop.f32.mrb[0].mxu0
  %v2382 = vadd.f32 %v1988, %v2381
  %v2383 = vpop.f32.mrb[0].mxu0
  %v2384 = vadd.f32 %v1992, %v2383
  %2385 = vdwg.mxu0
  %v2386 = vpack.c.bf16 %v2167, %v2163
  %v2387 = vpack.c.bf16 %v2253, %v2249
  %v2388 = vpack.c.bf16 %v2339, %v2335
  %2389 = vmatprep.subr.bf16.mxu0 0
  %2390 = vmatpush1.bf16.xpose.msra.mxu0 %v2387
  %2391 = vmatprep.subr.bf16.mxu0 0
  %2392 = vmatpush1.bf16.xpose.msra.mxu0 0
  %2393 = vmatprep.subr.bf16.mxu0 0
  %2394 = vmatpush1.bf16.xpose.msra.mxu0 0
  %2395 = vmatprep.subr.bf16.mxu0 0
  %2396 = vmatpush1.bf16.xpose.msra.mxu0 0
  %2397 = vmatprep.subr.bf16.mxu0 0
  %2398 = vmatpush1.bf16.xpose.msra.mxu0 0
  %2399 = vmatprep.subr.bf16.mxu0 0
  %2400 = vmatpush1.bf16.xpose.msra.mxu0 0
  %2401 = vmatprep.subr.bf16.mxu0 0
  %2402 = vmatpush1.bf16.xpose.msra.mxu0 0
  %2403 = vmatprep.subr.bf16.mxu0 0
  %2404 = vmatpush1.bf16.xpose.msra.mxu0 0
  %2405 = vmatprep.subr.bf16.mxu0 0
  %2406 = vmatpush1.bf16.xpose.msra.mxu0 0
  %2407 = vmatprep.subr.bf16.mxu0 0
  %2408 = vmatpush1.bf16.xpose.msra.mxu0 0
  %2409 = vmatprep.subr.bf16.mxu0 0
  %2410 = vmatpush1.bf16.xpose.msra.mxu0 0
  %2411 = vmatprep.subr.bf16.mxu0 0
  %2412 = vmatpush1.bf16.xpose.msra.mxu0 0
  %2413 = vmatprep.subr.bf16.mxu0 0
  %2414 = vmatpush1.bf16.xpose.msra.mxu0 0
  %2415 = vmatprep.subr.bf16.mxu0 0
  %2416 = vmatpush1.bf16.xpose.msra.mxu0 0
  %2417 = vmatprep.subr.bf16.mxu0 0
  %2418 = vmatpush1.bf16.xpose.msra.mxu0 0
  %2419 = vmatprep.subr.bf16.mxu0 0
  %2420 = vmatpush1.bf16.xpose.msra.mxu0 0
  %2421 = vmatprep.mubr.bf16.mxu0 0
  %2422 = vmatmul.mubr.bf16.gmra.mrb[0].mxu0 %v2386
  %v2423 = vpop.f32.mrb[0].mxu0
  %v2424 = vadd.f32 %v306, %v2423
  %v2425 = vpop.f32.mrb[0].mxu0
  %v2426 = vpop.f32.mrb[0].mxu0
  %v2427 = vadd.f32 %v307, %v2426
  %v2428 = vpop.f32.mrb[0].mxu0
  %2429 = vdwg.mxu0
  %v2430 = vsel %vm78, %v2424, -inf
  %2431 = vmax.xlane.f32.xlu0 %v2430
  %v2432 = vpop.xlane.xlu0 %2431
  %v2433 = vsel %vm78, %v2427, -inf
  %2434 = vmax.xlane.f32.xlu0 %v2433
  %v2435 = vpop.xlane.xlu0 %2434
  %v2436 = vsub.f32 %v2424, %v2432
  %v2437 = vsub.f32 %v2427, %v2435
  %v2438 = vmul.f32 %v2436, 1.442695
  %v2439 = vpow.pop %v2438
  %v2440 = vmul.f32 %v2437, 1.442695
  %v2441 = vpow.pop %v2440
  %v2442 = vsel %vm78, %v2439, 0.0
  %2443 = vadd.xlane.f32.xlu0 %v2442
  %v2444 = vpop.xlane.xlu0 %2443
  %v2445 = vsel %vm78, %v2441, 0.0
  %2446 = vadd.xlane.f32.xlu0 %v2445
  %v2447 = vpop.xlane.xlu0 %2446
  %v2448 = vrcp.pop %v2444
  %v2449 = vrcp.pop %v2447
  %v2450 = vmul.f32 %v2439, %v2448
  %v2451 = vmul.f32 %v2441, %v2449
  %v2452 = vpack.c.bf16 %v2451, %v2450
  %v2454 = vsel %vm78, %v2452, 0
  %2456 = vmatprep.subr.bf16.mxu0 0
  %2457 = vmatpush1.bf16.msra.mxu0 %v2388
  %2458 = vmatprep.subr.bf16.mxu0 0
  %2459 = vmatpush1.bf16.msra.mxu0 0
  %2460 = vmatprep.subr.bf16.mxu0 0
  %2461 = vmatpush1.bf16.msra.mxu0 0
  %2462 = vmatprep.subr.bf16.mxu0 0
  %2463 = vmatpush1.bf16.msra.mxu0 0
  %2464 = vmatprep.subr.bf16.mxu0 0
  %2465 = vmatpush1.bf16.msra.mxu0 0
  %2466 = vmatprep.subr.bf16.mxu0 0
  %2467 = vmatpush1.bf16.msra.mxu0 0
  %2468 = vmatprep.subr.bf16.mxu0 0
  %2469 = vmatpush1.bf16.msra.mxu0 0
  %2470 = vmatprep.subr.bf16.mxu0 0
  %2471 = vmatpush1.bf16.msra.mxu0 0
  %2472 = vmatprep.subr.bf16.mxu0 0
  %2473 = vmatpush1.bf16.msra.mxu0 0
  %2474 = vmatprep.subr.bf16.mxu0 0
  %2475 = vmatpush1.bf16.msra.mxu0 0
  %2476 = vmatprep.subr.bf16.mxu0 0
  %2477 = vmatpush1.bf16.msra.mxu0 0
  %2478 = vmatprep.subr.bf16.mxu0 0
  %2479 = vmatpush1.bf16.msra.mxu0 0
  %2480 = vmatprep.subr.bf16.mxu0 0
  %2481 = vmatpush1.bf16.msra.mxu0 0
  %2482 = vmatprep.subr.bf16.mxu0 0
  %2483 = vmatpush1.bf16.msra.mxu0 0
  %2484 = vmatprep.subr.bf16.mxu0 0
  %2485 = vmatpush1.bf16.msra.mxu0 0
  %2486 = vmatprep.subr.bf16.mxu0 0
  %2487 = vmatpush1.bf16.msra.mxu0 0
  %2488 = vmatprep.mubr.bf16.mxu0 0
  %2489 = vmatmul.mubr.bf16.gmra.mrb[0].mxu0 %v2454
  %v2490 = vpop.f32.mrb[0].mxu0
  %v2491 = vadd.f32 0.0, %v2490
  %v2492 = vpop.f32.mrb[0].mxu0
  %v2493 = vpop.f32.mrb[0].mxu0
  %v2494 = vadd.f32 0.0, %v2493
  %v2495 = vpop.f32.mrb[0].mxu0
  %2496 = vdwg.mxu0
  %v2497 = vpack.c.bf16 %v2494, %v2491
  %s2498 = scalar_lea.vmem %s4, 320
  %v2499 = vld [vmem:[%s2498] sm:$0xf]
  %v2500 = vld [vmem:[%s2498 + $0x4] sm:$0xf]
  %v2501 = vld [vmem:[%s2498 + $0x8] sm:$0xf]
  %v2502 = vld [vmem:[%s2498 + $0xc] sm:$0xf]
  %v2503 = vld [vmem:[%s2498 + $0x10] sm:$0xf]
  %v2504 = vld [vmem:[%s2498 + $0x14] sm:$0xf]
  %v2505 = vld [vmem:[%s2498 + $0x18] sm:$0xf]
  %v2506 = vld [vmem:[%s2498 + $0x1c] sm:$0xf]
  %v2507 = vld [vmem:[%s2498 + $0x20] sm:$0xf]
  %v2508 = vld [vmem:[%s2498 + $0x24] sm:$0xf]
  %v2509 = vld [vmem:[%s2498 + $0x28] sm:$0xf]
  %v2510 = vld [vmem:[%s2498 + $0x2c] sm:$0xf]
  %v2511 = vld [vmem:[%s2498 + $0x30] sm:$0xf]
  %v2512 = vld [vmem:[%s2498 + $0x34] sm:$0xf]
  %v2513 = vld [vmem:[%s2498 + $0x38] sm:$0xf]
  %v2514 = vld [vmem:[%s2498 + $0x3c] sm:$0xf]
  %v2515 = vpack.c.bf16 %v2169, %v2165
  %v2516 = vpack.c.bf16 %v2255, %v2251
  %v2517 = vpack.c.bf16 %v2341, %v2337
  %2518 = vmatprep.subr.bf16.mxu0 0
  %2519 = vmatpush1.bf16.xpose.msra.mxu0 %v2516
  %2520 = vmatprep.subr.bf16.mxu0 0
  %2521 = vmatpush1.bf16.xpose.msra.mxu0 0
  %2522 = vmatprep.subr.bf16.mxu0 0
  %2523 = vmatpush1.bf16.xpose.msra.mxu0 0
  %2524 = vmatprep.subr.bf16.mxu0 0
  %2525 = vmatpush1.bf16.xpose.msra.mxu0 0
  %2526 = vmatprep.subr.bf16.mxu0 0
  %2527 = vmatpush1.bf16.xpose.msra.mxu0 0
  %2528 = vmatprep.subr.bf16.mxu0 0
  %2529 = vmatpush1.bf16.xpose.msra.mxu0 0
  %2530 = vmatprep.subr.bf16.mxu0 0
  %2531 = vmatpush1.bf16.xpose.msra.mxu0 0
  %2532 = vmatprep.subr.bf16.mxu0 0
  %2533 = vmatpush1.bf16.xpose.msra.mxu0 0
  %2534 = vmatprep.subr.bf16.mxu0 0
  %2535 = vmatpush1.bf16.xpose.msra.mxu0 0
  %2536 = vmatprep.subr.bf16.mxu0 0
  %2537 = vmatpush1.bf16.xpose.msra.mxu0 0
  %2538 = vmatprep.subr.bf16.mxu0 0
  %2539 = vmatpush1.bf16.xpose.msra.mxu0 0
  %2540 = vmatprep.subr.bf16.mxu0 0
  %2541 = vmatpush1.bf16.xpose.msra.mxu0 0
  %2542 = vmatprep.subr.bf16.mxu0 0
  %2543 = vmatpush1.bf16.xpose.msra.mxu0 0
  %2544 = vmatprep.subr.bf16.mxu0 0
  %2545 = vmatpush1.bf16.xpose.msra.mxu0 0
  %2546 = vmatprep.subr.bf16.mxu0 0
  %2547 = vmatpush1.bf16.xpose.msra.mxu0 0
  %2548 = vmatprep.subr.bf16.mxu0 0
  %2549 = vmatpush1.bf16.xpose.msra.mxu0 0
  %2550 = vmatprep.mubr.bf16.mxu0 0
  %2551 = vmatmul.mubr.bf16.gmra.mrb[0].mxu0 %v2515
  %v2552 = vpop.f32.mrb[0].mxu0
  %v2553 = vadd.f32 %v306, %v2552
  %v2554 = vpop.f32.mrb[0].mxu0
  %v2555 = vpop.f32.mrb[0].mxu0
  %v2556 = vadd.f32 %v307, %v2555
  %v2557 = vpop.f32.mrb[0].mxu0
  %2558 = vdwg.mxu0
  %v2559 = vsel %vm78, %v2553, -inf
  %2560 = vmax.xlane.f32.xlu0 %v2559
  %v2561 = vpop.xlane.xlu0 %2560
  %v2562 = vsel %vm78, %v2556, -inf
  %2563 = vmax.xlane.f32.xlu0 %v2562
  %v2564 = vpop.xlane.xlu0 %2563
  %v2565 = vsub.f32 %v2553, %v2561
  %v2566 = vsub.f32 %v2556, %v2564
  %v2567 = vmul.f32 %v2565, 1.442695
  %v2568 = vpow.pop %v2567
  %v2569 = vmul.f32 %v2566, 1.442695
  %v2570 = vpow.pop %v2569
  %v2571 = vsel %vm78, %v2568, 0.0
  %2572 = vadd.xlane.f32.xlu0 %v2571
  %v2573 = vpop.xlane.xlu0 %2572
  %v2574 = vsel %vm78, %v2570, 0.0
  %2575 = vadd.xlane.f32.xlu0 %v2574
  %v2576 = vpop.xlane.xlu0 %2575
  %v2577 = vrcp.pop %v2573
  %v2578 = vrcp.pop %v2576
  %v2579 = vmul.f32 %v2568, %v2577
  %v2580 = vmul.f32 %v2570, %v2578
  %v2581 = vpack.c.bf16 %v2580, %v2579
  %v2583 = vsel %vm78, %v2581, 0
  %2585 = vmatprep.subr.bf16.mxu0 0
  %2586 = vmatpush1.bf16.msra.mxu0 %v2517
  %2587 = vmatprep.subr.bf16.mxu0 0
  %2588 = vmatpush1.bf16.msra.mxu0 0
  %2589 = vmatprep.subr.bf16.mxu0 0
  %2590 = vmatpush1.bf16.msra.mxu0 0
  %2591 = vmatprep.subr.bf16.mxu0 0
  %2592 = vmatpush1.bf16.msra.mxu0 0
  %2593 = vmatprep.subr.bf16.mxu0 0
  %2594 = vmatpush1.bf16.msra.mxu0 0
  %2595 = vmatprep.subr.bf16.mxu0 0
  %2596 = vmatpush1.bf16.msra.mxu0 0
  %2597 = vmatprep.subr.bf16.mxu0 0
  %2598 = vmatpush1.bf16.msra.mxu0 0
  %2599 = vmatprep.subr.bf16.mxu0 0
  %2600 = vmatpush1.bf16.msra.mxu0 0
  %2601 = vmatprep.subr.bf16.mxu0 0
  %2602 = vmatpush1.bf16.msra.mxu0 0
  %2603 = vmatprep.subr.bf16.mxu0 0
  %2604 = vmatpush1.bf16.msra.mxu0 0
  %2605 = vmatprep.subr.bf16.mxu0 0
  %2606 = vmatpush1.bf16.msra.mxu0 0
  %2607 = vmatprep.subr.bf16.mxu0 0
  %2608 = vmatpush1.bf16.msra.mxu0 0
  %2609 = vmatprep.subr.bf16.mxu0 0
  %2610 = vmatpush1.bf16.msra.mxu0 0
  %2611 = vmatprep.subr.bf16.mxu0 0
  %2612 = vmatpush1.bf16.msra.mxu0 0
  %2613 = vmatprep.subr.bf16.mxu0 0
  %2614 = vmatpush1.bf16.msra.mxu0 0
  %2615 = vmatprep.subr.bf16.mxu0 0
  %2616 = vmatpush1.bf16.msra.mxu0 0
  %2617 = vmatprep.mubr.bf16.mxu0 0
  %2618 = vmatmul.mubr.bf16.gmra.mrb[0].mxu0 %v2583
  %v2619 = vpop.f32.mrb[0].mxu0
  %v2620 = vadd.f32 0.0, %v2619
  %v2621 = vpop.f32.mrb[0].mxu0
  %v2622 = vpop.f32.mrb[0].mxu0
  %v2623 = vadd.f32 0.0, %v2622
  %v2624 = vpop.f32.mrb[0].mxu0
  %2625 = vdwg.mxu0
  %v2626 = vpack.c.bf16 %v2623, %v2620
  %v2627 = vld [vmem:[%s2498 + $0x40] sm:$0xf]
  %v2628 = vld [vmem:[%s2498 + $0x44] sm:$0xf]
  %v2629 = vld [vmem:[%s2498 + $0x48] sm:$0xf]
  %v2630 = vld [vmem:[%s2498 + $0x4c] sm:$0xf]
  %v2631 = vld [vmem:[%s2498 + $0x50] sm:$0xf]
  %v2632 = vld [vmem:[%s2498 + $0x54] sm:$0xf]
  %v2633 = vld [vmem:[%s2498 + $0x58] sm:$0xf]
  %v2634 = vld [vmem:[%s2498 + $0x5c] sm:$0xf]
  %v2635 = vld [vmem:[%s2498 + $0x60] sm:$0xf]
  %v2636 = vld [vmem:[%s2498 + $0x64] sm:$0xf]
  %v2637 = vld [vmem:[%s2498 + $0x68] sm:$0xf]
  %v2638 = vld [vmem:[%s2498 + $0x6c] sm:$0xf]
  %v2639 = vld [vmem:[%s2498 + $0x70] sm:$0xf]
  %v2640 = vld [vmem:[%s2498 + $0x74] sm:$0xf]
  %v2641 = vld [vmem:[%s2498 + $0x78] sm:$0xf]
  %v2642 = vld [vmem:[%s2498 + $0x7c] sm:$0xf]
  %v2659 = vunpack.c.l.b16 %v2627
  %v2660 = vunpack.c.l.b16 %v2628
  %v2661 = vunpack.c.l.b16 %v2629
  %v2662 = vunpack.c.l.b16 %v2630
  %v2663 = vunpack.c.l.b16 %v2631
  %v2664 = vunpack.c.l.b16 %v2632
  %v2665 = vunpack.c.l.b16 %v2633
  %v2666 = vunpack.c.l.b16 %v2634
  %v2667 = vunpack.c.l.b16 %v2635
  %v2668 = vunpack.c.l.b16 %v2636
  %v2669 = vunpack.c.l.b16 %v2637
  %v2670 = vunpack.c.l.b16 %v2638
  %v2671 = vunpack.c.l.b16 %v2639
  %v2672 = vunpack.c.l.b16 %v2640
  %v2673 = vunpack.c.l.b16 %v2641
  %v2674 = vunpack.c.l.b16 %v2642
  %v2675 = vpack.c.b16 %v2660, %v2659
  %v2676 = vpack.c.b16 %v2662, %v2661
  %v2677 = vpack.c.b16 %v2664, %v2663
  %v2678 = vpack.c.b16 %v2666, %v2665
  %v2679 = vpack.c.b16 %v2668, %v2667
  %v2680 = vpack.c.b16 %v2670, %v2669
  %v2681 = vpack.c.b16 %v2672, %v2671
  %v2682 = vpack.c.b16 %v2674, %v2673
  %2691 = vmatprep.subr.bf16.mxu0 0
  %2692 = vmatpush1.bf16.msra.mxu0 %v2675
  %2693 = vmatprep.subr.bf16.mxu0 0
  %2694 = vmatpush1.bf16.msra.mxu0 %v2676
  %2695 = vmatprep.subr.bf16.mxu0 0
  %2696 = vmatpush1.bf16.msra.mxu0 %v2677
  %2697 = vmatprep.subr.bf16.mxu0 0
  %2698 = vmatpush1.bf16.msra.mxu0 %v2678
  %2699 = vmatprep.subr.bf16.mxu0 0
  %2700 = vmatpush1.bf16.msra.mxu0 %v2679
  %2701 = vmatprep.subr.bf16.mxu0 0
  %2702 = vmatpush1.bf16.msra.mxu0 %v2680
  %2703 = vmatprep.subr.bf16.mxu0 0
  %2704 = vmatpush1.bf16.msra.mxu0 %v2681
  %2705 = vmatprep.subr.bf16.mxu0 0
  %2706 = vmatpush1.bf16.msra.mxu0 %v2682
  %2707 = vmatprep.subr.bf16.mxu0 0
  %2708 = vmatpush1.bf16.msra.mxu0 0
  %2709 = vmatprep.subr.bf16.mxu0 0
  %2710 = vmatpush1.bf16.msra.mxu0 0
  %2711 = vmatprep.subr.bf16.mxu0 0
  %2712 = vmatpush1.bf16.msra.mxu0 0
  %2713 = vmatprep.subr.bf16.mxu0 0
  %2714 = vmatpush1.bf16.msra.mxu0 0
  %2715 = vmatprep.subr.bf16.mxu0 0
  %2716 = vmatpush1.bf16.msra.mxu0 0
  %2717 = vmatprep.subr.bf16.mxu0 0
  %2718 = vmatpush1.bf16.msra.mxu0 0
  %2719 = vmatprep.subr.bf16.mxu0 0
  %2720 = vmatpush1.bf16.msra.mxu0 0
  %2721 = vmatprep.subr.bf16.mxu0 0
  %2722 = vmatpush1.bf16.msra.mxu0 0
  %2723 = vmatprep.mubr.bf16.mxu0 0
  %2724 = vmatmul.mubr.bf16.gmra.mrb[0].mxu0 %v2626
  %v2725 = vpop.f32.mrb[0].mxu0
  %v2726 = vadd.f32 0.0, %v2725
  %v2727 = vpop.f32.mrb[0].mxu0
  %v2728 = vpop.f32.mrb[0].mxu0
  %v2729 = vadd.f32 0.0, %v2728
  %v2730 = vpop.f32.mrb[0].mxu0
  %2731 = vdwg.mxu0
  %v2748 = vunpack.c.l.b16 %v2499
  %v2749 = vunpack.c.l.b16 %v2500
  %v2750 = vunpack.c.l.b16 %v2501
  %v2751 = vunpack.c.l.b16 %v2502
  %v2752 = vunpack.c.l.b16 %v2503
  %v2753 = vunpack.c.l.b16 %v2504
  %v2754 = vunpack.c.l.b16 %v2505
  %v2755 = vunpack.c.l.b16 %v2506
  %v2756 = vunpack.c.l.b16 %v2507
  %v2757 = vunpack.c.l.b16 %v2508
  %v2758 = vunpack.c.l.b16 %v2509
  %v2759 = vunpack.c.l.b16 %v2510
  %v2760 = vunpack.c.l.b16 %v2511
  %v2761 = vunpack.c.l.b16 %v2512
  %v2762 = vunpack.c.l.b16 %v2513
  %v2763 = vunpack.c.l.b16 %v2514
  %v2764 = vpack.c.b16 %v2749, %v2748
  %v2765 = vpack.c.b16 %v2751, %v2750
  %v2766 = vpack.c.b16 %v2753, %v2752
  %v2767 = vpack.c.b16 %v2755, %v2754
  %v2768 = vpack.c.b16 %v2757, %v2756
  %v2769 = vpack.c.b16 %v2759, %v2758
  %v2770 = vpack.c.b16 %v2761, %v2760
  %v2771 = vpack.c.b16 %v2763, %v2762
  %2780 = vmatprep.subr.bf16.mxu0 0
  %2781 = vmatpush1.bf16.msra.mxu0 %v2764
  %2782 = vmatprep.subr.bf16.mxu0 0
  %2783 = vmatpush1.bf16.msra.mxu0 %v2765
  %2784 = vmatprep.subr.bf16.mxu0 0
  %2785 = vmatpush1.bf16.msra.mxu0 %v2766
  %2786 = vmatprep.subr.bf16.mxu0 0
  %2787 = vmatpush1.bf16.msra.mxu0 %v2767
  %2788 = vmatprep.subr.bf16.mxu0 0
  %2789 = vmatpush1.bf16.msra.mxu0 %v2768
  %2790 = vmatprep.subr.bf16.mxu0 0
  %2791 = vmatpush1.bf16.msra.mxu0 %v2769
  %2792 = vmatprep.subr.bf16.mxu0 0
  %2793 = vmatpush1.bf16.msra.mxu0 %v2770
  %2794 = vmatprep.subr.bf16.mxu0 0
  %2795 = vmatpush1.bf16.msra.mxu0 %v2771
  %2796 = vmatprep.subr.bf16.mxu0 0
  %2797 = vmatpush1.bf16.msra.mxu0 0
  %2798 = vmatprep.subr.bf16.mxu0 0
  %2799 = vmatpush1.bf16.msra.mxu0 0
  %2800 = vmatprep.subr.bf16.mxu0 0
  %2801 = vmatpush1.bf16.msra.mxu0 0
  %2802 = vmatprep.subr.bf16.mxu0 0
  %2803 = vmatpush1.bf16.msra.mxu0 0
  %2804 = vmatprep.subr.bf16.mxu0 0
  %2805 = vmatpush1.bf16.msra.mxu0 0
  %2806 = vmatprep.subr.bf16.mxu0 0
  %2807 = vmatpush1.bf16.msra.mxu0 0
  %2808 = vmatprep.subr.bf16.mxu0 0
  %2809 = vmatpush1.bf16.msra.mxu0 0
  %2810 = vmatprep.subr.bf16.mxu0 0
  %2811 = vmatpush1.bf16.msra.mxu0 0
  %2812 = vmatprep.mubr.bf16.mxu0 0
  %2813 = vmatmul.mubr.bf16.gmra.mrb[0].mxu0 %v2497
  %v2814 = vpop.f32.mrb[0].mxu0
  %v2815 = vadd.f32 %v2726, %v2814
  %v2816 = vpop.f32.mrb[0].mxu0
  %v2817 = vpop.f32.mrb[0].mxu0
  %v2818 = vadd.f32 %v2729, %v2817
  %v2819 = vpop.f32.mrb[0].mxu0
  %2820 = vdwg.mxu0
  %v2821 = vpack.c.bf16 %v2210, %v2206
  %v2822 = vpack.c.bf16 %v2296, %v2292
  %v2823 = vpack.c.bf16 %v2382, %v2378
  %2824 = vmatprep.subr.bf16.mxu0 0
  %2825 = vmatpush1.bf16.xpose.msra.mxu0 %v2822
  %2826 = vmatprep.subr.bf16.mxu0 0
  %2827 = vmatpush1.bf16.xpose.msra.mxu0 0
  %2828 = vmatprep.subr.bf16.mxu0 0
  %2829 = vmatpush1.bf16.xpose.msra.mxu0 0
  %2830 = vmatprep.subr.bf16.mxu0 0
  %2831 = vmatpush1.bf16.xpose.msra.mxu0 0
  %2832 = vmatprep.subr.bf16.mxu0 0
  %2833 = vmatpush1.bf16.xpose.msra.mxu0 0
  %2834 = vmatprep.subr.bf16.mxu0 0
  %2835 = vmatpush1.bf16.xpose.msra.mxu0 0
  %2836 = vmatprep.subr.bf16.mxu0 0
  %2837 = vmatpush1.bf16.xpose.msra.mxu0 0
  %2838 = vmatprep.subr.bf16.mxu0 0
  %2839 = vmatpush1.bf16.xpose.msra.mxu0 0
  %2840 = vmatprep.subr.bf16.mxu0 0
  %2841 = vmatpush1.bf16.xpose.msra.mxu0 0
  %2842 = vmatprep.subr.bf16.mxu0 0
  %2843 = vmatpush1.bf16.xpose.msra.mxu0 0
  %2844 = vmatprep.subr.bf16.mxu0 0
  %2845 = vmatpush1.bf16.xpose.msra.mxu0 0
  %2846 = vmatprep.subr.bf16.mxu0 0
  %2847 = vmatpush1.bf16.xpose.msra.mxu0 0
  %2848 = vmatprep.subr.bf16.mxu0 0
  %2849 = vmatpush1.bf16.xpose.msra.mxu0 0
  %2850 = vmatprep.subr.bf16.mxu0 0
  %2851 = vmatpush1.bf16.xpose.msra.mxu0 0
  %2852 = vmatprep.subr.bf16.mxu0 0
  %2853 = vmatpush1.bf16.xpose.msra.mxu0 0
  %2854 = vmatprep.subr.bf16.mxu0 0
  %2855 = vmatpush1.bf16.xpose.msra.mxu0 0
  %2856 = vmatprep.mubr.bf16.mxu0 0
  %2857 = vmatmul.mubr.bf16.gmra.mrb[0].mxu0 %v2821
  %v2858 = vpop.f32.mrb[0].mxu0
  %v2859 = vadd.f32 %v306, %v2858
  %v2860 = vpop.f32.mrb[0].mxu0
  %v2861 = vpop.f32.mrb[0].mxu0
  %v2862 = vadd.f32 %v307, %v2861
  %v2863 = vpop.f32.mrb[0].mxu0
  %2864 = vdwg.mxu0
  %v2865 = vsel %vm78, %v2859, -inf
  %2866 = vmax.xlane.f32.xlu0 %v2865
  %v2867 = vpop.xlane.xlu0 %2866
  %v2868 = vsel %vm78, %v2862, -inf
  %2869 = vmax.xlane.f32.xlu0 %v2868
  %v2870 = vpop.xlane.xlu0 %2869
  %v2871 = vsub.f32 %v2859, %v2867
  %v2872 = vsub.f32 %v2862, %v2870
  %v2873 = vmul.f32 %v2871, 1.442695
  %v2874 = vpow.pop %v2873
  %v2875 = vmul.f32 %v2872, 1.442695
  %v2876 = vpow.pop %v2875
  %v2877 = vsel %vm78, %v2874, 0.0
  %2878 = vadd.xlane.f32.xlu0 %v2877
  %v2879 = vpop.xlane.xlu0 %2878
  %v2880 = vsel %vm78, %v2876, 0.0
  %2881 = vadd.xlane.f32.xlu0 %v2880
  %v2882 = vpop.xlane.xlu0 %2881
  %v2883 = vrcp.pop %v2879
  %v2884 = vrcp.pop %v2882
  %v2885 = vmul.f32 %v2874, %v2883
  %v2886 = vmul.f32 %v2876, %v2884
  %v2887 = vpack.c.bf16 %v2886, %v2885
  %v2889 = vsel %vm78, %v2887, 0
  %2891 = vmatprep.subr.bf16.mxu0 0
  %2892 = vmatpush1.bf16.msra.mxu0 %v2823
  %2893 = vmatprep.subr.bf16.mxu0 0
  %2894 = vmatpush1.bf16.msra.mxu0 0
  %2895 = vmatprep.subr.bf16.mxu0 0
  %2896 = vmatpush1.bf16.msra.mxu0 0
  %2897 = vmatprep.subr.bf16.mxu0 0
  %2898 = vmatpush1.bf16.msra.mxu0 0
  %2899 = vmatprep.subr.bf16.mxu0 0
  %2900 = vmatpush1.bf16.msra.mxu0 0
  %2901 = vmatprep.subr.bf16.mxu0 0
  %2902 = vmatpush1.bf16.msra.mxu0 0
  %2903 = vmatprep.subr.bf16.mxu0 0
  %2904 = vmatpush1.bf16.msra.mxu0 0
  %2905 = vmatprep.subr.bf16.mxu0 0
  %2906 = vmatpush1.bf16.msra.mxu0 0
  %2907 = vmatprep.subr.bf16.mxu0 0
  %2908 = vmatpush1.bf16.msra.mxu0 0
  %2909 = vmatprep.subr.bf16.mxu0 0
  %2910 = vmatpush1.bf16.msra.mxu0 0
  %2911 = vmatprep.subr.bf16.mxu0 0
  %2912 = vmatpush1.bf16.msra.mxu0 0
  %2913 = vmatprep.subr.bf16.mxu0 0
  %2914 = vmatpush1.bf16.msra.mxu0 0
  %2915 = vmatprep.subr.bf16.mxu0 0
  %2916 = vmatpush1.bf16.msra.mxu0 0
  %2917 = vmatprep.subr.bf16.mxu0 0
  %2918 = vmatpush1.bf16.msra.mxu0 0
  %2919 = vmatprep.subr.bf16.mxu0 0
  %2920 = vmatpush1.bf16.msra.mxu0 0
  %2921 = vmatprep.subr.bf16.mxu0 0
  %2922 = vmatpush1.bf16.msra.mxu0 0
  %2923 = vmatprep.mubr.bf16.mxu0 0
  %2924 = vmatmul.mubr.bf16.gmra.mrb[0].mxu0 %v2889
  %v2925 = vpop.f32.mrb[0].mxu0
  %v2926 = vadd.f32 0.0, %v2925
  %v2927 = vpop.f32.mrb[0].mxu0
  %v2928 = vpop.f32.mrb[0].mxu0
  %v2929 = vadd.f32 0.0, %v2928
  %v2930 = vpop.f32.mrb[0].mxu0
  %2931 = vdwg.mxu0
  %v2932 = vpack.c.bf16 %v2929, %v2926
  %v2933 = vld [vmem:[%s2498 + $0x80] sm:$0xf]
  %v2934 = vld [vmem:[%s2498 + $0x84] sm:$0xf]
  %v2935 = vld [vmem:[%s2498 + $0x88] sm:$0xf]
  %v2936 = vld [vmem:[%s2498 + $0x8c] sm:$0xf]
  %v2937 = vld [vmem:[%s2498 + $0x90] sm:$0xf]
  %v2938 = vld [vmem:[%s2498 + $0x94] sm:$0xf]
  %v2939 = vld [vmem:[%s2498 + $0x98] sm:$0xf]
  %v2940 = vld [vmem:[%s2498 + $0x9c] sm:$0xf]
  %v2941 = vld [vmem:[%s2498 + $0xa0] sm:$0xf]
  %v2942 = vld [vmem:[%s2498 + $0xa4] sm:$0xf]
  %v2943 = vld [vmem:[%s2498 + $0xa8] sm:$0xf]
  %v2944 = vld [vmem:[%s2498 + $0xac] sm:$0xf]
  %v2945 = vld [vmem:[%s2498 + $0xb0] sm:$0xf]
  %v2946 = vld [vmem:[%s2498 + $0xb4] sm:$0xf]
  %v2947 = vld [vmem:[%s2498 + $0xb8] sm:$0xf]
  %v2948 = vld [vmem:[%s2498 + $0xbc] sm:$0xf]
  %v2965 = vunpack.c.l.b16 %v2933
  %v2966 = vunpack.c.l.b16 %v2934
  %v2967 = vunpack.c.l.b16 %v2935
  %v2968 = vunpack.c.l.b16 %v2936
  %v2969 = vunpack.c.l.b16 %v2937
  %v2970 = vunpack.c.l.b16 %v2938
  %v2971 = vunpack.c.l.b16 %v2939
  %v2972 = vunpack.c.l.b16 %v2940
  %v2973 = vunpack.c.l.b16 %v2941
  %v2974 = vunpack.c.l.b16 %v2942
  %v2975 = vunpack.c.l.b16 %v2943
  %v2976 = vunpack.c.l.b16 %v2944
  %v2977 = vunpack.c.l.b16 %v2945
  %v2978 = vunpack.c.l.b16 %v2946
  %v2979 = vunpack.c.l.b16 %v2947
  %v2980 = vunpack.c.l.b16 %v2948
  %v2981 = vpack.c.b16 %v2966, %v2965
  %v2982 = vpack.c.b16 %v2968, %v2967
  %v2983 = vpack.c.b16 %v2970, %v2969
  %v2984 = vpack.c.b16 %v2972, %v2971
  %v2985 = vpack.c.b16 %v2974, %v2973
  %v2986 = vpack.c.b16 %v2976, %v2975
  %v2987 = vpack.c.b16 %v2978, %v2977
  %v2988 = vpack.c.b16 %v2980, %v2979
  %2997 = vmatprep.subr.bf16.mxu0 0
  %2998 = vmatpush1.bf16.msra.mxu0 %v2981
  %2999 = vmatprep.subr.bf16.mxu0 0
  %3000 = vmatpush1.bf16.msra.mxu0 %v2982
  %3001 = vmatprep.subr.bf16.mxu0 0
  %3002 = vmatpush1.bf16.msra.mxu0 %v2983
  %3003 = vmatprep.subr.bf16.mxu0 0
  %3004 = vmatpush1.bf16.msra.mxu0 %v2984
  %3005 = vmatprep.subr.bf16.mxu0 0
  %3006 = vmatpush1.bf16.msra.mxu0 %v2985
  %3007 = vmatprep.subr.bf16.mxu0 0
  %3008 = vmatpush1.bf16.msra.mxu0 %v2986
  %3009 = vmatprep.subr.bf16.mxu0 0
  %3010 = vmatpush1.bf16.msra.mxu0 %v2987
  %3011 = vmatprep.subr.bf16.mxu0 0
  %3012 = vmatpush1.bf16.msra.mxu0 %v2988
  %3013 = vmatprep.subr.bf16.mxu0 0
  %3014 = vmatpush1.bf16.msra.mxu0 0
  %3015 = vmatprep.subr.bf16.mxu0 0
  %3016 = vmatpush1.bf16.msra.mxu0 0
  %3017 = vmatprep.subr.bf16.mxu0 0
  %3018 = vmatpush1.bf16.msra.mxu0 0
  %3019 = vmatprep.subr.bf16.mxu0 0
  %3020 = vmatpush1.bf16.msra.mxu0 0
  %3021 = vmatprep.subr.bf16.mxu0 0
  %3022 = vmatpush1.bf16.msra.mxu0 0
  %3023 = vmatprep.subr.bf16.mxu0 0
  %3024 = vmatpush1.bf16.msra.mxu0 0
  %3025 = vmatprep.subr.bf16.mxu0 0
  %3026 = vmatpush1.bf16.msra.mxu0 0
  %3027 = vmatprep.subr.bf16.mxu0 0
  %3028 = vmatpush1.bf16.msra.mxu0 0
  %3029 = vmatprep.mubr.bf16.mxu0 0
  %3030 = vmatmul.mubr.bf16.gmra.mrb[0].mxu0 %v2932
  %v3031 = vpop.f32.mrb[0].mxu0
  %v3032 = vadd.f32 0.0, %v3031
  %v3033 = vpop.f32.mrb[0].mxu0
  %v3034 = vpop.f32.mrb[0].mxu0
  %v3035 = vadd.f32 0.0, %v3034
  %v3036 = vpop.f32.mrb[0].mxu0
  %3037 = vdwg.mxu0
  %v3038 = vadd.f32 %v2815, %v3032
  %v3039 = vadd.f32 %v2818, %v3035
  %v3040 = vpack.c.bf16 %v2212, %v2208
  %v3041 = vpack.c.bf16 %v2298, %v2294
  %v3042 = vpack.c.bf16 %v2384, %v2380
  %3043 = vmatprep.subr.bf16.mxu0 0
  %3044 = vmatpush1.bf16.xpose.msra.mxu0 %v3041
  %3045 = vmatprep.subr.bf16.mxu0 0
  %3046 = vmatpush1.bf16.xpose.msra.mxu0 0
  %3047 = vmatprep.subr.bf16.mxu0 0
  %3048 = vmatpush1.bf16.xpose.msra.mxu0 0
  %3049 = vmatprep.subr.bf16.mxu0 0
  %3050 = vmatpush1.bf16.xpose.msra.mxu0 0
  %3051 = vmatprep.subr.bf16.mxu0 0
  %3052 = vmatpush1.bf16.xpose.msra.mxu0 0
  %3053 = vmatprep.subr.bf16.mxu0 0
  %3054 = vmatpush1.bf16.xpose.msra.mxu0 0
  %3055 = vmatprep.subr.bf16.mxu0 0
  %3056 = vmatpush1.bf16.xpose.msra.mxu0 0
  %3057 = vmatprep.subr.bf16.mxu0 0
  %3058 = vmatpush1.bf16.xpose.msra.mxu0 0
  %3059 = vmatprep.subr.bf16.mxu0 0
  %3060 = vmatpush1.bf16.xpose.msra.mxu0 0
  %3061 = vmatprep.subr.bf16.mxu0 0
  %3062 = vmatpush1.bf16.xpose.msra.mxu0 0
  %3063 = vmatprep.subr.bf16.mxu0 0
  %3064 = vmatpush1.bf16.xpose.msra.mxu0 0
  %3065 = vmatprep.subr.bf16.mxu0 0
  %3066 = vmatpush1.bf16.xpose.msra.mxu0 0
  %3067 = vmatprep.subr.bf16.mxu0 0
  %3068 = vmatpush1.bf16.xpose.msra.mxu0 0
  %3069 = vmatprep.subr.bf16.mxu0 0
  %3070 = vmatpush1.bf16.xpose.msra.mxu0 0
  %3071 = vmatprep.subr.bf16.mxu0 0
  %3072 = vmatpush1.bf16.xpose.msra.mxu0 0
  %3073 = vmatprep.subr.bf16.mxu0 0
  %3074 = vmatpush1.bf16.xpose.msra.mxu0 0
  %3075 = vmatprep.mubr.bf16.mxu0 0
  %3076 = vmatmul.mubr.bf16.gmra.mrb[0].mxu0 %v3040
  %v3077 = vpop.f32.mrb[0].mxu0
  %v3078 = vadd.f32 %v306, %v3077
  %v3079 = vpop.f32.mrb[0].mxu0
  %v3080 = vpop.f32.mrb[0].mxu0
  %v3081 = vadd.f32 %v307, %v3080
  %v3082 = vpop.f32.mrb[0].mxu0
  %3083 = vdwg.mxu0
  %v3084 = vsel %vm78, %v3078, -inf
  %3085 = vmax.xlane.f32.xlu0 %v3084
  %v3086 = vpop.xlane.xlu0 %3085
  %v3087 = vsel %vm78, %v3081, -inf
  %3088 = vmax.xlane.f32.xlu0 %v3087
  %v3089 = vpop.xlane.xlu0 %3088
  %v3090 = vsub.f32 %v3078, %v3086
  %v3091 = vsub.f32 %v3081, %v3089
  %v3092 = vmul.f32 %v3090, 1.442695
  %v3093 = vpow.pop %v3092
  %v3094 = vmul.f32 %v3091, 1.442695
  %v3095 = vpow.pop %v3094
  %v3096 = vsel %vm78, %v3093, 0.0
  %3097 = vadd.xlane.f32.xlu0 %v3096
  %v3098 = vpop.xlane.xlu0 %3097
  %v3099 = vsel %vm78, %v3095, 0.0
  %3100 = vadd.xlane.f32.xlu0 %v3099
  %v3101 = vpop.xlane.xlu0 %3100
  %v3102 = vrcp.pop %v3098
  %v3103 = vrcp.pop %v3101
  %v3104 = vmul.f32 %v3093, %v3102
  %v3105 = vmul.f32 %v3095, %v3103
  %v3106 = vpack.c.bf16 %v3105, %v3104
  %v3108 = vsel %vm78, %v3106, 0
  %3110 = vmatprep.subr.bf16.mxu0 0
  %3111 = vmatpush1.bf16.msra.mxu0 %v3042
  %3112 = vmatprep.subr.bf16.mxu0 0
  %3113 = vmatpush1.bf16.msra.mxu0 0
  %3114 = vmatprep.subr.bf16.mxu0 0
  %3115 = vmatpush1.bf16.msra.mxu0 0
  %3116 = vmatprep.subr.bf16.mxu0 0
  %3117 = vmatpush1.bf16.msra.mxu0 0
  %3118 = vmatprep.subr.bf16.mxu0 0
  %3119 = vmatpush1.bf16.msra.mxu0 0
  %3120 = vmatprep.subr.bf16.mxu0 0
  %3121 = vmatpush1.bf16.msra.mxu0 0
  %3122 = vmatprep.subr.bf16.mxu0 0
  %3123 = vmatpush1.bf16.msra.mxu0 0
  %3124 = vmatprep.subr.bf16.mxu0 0
  %3125 = vmatpush1.bf16.msra.mxu0 0
  %3126 = vmatprep.subr.bf16.mxu0 0
  %3127 = vmatpush1.bf16.msra.mxu0 0
  %3128 = vmatprep.subr.bf16.mxu0 0
  %3129 = vmatpush1.bf16.msra.mxu0 0
  %3130 = vmatprep.subr.bf16.mxu0 0
  %3131 = vmatpush1.bf16.msra.mxu0 0
  %3132 = vmatprep.subr.bf16.mxu0 0
  %3133 = vmatpush1.bf16.msra.mxu0 0
  %3134 = vmatprep.subr.bf16.mxu0 0
  %3135 = vmatpush1.bf16.msra.mxu0 0
  %3136 = vmatprep.subr.bf16.mxu0 0
  %3137 = vmatpush1.bf16.msra.mxu0 0
  %3138 = vmatprep.subr.bf16.mxu0 0
  %3139 = vmatpush1.bf16.msra.mxu0 0
  %3140 = vmatprep.subr.bf16.mxu0 0
  %3141 = vmatpush1.bf16.msra.mxu0 0
  %3142 = vmatprep.mubr.bf16.mxu0 0
  %3143 = vmatmul.mubr.bf16.gmra.mrb[0].mxu0 %v3108
  %v3144 = vpop.f32.mrb[0].mxu0
  %v3145 = vadd.f32 0.0, %v3144
  %v3146 = vpop.f32.mrb[0].mxu0
  %v3147 = vpop.f32.mrb[0].mxu0
  %v3148 = vadd.f32 0.0, %v3147
  %v3149 = vpop.f32.mrb[0].mxu0
  %3150 = vdwg.mxu0
  %v3151 = vpack.c.bf16 %v3148, %v3145
  %v3152 = vld [vmem:[%s2498 + $0xc0] sm:$0xf]
  %v3153 = vld [vmem:[%s2498 + $0xc4] sm:$0xf]
  %v3154 = vld [vmem:[%s2498 + $0xc8] sm:$0xf]
  %v3155 = vld [vmem:[%s2498 + $0xcc] sm:$0xf]
  %v3156 = vld [vmem:[%s2498 + $0xd0] sm:$0xf]
  %v3157 = vld [vmem:[%s2498 + $0xd4] sm:$0xf]
  %v3158 = vld [vmem:[%s2498 + $0xd8] sm:$0xf]
  %v3159 = vld [vmem:[%s2498 + $0xdc] sm:$0xf]
  %v3160 = vld [vmem:[%s2498 + $0xe0] sm:$0xf]
  %v3161 = vld [vmem:[%s2498 + $0xe4] sm:$0xf]
  %v3162 = vld [vmem:[%s2498 + $0xe8] sm:$0xf]
  %v3163 = vld [vmem:[%s2498 + $0xec] sm:$0xf]
  %v3164 = vld [vmem:[%s2498 + $0xf0] sm:$0xf]
  %v3165 = vld [vmem:[%s2498 + $0xf4] sm:$0xf]
  %v3166 = vld [vmem:[%s2498 + $0xf8] sm:$0xf]
  %v3167 = vld [vmem:[%s2498 + $0xfc] sm:$0xf]
  %v3184 = vunpack.c.l.b16 %v3152
  %v3185 = vunpack.c.l.b16 %v3153
  %v3186 = vunpack.c.l.b16 %v3154
  %v3187 = vunpack.c.l.b16 %v3155
  %v3188 = vunpack.c.l.b16 %v3156
  %v3189 = vunpack.c.l.b16 %v3157
  %v3190 = vunpack.c.l.b16 %v3158
  %v3191 = vunpack.c.l.b16 %v3159
  %v3192 = vunpack.c.l.b16 %v3160
  %v3193 = vunpack.c.l.b16 %v3161
  %v3194 = vunpack.c.l.b16 %v3162
  %v3195 = vunpack.c.l.b16 %v3163
  %v3196 = vunpack.c.l.b16 %v3164
  %v3197 = vunpack.c.l.b16 %v3165
  %v3198 = vunpack.c.l.b16 %v3166
  %v3199 = vunpack.c.l.b16 %v3167
  %v3200 = vpack.c.b16 %v3185, %v3184
  %v3201 = vpack.c.b16 %v3187, %v3186
  %v3202 = vpack.c.b16 %v3189, %v3188
  %v3203 = vpack.c.b16 %v3191, %v3190
  %v3204 = vpack.c.b16 %v3193, %v3192
  %v3205 = vpack.c.b16 %v3195, %v3194
  %v3206 = vpack.c.b16 %v3197, %v3196
  %v3207 = vpack.c.b16 %v3199, %v3198
  %3216 = vmatprep.subr.bf16.mxu0 0
  %3217 = vmatpush1.bf16.msra.mxu0 %v3200
  %3218 = vmatprep.subr.bf16.mxu0 0
  %3219 = vmatpush1.bf16.msra.mxu0 %v3201
  %3220 = vmatprep.subr.bf16.mxu0 0
  %3221 = vmatpush1.bf16.msra.mxu0 %v3202
  %3222 = vmatprep.subr.bf16.mxu0 0
  %3223 = vmatpush1.bf16.msra.mxu0 %v3203
  %3224 = vmatprep.subr.bf16.mxu0 0
  %3225 = vmatpush1.bf16.msra.mxu0 %v3204
  %3226 = vmatprep.subr.bf16.mxu0 0
  %3227 = vmatpush1.bf16.msra.mxu0 %v3205
  %3228 = vmatprep.subr.bf16.mxu0 0
  %3229 = vmatpush1.bf16.msra.mxu0 %v3206
  %3230 = vmatprep.subr.bf16.mxu0 0
  %3231 = vmatpush1.bf16.msra.mxu0 %v3207
  %3232 = vmatprep.subr.bf16.mxu0 0
  %3233 = vmatpush1.bf16.msra.mxu0 0
  %3234 = vmatprep.subr.bf16.mxu0 0
  %3235 = vmatpush1.bf16.msra.mxu0 0
  %3236 = vmatprep.subr.bf16.mxu0 0
  %3237 = vmatpush1.bf16.msra.mxu0 0
  %3238 = vmatprep.subr.bf16.mxu0 0
  %3239 = vmatpush1.bf16.msra.mxu0 0
  %3240 = vmatprep.subr.bf16.mxu0 0
  %3241 = vmatpush1.bf16.msra.mxu0 0
  %3242 = vmatprep.subr.bf16.mxu0 0
  %3243 = vmatpush1.bf16.msra.mxu0 0
  %3244 = vmatprep.subr.bf16.mxu0 0
  %3245 = vmatpush1.bf16.msra.mxu0 0
  %3246 = vmatprep.subr.bf16.mxu0 0
  %3247 = vmatpush1.bf16.msra.mxu0 0
  %3248 = vmatprep.mubr.bf16.mxu0 0
  %3249 = vmatmul.mubr.bf16.gmra.mrb[0].mxu0 %v3151
  %v3250 = vpop.f32.mrb[0].mxu0
  %v3251 = vadd.f32 0.0, %v3250
  %v3252 = vpop.f32.mrb[0].mxu0
  %v3253 = vpop.f32.mrb[0].mxu0
  %v3254 = vadd.f32 0.0, %v3253
  %v3255 = vpop.f32.mrb[0].mxu0
  %3256 = vdwg.mxu0
  %v3257 = vadd.f32 %v3038, %v3251
  %v3258 = vadd.f32 %v3039, %v3254
  %v3259 = vld [vmem:[%s1937 + $0x1] ss:$0 sm:$0xff]
  %v3260 = vadd.f32 %v3257, %v3259
  %v3261 = vadd.f32 %v3258, %v3259
  %v3262 = vadd.f32 %v3260, %v1909
  %v3263 = vadd.f32 %v3261, %v1910
  %v3264 = vld [vmem:[%s1937 + $0x3] ss:$0 sm:$0xff]
  %v3265 = vld [vmem:[%s1937 + $0x4] ss:$0 sm:$0xff]
  %v3266 = vsel %vm244, %v3262, 0.0
  %3267 = vadd.xlane.f32.xlu0 %v3266
  %v3268 = vpop.xlane.xlu0 %3267
  %v3269 = vsel %vm244, %v3263, 0.0
  %3270 = vadd.xlane.f32.xlu0 %v3269
  %v3271 = vpop.xlane.xlu0 %3270
  %v3272 = vmul.f32 %v3268, %v251
  %v3273 = vmul.f32 %v3271, %v251
  %v3274 = vsub.f32 %v3262, %v3272
  %v3275 = vsub.f32 %v3263, %v3273
  %v3276 = vmul.f32 %v3274, %v3274
  %v3277 = vmul.f32 %v3275, %v3275
  %v3278 = vsel %vm244, %v3276, 0.0
  %3279 = vadd.xlane.f32.xlu0 %v3278
  %v3280 = vpop.xlane.xlu0 %3279
  %v3281 = vsel %vm244, %v3277, 0.0
  %3282 = vadd.xlane.f32.xlu0 %v3281
  %v3283 = vpop.xlane.xlu0 %3282
  %v3284 = vmul.f32 %v3280, %v251
  %v3285 = vmul.f32 %v3283, %v251
  %v3286 = vadd.f32 %v3284, 1e-12
  %v3287 = vadd.f32 %v3285, 1e-12
  %v3288 = vrsqrt.pop %v3286
  %v3289 = vrsqrt.pop %v3287
  %v3290 = vmul.f32 %v3274, %v3288
  %v3291 = vmul.f32 %v3275, %v3289
  %v3292 = vmul.f32 %v3290, %v3264
  %v3293 = vmul.f32 %v3291, %v3264
  %v3294 = vadd.f32 %v3292, %v3265
  %v3295 = vadd.f32 %v3293, %v3265
  %v3296 = vpack.c.bf16 %v3295, %v3294
  %v3297 = vld [vmem:[%s1912 + $0x30] sm:$0xf]
  %v3298 = vld [vmem:[%s1912 + $0x64] sm:$0xf]
  %v3299 = vld [vmem:[%s1912 + $0x98] sm:$0xf]
  %v3300 = vld [vmem:[%s1912 + $0xcc] sm:$0xf]
  %v3301 = vld [vmem:[%s1937 + $0x60] ss:$0 sm:$0xff]
  %v3306 = vunpack.c.l.b16 %v3297
  %v3307 = vunpack.c.l.b16 %v3298
  %v3308 = vunpack.c.l.b16 %v3299
  %v3309 = vunpack.c.l.b16 %v3300
  %v3310 = vpack.c.b16 %v3307, %v3306
  %v3311 = vpack.c.b16 %v3309, %v3308
  %v3315 = vsel %vm244, %v3296, 0
  %3317 = vmatprep.subr.bf16.mxu0 0
  %3318 = vmatpush1.bf16.msra.mxu0 %v3310
  %3319 = vmatprep.subr.bf16.mxu0 0
  %3320 = vmatpush1.bf16.msra.mxu0 %v3311
  %3321 = vmatprep.subr.bf16.mxu0 0
  %3322 = vmatpush1.bf16.msra.mxu0 0
  %3323 = vmatprep.subr.bf16.mxu0 0
  %3324 = vmatpush1.bf16.msra.mxu0 0
  %3325 = vmatprep.subr.bf16.mxu0 0
  %3326 = vmatpush1.bf16.msra.mxu0 0
  %3327 = vmatprep.subr.bf16.mxu0 0
  %3328 = vmatpush1.bf16.msra.mxu0 0
  %3329 = vmatprep.subr.bf16.mxu0 0
  %3330 = vmatpush1.bf16.msra.mxu0 0
  %3331 = vmatprep.subr.bf16.mxu0 0
  %3332 = vmatpush1.bf16.msra.mxu0 0
  %3333 = vmatprep.subr.bf16.mxu0 0
  %3334 = vmatpush1.bf16.msra.mxu0 0
  %3335 = vmatprep.subr.bf16.mxu0 0
  %3336 = vmatpush1.bf16.msra.mxu0 0
  %3337 = vmatprep.subr.bf16.mxu0 0
  %3338 = vmatpush1.bf16.msra.mxu0 0
  %3339 = vmatprep.subr.bf16.mxu0 0
  %3340 = vmatpush1.bf16.msra.mxu0 0
  %3341 = vmatprep.subr.bf16.mxu0 0
  %3342 = vmatpush1.bf16.msra.mxu0 0
  %3343 = vmatprep.subr.bf16.mxu0 0
  %3344 = vmatpush1.bf16.msra.mxu0 0
  %3345 = vmatprep.subr.bf16.mxu0 0
  %3346 = vmatpush1.bf16.msra.mxu0 0
  %3347 = vmatprep.subr.bf16.mxu0 0
  %3348 = vmatpush1.bf16.msra.mxu0 0
  %3349 = vmatprep.mubr.bf16.mxu0 0
  %3350 = vmatmul.mubr.bf16.gmra.mrb[0].mxu0 %v3315
  %v3351 = vpop.f32.mrb[0].mxu0
  %v3352 = vadd.f32 %v3301, %v3351
  %v3353 = vpop.f32.mrb[0].mxu0
  %v3354 = vpop.f32.mrb[0].mxu0
  %v3355 = vadd.f32 %v3301, %v3354
  %v3356 = vpop.f32.mrb[0].mxu0
  %3357 = vdwg.mxu0
  %v3358 = vmul.f32 %v3352, 0.5
  %v3359 = vmul.f32 %v3355, 0.5
  %v3360 = vmul.f32 %v3352, 0.044715
  %v3361 = vmul.f32 %v3355, 0.044715
  %v3362 = vmul.f32 %v3360, %v3352
  %v3363 = vmul.f32 %v3361, %v3355
  %v3364 = vmul.f32 %v3362, %v3352
  %v3365 = vmul.f32 %v3363, %v3355
  %v3366 = vadd.f32 %v3352, %v3364
  %v3367 = vadd.f32 %v3355, %v3365
  %v3368 = vmul.f32 %v3366, 0.7978846
  %v3369 = vmul.f32 %v3367, 0.7978846
  %v3370 = vtanh.pop %v3368
  %v3371 = vtanh.pop %v3369
  %v3372 = vadd.f32 %v3370, 1.0
  %v3373 = vadd.f32 %v3371, 1.0
  %v3374 = vmul.f32 %v3358, %v3372
  %v3375 = vmul.f32 %v3359, %v3373
  %v3376 = vpack.c.bf16 %v3375, %v3374
  %v3377 = vld [vmem:[%s2498 + $0x100] sm:$0xf]
  %v3378 = vld [vmem:[%s2498 + $0x104] sm:$0xf]
  %v3379 = vld [vmem:[%s2498 + $0x108] sm:$0xf]
  %v3380 = vld [vmem:[%s2498 + $0x10c] sm:$0xf]
  %v3381 = vld [vmem:[%s2498 + $0x110] sm:$0xf]
  %v3382 = vld [vmem:[%s2498 + $0x114] sm:$0xf]
  %v3383 = vld [vmem:[%s2498 + $0x118] sm:$0xf]
  %v3384 = vld [vmem:[%s2498 + $0x11c] sm:$0xf]
  %v3385 = vld [vmem:[%s2498 + $0x120] sm:$0xf]
  %v3386 = vld [vmem:[%s2498 + $0x124] sm:$0xf]
  %v3387 = vld [vmem:[%s2498 + $0x128] sm:$0xf]
  %v3388 = vld [vmem:[%s2498 + $0x12c] sm:$0xf]
  %v3389 = vld [vmem:[%s2498 + $0x130] sm:$0xf]
  %v3390 = vld [vmem:[%s2498 + $0x134] sm:$0xf]
  %v3391 = vld [vmem:[%s2498 + $0x138] sm:$0xf]
  %v3392 = vld [vmem:[%s2498 + $0x13c] sm:$0xf]
  %v3393 = vld [vmem:[%s1937 + $0x2] ss:$0 sm:$0xff]
  %v3410 = vunpack.c.l.b16 %v3377
  %v3411 = vunpack.c.l.b16 %v3378
  %v3412 = vunpack.c.l.b16 %v3379
  %v3413 = vunpack.c.l.b16 %v3380
  %v3414 = vunpack.c.l.b16 %v3381
  %v3415 = vunpack.c.l.b16 %v3382
  %v3416 = vunpack.c.l.b16 %v3383
  %v3417 = vunpack.c.l.b16 %v3384
  %v3418 = vunpack.c.l.b16 %v3385
  %v3419 = vunpack.c.l.b16 %v3386
  %v3420 = vunpack.c.l.b16 %v3387
  %v3421 = vunpack.c.l.b16 %v3388
  %v3422 = vunpack.c.l.b16 %v3389
  %v3423 = vunpack.c.l.b16 %v3390
  %v3424 = vunpack.c.l.b16 %v3391
  %v3425 = vunpack.c.l.b16 %v3392
  %v3426 = vpack.c.b16 %v3411, %v3410
  %v3427 = vpack.c.b16 %v3413, %v3412
  %v3428 = vpack.c.b16 %v3415, %v3414
  %v3429 = vpack.c.b16 %v3417, %v3416
  %v3430 = vpack.c.b16 %v3419, %v3418
  %v3431 = vpack.c.b16 %v3421, %v3420
  %v3432 = vpack.c.b16 %v3423, %v3422
  %v3433 = vpack.c.b16 %v3425, %v3424
  %3442 = vmatprep.subr.bf16.mxu0 0
  %3443 = vmatpush1.bf16.msra.mxu0 %v3426
  %3444 = vmatprep.subr.bf16.mxu0 0
  %3445 = vmatpush1.bf16.msra.mxu0 %v3427
  %3446 = vmatprep.subr.bf16.mxu0 0
  %3447 = vmatpush1.bf16.msra.mxu0 %v3428
  %3448 = vmatprep.subr.bf16.mxu0 0
  %3449 = vmatpush1.bf16.msra.mxu0 %v3429
  %3450 = vmatprep.subr.bf16.mxu0 0
  %3451 = vmatpush1.bf16.msra.mxu0 %v3430
  %3452 = vmatprep.subr.bf16.mxu0 0
  %3453 = vmatpush1.bf16.msra.mxu0 %v3431
  %3454 = vmatprep.subr.bf16.mxu0 0
  %3455 = vmatpush1.bf16.msra.mxu0 %v3432
  %3456 = vmatprep.subr.bf16.mxu0 0
  %3457 = vmatpush1.bf16.msra.mxu0 %v3433
  %3458 = vmatprep.subr.bf16.mxu0 0
  %3459 = vmatpush1.bf16.msra.mxu0 0
  %3460 = vmatprep.subr.bf16.mxu0 0
  %3461 = vmatpush1.bf16.msra.mxu0 0
  %3462 = vmatprep.subr.bf16.mxu0 0
  %3463 = vmatpush1.bf16.msra.mxu0 0
  %3464 = vmatprep.subr.bf16.mxu0 0
  %3465 = vmatpush1.bf16.msra.mxu0 0
  %3466 = vmatprep.subr.bf16.mxu0 0
  %3467 = vmatpush1.bf16.msra.mxu0 0
  %3468 = vmatprep.subr.bf16.mxu0 0
  %3469 = vmatpush1.bf16.msra.mxu0 0
  %3470 = vmatprep.subr.bf16.mxu0 0
  %3471 = vmatpush1.bf16.msra.mxu0 0
  %3472 = vmatprep.subr.bf16.mxu0 0
  %3473 = vmatpush1.bf16.msra.mxu0 0
  %3474 = vmatprep.mubr.bf16.mxu0 0
  %3475 = vmatmul.mubr.bf16.gmra.mrb[0].mxu0 %v3376
  %v3476 = vpop.f32.mrb[0].mxu0
  %v3477 = vadd.f32 %v3393, %v3476
  %v3478 = vpop.f32.mrb[0].mxu0
  %v3479 = vpop.f32.mrb[0].mxu0
  %v3480 = vadd.f32 %v3393, %v3479
  %v3481 = vpop.f32.mrb[0].mxu0
  %3482 = vdwg.mxu0
  %v3483 = vadd.f32 %v3477, %v3294
  %v3484 = vadd.f32 %v3480, %v3295
  %v3485 = vld [vmem:[%s1937 + $0x5] ss:$0 sm:$0xff]
  %v3486 = vld [vmem:[%s1937 + $0x6] ss:$0 sm:$0xff]
  %v3487 = vsel %vm244, %v3483, 0.0
  %3488 = vadd.xlane.f32.xlu0 %v3487
  %v3489 = vpop.xlane.xlu0 %3488
  %v3490 = vsel %vm244, %v3484, 0.0
  %3491 = vadd.xlane.f32.xlu0 %v3490
  %v3492 = vpop.xlane.xlu0 %3491
  %v3493 = vmul.f32 %v3489, %v251
  %v3494 = vmul.f32 %v3492, %v251
  %v3495 = vsub.f32 %v3483, %v3493
  %v3496 = vsub.f32 %v3484, %v3494
  %v3497 = vmul.f32 %v3495, %v3495
  %v3498 = vmul.f32 %v3496, %v3496
  %v3499 = vsel %vm244, %v3497, 0.0
  %3500 = vadd.xlane.f32.xlu0 %v3499
  %v3501 = vpop.xlane.xlu0 %3500
  %v3502 = vsel %vm244, %v3498, 0.0
  %3503 = vadd.xlane.f32.xlu0 %v3502
  %v3504 = vpop.xlane.xlu0 %3503
  %v3505 = vmul.f32 %v3501, %v251
  %v3506 = vmul.f32 %v3504, %v251
  %v3507 = vadd.f32 %v3505, 1e-12
  %v3508 = vadd.f32 %v3506, 1e-12
  %v3509 = vrsqrt.pop %v3507
  %v3510 = vrsqrt.pop %v3508
  %v3511 = vmul.f32 %v3495, %v3509
  %v3512 = vmul.f32 %v3496, %v3510
  %v3513 = vmul.f32 %v3511, %v3485
  %v3514 = vmul.f32 %v3512, %v3485
  %v3515 = vadd.f32 %v3513, %v3486
  %v3516 = vadd.f32 %v3514, %v3486
  %v3517 = vpack.c.bf16 %v3516, %v3515
  %v3518 = vld [vmem:[%s6] sm:$0xf]
  %v3519 = vld [vmem:[%s6 + $0x4] sm:$0xf]
  %v3520 = vld [vmem:[%s6 + $0x8] sm:$0xf]
  %v3521 = vld [vmem:[%s6 + $0xc] sm:$0xf]
  %v3522 = vld [vmem:[%s7] sm:$0x1]
  %v3523 = vlaneseq
  %v3524 = vshrl.u32 %v3523, 7
  %v3525 = vsub.s32 0, %v3524
  %v3526 = vrot.slane %v3522, %v3525
  %v3531 = vunpack.c.l.b16 %v3518
  %v3532 = vunpack.c.l.b16 %v3519
  %v3533 = vunpack.c.l.b16 %v3520
  %v3534 = vunpack.c.l.b16 %v3521
  %v3535 = vpack.c.b16 %v3532, %v3531
  %v3536 = vpack.c.b16 %v3534, %v3533
  %v3540 = vsel %vm244, %v3517, 0
  %3542 = vmatprep.subr.bf16.mxu0 0
  %3543 = vmatpush1.bf16.msra.mxu0 %v3535
  %3544 = vmatprep.subr.bf16.mxu0 0
  %3545 = vmatpush1.bf16.msra.mxu0 %v3536
  %3546 = vmatprep.subr.bf16.mxu0 0
  %3547 = vmatpush1.bf16.msra.mxu0 0
  %3548 = vmatprep.subr.bf16.mxu0 0
  %3549 = vmatpush1.bf16.msra.mxu0 0
  %3550 = vmatprep.subr.bf16.mxu0 0
  %3551 = vmatpush1.bf16.msra.mxu0 0
  %3552 = vmatprep.subr.bf16.mxu0 0
  %3553 = vmatpush1.bf16.msra.mxu0 0
  %3554 = vmatprep.subr.bf16.mxu0 0
  %3555 = vmatpush1.bf16.msra.mxu0 0
  %3556 = vmatprep.subr.bf16.mxu0 0
  %3557 = vmatpush1.bf16.msra.mxu0 0
  %3558 = vmatprep.subr.bf16.mxu0 0
  %3559 = vmatpush1.bf16.msra.mxu0 0
  %3560 = vmatprep.subr.bf16.mxu0 0
  %3561 = vmatpush1.bf16.msra.mxu0 0
  %3562 = vmatprep.subr.bf16.mxu0 0
  %3563 = vmatpush1.bf16.msra.mxu0 0
  %3564 = vmatprep.subr.bf16.mxu0 0
  %3565 = vmatpush1.bf16.msra.mxu0 0
  %3566 = vmatprep.subr.bf16.mxu0 0
  %3567 = vmatpush1.bf16.msra.mxu0 0
  %3568 = vmatprep.subr.bf16.mxu0 0
  %3569 = vmatpush1.bf16.msra.mxu0 0
  %3570 = vmatprep.subr.bf16.mxu0 0
  %3571 = vmatpush1.bf16.msra.mxu0 0
  %3572 = vmatprep.subr.bf16.mxu0 0
  %3573 = vmatpush1.bf16.msra.mxu0 0
  %3574 = vmatprep.mubr.bf16.mxu0 0
  %3575 = vmatmul.mubr.bf16.gmra.mrb[0].mxu0 %v3540
  %v3576 = vpop.f32.mrb[0].mxu0
  %v3577 = vadd.f32 %v3526, %v3576
  %v3578 = vpop.f32.mrb[0].mxu0
  %v3579 = vpop.f32.mrb[0].mxu0
  %v3580 = vadd.f32 %v3526, %v3579
  %v3581 = vpop.f32.mrb[0].mxu0
  %3582 = vdwg.mxu0
  %v3583 = vmax.f32 %v3577, 0.0
  %v3584 = vmax.f32 %v3580, 0.0
  %v3585 = vpack.c.bf16 %v3584, %v3583
  %v3586 = vld [vmem:[%s6 + $0x10] sm:$0xf]
  %v3587 = vld [vmem:[%s6 + $0x14] sm:$0xf]
  %v3588 = vld [vmem:[%s6 + $0x18] sm:$0xf]
  %v3589 = vld [vmem:[%s6 + $0x1c] sm:$0xf]
  %v3590 = vld [vmem:[%s6 + $0x20] sm:$0xf]
  %v3591 = vld [vmem:[%s6 + $0x24] sm:$0xf]
  %v3592 = vld [vmem:[%s6 + $0x28] sm:$0xf]
  %v3593 = vld [vmem:[%s6 + $0x2c] sm:$0xf]
  %v3594 = vld [vmem:[%s6 + $0x30] sm:$0xf]
  %v3595 = vld [vmem:[%s6 + $0x34] sm:$0xf]
  %v3596 = vld [vmem:[%s6 + $0x38] sm:$0xf]
  %v3597 = vld [vmem:[%s6 + $0x3c] sm:$0xf]
  %v3598 = vld [vmem:[%s6 + $0x40] sm:$0xf]
  %v3599 = vld [vmem:[%s6 + $0x44] sm:$0xf]
  %v3600 = vld [vmem:[%s6 + $0x48] sm:$0xf]
  %v3601 = vld [vmem:[%s6 + $0x4c] sm:$0xf]
  %v3602 = vld [vmem:[%s7 + $0x1] sm:$0x1]
  %v3603 = vlaneseq
  %v3604 = vshrl.u32 %v3603, 7
  %v3605 = vsub.s32 0, %v3604
  %v3606 = vrot.slane %v3602, %v3605
  %v3623 = vunpack.c.l.b16 %v3586
  %v3624 = vunpack.c.l.b16 %v3587
  %v3625 = vunpack.c.l.b16 %v3588
  %v3626 = vunpack.c.l.b16 %v3589
  %v3627 = vunpack.c.l.b16 %v3590
  %v3628 = vunpack.c.l.b16 %v3591
  %v3629 = vunpack.c.l.b16 %v3592
  %v3630 = vunpack.c.l.b16 %v3593
  %v3631 = vunpack.c.l.b16 %v3594
  %v3632 = vunpack.c.l.b16 %v3595
  %v3633 = vunpack.c.l.b16 %v3596
  %v3634 = vunpack.c.l.b16 %v3597
  %v3635 = vunpack.c.l.b16 %v3598
  %v3636 = vunpack.c.l.b16 %v3599
  %v3637 = vunpack.c.l.b16 %v3600
  %v3638 = vunpack.c.l.b16 %v3601
  %v3639 = vpack.c.b16 %v3624, %v3623
  %v3640 = vpack.c.b16 %v3626, %v3625
  %v3641 = vpack.c.b16 %v3628, %v3627
  %v3642 = vpack.c.b16 %v3630, %v3629
  %v3643 = vpack.c.b16 %v3632, %v3631
  %v3644 = vpack.c.b16 %v3634, %v3633
  %v3645 = vpack.c.b16 %v3636, %v3635
  %v3646 = vpack.c.b16 %v3638, %v3637
  %3655 = vmatprep.subr.bf16.mxu0 0
  %3656 = vmatpush1.bf16.msra.mxu0 %v3639
  %3657 = vmatprep.subr.bf16.mxu0 0
  %3658 = vmatpush1.bf16.msra.mxu0 %v3640
  %3659 = vmatprep.subr.bf16.mxu0 0
  %3660 = vmatpush1.bf16.msra.mxu0 %v3641
  %3661 = vmatprep.subr.bf16.mxu0 0
  %3662 = vmatpush1.bf16.msra.mxu0 %v3642
  %3663 = vmatprep.subr.bf16.mxu0 0
  %3664 = vmatpush1.bf16.msra.mxu0 %v3643
  %3665 = vmatprep.subr.bf16.mxu0 0
  %3666 = vmatpush1.bf16.msra.mxu0 %v3644
  %3667 = vmatprep.subr.bf16.mxu0 0
  %3668 = vmatpush1.bf16.msra.mxu0 %v3645
  %3669 = vmatprep.subr.bf16.mxu0 0
  %3670 = vmatpush1.bf16.msra.mxu0 %v3646
  %3671 = vmatprep.subr.bf16.mxu0 0
  %3672 = vmatpush1.bf16.msra.mxu0 0
  %3673 = vmatprep.subr.bf16.mxu0 0
  %3674 = vmatpush1.bf16.msra.mxu0 0
  %3675 = vmatprep.subr.bf16.mxu0 0
  %3676 = vmatpush1.bf16.msra.mxu0 0
  %3677 = vmatprep.subr.bf16.mxu0 0
  %3678 = vmatpush1.bf16.msra.mxu0 0
  %3679 = vmatprep.subr.bf16.mxu0 0
  %3680 = vmatpush1.bf16.msra.mxu0 0
  %3681 = vmatprep.subr.bf16.mxu0 0
  %3682 = vmatpush1.bf16.msra.mxu0 0
  %3683 = vmatprep.subr.bf16.mxu0 0
  %3684 = vmatpush1.bf16.msra.mxu0 0
  %3685 = vmatprep.subr.bf16.mxu0 0
  %3686 = vmatpush1.bf16.msra.mxu0 0
  %3687 = vmatprep.mubr.bf16.mxu0 0
  %3688 = vmatmul.mubr.bf16.gmra.mrb[0].mxu0 %v3585
  %v3689 = vpop.f32.mrb[0].mxu0
  %v3690 = vadd.f32 %v3606, %v3689
  %v3691 = vpop.f32.mrb[0].mxu0
  %v3692 = vpop.f32.mrb[0].mxu0
  %v3693 = vadd.f32 %v3606, %v3692
  %v3694 = vpop.f32.mrb[0].mxu0
  %3695 = vdwg.mxu0
  %3696 = vst [vmem:[%s8] sm:$0xff] %v3690
  %3697 = vst [vmem:[%s8 + $0x8] sm:$0xff] %v3693
  // Predicated region
  $region34: #{bert_attention_sequence_embedding.1} parent=0 // pred_check
    _
  $region35: #{bert_attention_sequence_embedding.1} parent=0 // pred_check_branch
    %3699 = sbr.rel (0) target = $region37
  $region36: #{bert_attention_sequence_embedding.1} parent=0 // pred_region
    _
  $region37: #{bert_attention_sequence_embedding.1} parent=0 // pred_fallthru
    _
  // Predicated region
  $region38: #{bert_attention_sequence_embedding.1} parent=0 // pred_check
    _
  $region39: #{bert_attention_sequence_embedding.1} parent=0 // pred_check_branch
    %3701 = sbr.rel (0) target = $region41
  $region40: #{bert_attention_sequence_embedding.1} parent=0 // pred_region
    _
  $region41: #{bert_attention_sequence_embedding.1} parent=0 // pred_fallthru
    _

</llo_original>
